<compile_context>
chip_gen: v5e
topology: v5e:2x2
jax: 0.10.0
libtpu: 0.0.40
codegen_flags: <defaults>
</compile_context>

<pallas_src>
import jax
import jax.numpy as jnp
from jax.experimental import pallas as pl
from jax.experimental.pallas import tpu as pltpu

HIGHEST = jax.lax.Precision.HIGHEST  # reference only


# ------------------------------ fused kernel -------------------------------

def _fused_forward_kernel(x_ref, w1_ref, b1_ref, w2_ref, b2_ref, w3_ref, b3_ref,
                          s1_ref, t2_ref, fc1w_ref, fc1b_ref, fc2w_ref, fc2b_ref,
                          out_ref, act1_ref, p2_ref, fcin_ref):
    f32, bf16 = jnp.float32, jnp.bfloat16

    # ---- quanv (conv1): 1 -> 10 channels, 3x3 valid, planar frame width 28 ----
    # planar layout: act[c, h*W + w]; a (i, j) tap is a lane shift of i*W + j.
    acc1 = jnp.zeros((10, 784), f32)
    for i in range(3):
        for j in range(3):
            sh = i * 28 + j
            # (10,1) * (1,784) broadcast FMA on the VPU (exact, f32)
            acc1 = acc1 + w1_ref[i * 3 + j] * x_ref[:, sh:sh + 784]
    act1_ref[:, 0:784] = jnp.maximum(acc1 + b1_ref[...], 0.0)
    act1_ref[:, 784:896] = jnp.zeros((10, 112), f32)   # keep shifted reads finite

    # ---- conv1dot5: 10 -> 16, 3x3 valid (frame width 28, valid 26x26 in) ------
    acc2 = jnp.zeros((16, 812), f32)
    for i in range(3):
        for j in range(3):
            sh = i * 28 + j
            a = act1_ref[:, sh:sh + 812].astype(bf16)
            acc2 = acc2 + jnp.dot(w2_ref[i * 3 + j], a, preferred_element_type=f32)
    act2 = jnp.maximum(acc2 + b2_ref[...], 0.0)         # (16, 812); valid 24x24 grid

    # ---- maxpool 2x2 (+ zero ring for conv2's padding=1), 14x14 frame ---------
    vmax = jnp.maximum(act2[:, 0:784], act2[:, 28:812])     # rows 2hp / 2hp+1
    hmax = jnp.maximum(vmax[:, 0:783], vmax[:, 1:784])       # cols 2wp / 2wp+1
    # 0/1 placement matmul: pick p = 2hp*28 + 2wp, drop into the interior of a
    # zero 14x14 frame (padding ring + tail columns stay exactly 0).
    act2p = jnp.dot(hmax.astype(bf16), s1_ref[...], preferred_element_type=f32)  # (16,256)

    # ---- conv2: 16 -> 32, 3x3, padding=1 (ring already zero), frame width 14 --
    act2p_bf = act2p.astype(bf16)
    acc3 = jnp.zeros((32, 166), f32)
    for i in range(3):
        for j in range(3):
            sh = i * 14 + j
            acc3 = acc3 + jnp.dot(w3_ref[i * 3 + j], act2p_bf[:, sh:sh + 166],
                                  preferred_element_type=f32)
    act3 = jnp.maximum(acc3 + b3_ref[...], 0.0)         # (32, 166); valid 12x12 grid

    # ---- maxpool 2x2 -> (32, 6*6) ---------------------------------------------
    vmax3 = jnp.maximum(act3[:, 0:152], act3[:, 14:166])
    hmax3 = jnp.maximum(vmax3[:, 0:151], vmax3[:, 1:152])
    p2_ref[...] = jnp.dot(hmax3.astype(bf16), t2_ref[...], preferred_element_type=f32)

    # ---- flatten in torch NCHW order: index = c*36 + h*6 + w ------------------
    for c in range(32):
        fcin_ref[0, c * 36:(c + 1) * 36] = p2_ref[c, :]

    # ---- fc1 + relu, fc2 + log_softmax ----------------------------------------
    h1 = jnp.dot(fcin_ref[...].astype(bf16), fc1w_ref[...], preferred_element_type=f32)
    h1 = jnp.maximum(h1 + fc1b_ref[...], 0.0)
    logits = (jnp.dot(h1.astype(bf16), fc2w_ref[...], preferred_element_type=f32)
              + fc2b_ref[...])
    mx = jnp.max(logits, axis=-1, keepdims=True)
    shifted = logits - mx
    lse = jnp.log(jnp.sum(jnp.exp(shifted), axis=-1, keepdims=True))
    out_ref[...] = shifted - lse


# ------------------------------ wrapper ------------------------------------

def _full_block(a):
    """Whole-array block with a constant index map (fetched once, stays resident)."""
    return pl.BlockSpec(a.shape, lambda i, nd=len(a.shape): (0,) * nd)


def quanv_nn_forward(kparams, x):
    """x: (N, 28, 1, 28) float32 -- the module's pre-permute input layout."""
    n = x.shape[0]
    # permute(0,2,1,3) -> NCHW (N,1,28,28) -> planar flatten, zero-padded to 896
    # so every in-kernel tap-shifted read stays in bounds and finite.
    x_flat = jnp.pad(jnp.transpose(x, (0, 2, 1, 3)).reshape(n, 1, 784),
                     ((0, 0), (0, 0), (0, 112)))

    weights = (kparams['w1'], kparams['b1'], kparams['w2'], kparams['b2'],
               kparams['w3'], kparams['b3'], kparams['s1'], kparams['t2'],
               kparams['fc1_w'], kparams['fc1_b'], kparams['fc2_w'], kparams['fc2_b'])

    grid_spec = pltpu.PrefetchScalarGridSpec(
        num_scalar_prefetch=0,
        grid=(n,),
        in_specs=[pl.BlockSpec((None, 1, 896), lambda i: (i, 0, 0))]
                 + [_full_block(w) for w in weights],
        out_specs=pl.BlockSpec((None, 1, 10), lambda i: (i, 0, 0)),
        scratch_shapes=[
            pltpu.VMEM((10, 896), jnp.float32),    # relu(quanv), planar + zero tail
            pltpu.VMEM((32, 36), jnp.float32),     # pooled conv2 output
            pltpu.VMEM((1, 1152), jnp.float32),    # flattened fc1 input
        ])

    out = pl.pallas_call(
        _fused_forward_kernel,
        out_shape=jax.ShapeDtypeStruct((n, 1, 10), jnp.float32),
        grid_spec=grid_spec,
        compiler_params=pltpu.CompilerParams(dimension_semantics=("parallel",)),
        cost_estimate=pl.CostEstimate(flops=11_000_000 * n,
                                      transcendentals=11 * n,
                                      bytes_accessed=700_000 + 3_600 * n),
    )(x_flat, *weights)
    return out.reshape(n, 10)


# ------------------------------ params -------------------------------------

def init_params(key):
    """PyTorch-style uniform(-1/sqrt(fan_in), 1/sqrt(fan_in)) init, torch layouts."""
    def uni(k, shape, fan_in):
        bound = 1.0 / float(fan_in) ** 0.5
        return jax.random.uniform(k, shape, jnp.float32, -bound, bound)

    ks = jax.random.split(key, 10)
    return {
        'quanv_w': uni(ks[0], (10, 1, 3, 3), 1 * 3 * 3),
        'quanv_b': uni(ks[1], (10,), 1 * 3 * 3),
        'c15_w':   uni(ks[2], (16, 10, 3, 3), 10 * 3 * 3),
        'c15_b':   uni(ks[3], (16,), 10 * 3 * 3),
        'c2_w':    uni(ks[4], (32, 16, 3, 3), 16 * 3 * 3),
        'c2_b':    uni(ks[5], (32,), 16 * 3 * 3),
        'fc1_w':   uni(ks[6], (64, 32 * 6 * 6), 32 * 6 * 6),
        'fc1_b':   uni(ks[7], (64,), 32 * 6 * 6),
        'fc2_w':   uni(ks[8], (10, 64), 64),
        'fc2_b':   uni(ks[9], (10,), 64),
    }


def prepare_params(p):
    """One-time layout prep: per-tap conv weights, bf16 casts, pool selectors."""
    bf16 = jnp.bfloat16

    def conv_taps(w, dtype):
        o, i, kh, kw = w.shape
        # torch (O, I, kh, kw) -> (kh*kw, O, I); taps[i*kw + j] = w[:, :, i, j]
        return jnp.transpose(w, (2, 3, 0, 1)).reshape(kh * kw, o, i).astype(dtype)

    # pool1 placement selector: hmax (16,783) @ s1 (783,256) -> zero-padded 14x14
    # frame; column q = r*14 + s, interior (r,s) in [1,12] takes p = 2(r-1)*28+2(s-1).
    pidx = jnp.arange(783)[:, None]
    q = jnp.arange(256)[None, :]
    r, s = q // 14, q % 14
    interior = (q < 196) & (r >= 1) & (r <= 12) & (s >= 1) & (s <= 12)
    s1 = ((pidx == (r - 1) * 56 + (s - 1) * 2) & interior).astype(bf16)

    # pool2 placement selector: hmax3 (32,151) @ t2 (151,36) -> (hp*6 + wp) grid.
    pidx = jnp.arange(151)[:, None]
    q = jnp.arange(36)[None, :]
    t2 = (pidx == (q // 6) * 28 + (q % 6) * 2).astype(bf16)

    return {
        'w1': conv_taps(p['quanv_w'], jnp.float32),   # conv1 stays f32 (exact VPU FMA)
        'b1': p['quanv_b'].reshape(-1, 1),
        'w2': conv_taps(p['c15_w'], bf16),
        'b2': p['c15_b'].reshape(-1, 1),
        'w3': conv_taps(p['c2_w'], bf16),
        'b3': p['c2_b'].reshape(-1, 1),
        's1': s1,
        't2': t2,
        # torch fc1 flattens NCHW -> c*36 + h*6 + w, exactly the kernel's planar
        # order, so a plain transpose is enough.
        'fc1_w': p['fc1_w'].T.astype(bf16),
        'fc1_b': p['fc1_b'].reshape(1, -1),
        'fc2_w': p['fc2_w'].T.astype(bf16),
        'fc2_b': p['fc2_b'].reshape(1, -1),
    }


# ------------------------------ reference ----------------------------------

def reference_forward(params, x):
    """Pure-JAX mirror of the PyTorch forward (torch-layout params, f32 HIGHEST)."""
    v = jnp.transpose(x, (0, 2, 1, 3))        # permute(0,2,1,3) -> (N,1,28,28)

    def conv(z, w, b, pad):
        out = jax.lax.conv_general_dilated(
            z, w, window_strides=(1, 1), padding=[(pad, pad), (pad, pad)],
            dimension_numbers=('NCHW', 'OIHW', 'NCHW'), precision=HIGHEST)
        return out + b[None, :, None, None]

    def pool(z):
        return jax.lax.reduce_window(z, -jnp.inf, jax.lax.max,
                                     (1, 1, 2, 2), (1, 1, 2, 2), 'VALID')

    v = jax.nn.relu(conv(v, params['quanv_w'], params['quanv_b'], 0))
    v = pool(jax.nn.relu(conv(v, params['c15_w'], params['c15_b'], 0)))
    v = pool(jax.nn.relu(conv(v, params['c2_w'], params['c2_b'], 1)))
    v = v.reshape(-1, 32 * 6 * 6)
    v = jax.nn.relu(jnp.dot(v, params['fc1_w'].T, precision=HIGHEST) + params['fc1_b'])
    v = jnp.dot(v, params['fc2_w'].T, precision=HIGHEST) + params['fc2_b']
    return jax.nn.log_softmax(v, axis=1)


# ------------------------------ main ----------------------------------------

if __name__ == "__main__":
    key = jax.random.PRNGKey(0)
    pkey, xkey = jax.random.split(key)
    params = init_params(pkey)
    kparams = prepare_params(params)          # one-time weight layout prep

    # forward implies 28x28 single-channel input (32*6*6 flatten), batch=2
    x = jax.random.uniform(xkey, (2, 28, 1, 28), jnp.float32)

    fwd = jax.jit(quanv_nn_forward)
    out = jax.block_until_ready(fwd(kparams, x))

    assert out.shape == (2, 10) and out.dtype == jnp.float32
    # log_softmax rows should sum to ~1 in probability space
    assert bool(jnp.all(jnp.abs(jnp.sum(jnp.exp(out), axis=1) - 1.0) < 1e-3))

    ref = jax.jit(reference_forward)(params, x)
    max_diff = float(jnp.max(jnp.abs(out - ref)))
    # Kernel matmuls run single-pass bf16 on the MXU (per perf review); the
    # reference is f32 HIGHEST, so allow a bf16-sized tolerance on log-probs.
    assert max_diff < 3e-2, f"max abs diff {max_diff}"

    print("KERNEL_OK")
</pallas_src>

<mosaic_0001>
module attributes {stable_mosaic.version = 11 : i64} {
  func.func @_fused_forward_kernel(%arg0: i32, %arg1: memref<1x1x896xf32, #tpu.memory_space<vmem>>, %arg2: memref<9x10x1xf32, #tpu.memory_space<vmem>>, %arg3: memref<10x1xf32, #tpu.memory_space<vmem>>, %arg4: memref<9x16x10xbf16, #tpu.memory_space<vmem>>, %arg5: memref<16x1xf32, #tpu.memory_space<vmem>>, %arg6: memref<9x32x16xbf16, #tpu.memory_space<vmem>>, %arg7: memref<32x1xf32, #tpu.memory_space<vmem>>, %arg8: memref<783x256xbf16, #tpu.memory_space<vmem>>, %arg9: memref<151x36xbf16, #tpu.memory_space<vmem>>, %arg10: memref<1152x64xbf16, #tpu.memory_space<vmem>>, %arg11: memref<1x64xf32, #tpu.memory_space<vmem>>, %arg12: memref<64x10xbf16, #tpu.memory_space<vmem>>, %arg13: memref<1x10xf32, #tpu.memory_space<vmem>>, %arg14: memref<1x1x10xf32, #tpu.memory_space<vmem>>, %arg15: memref<10x896xf32, #tpu.memory_space<vmem>>, %arg16: memref<32x36xf32, #tpu.memory_space<vmem>>, %arg17: memref<1x1152xf32, #tpu.memory_space<vmem>>) attributes {dimension_semantics = [#tpu.dimension_semantics<parallel>], iteration_bounds = array<i64: 2>, scalar_prefetch = 0 : i64, scratch_operands = 3 : i64, tpu.core_type = #tpu.core_type<tc>, window_params = [{transform_indices = @transform_0, window_bounds = array<i64: 1, 1, 896>}, {pipeline_mode = #tpu.pipeline_mode<synchronous>, transform_indices = @transform_1, window_bounds = array<i64: 9, 10, 1>}, {pipeline_mode = #tpu.pipeline_mode<synchronous>, transform_indices = @transform_2, window_bounds = array<i64: 10, 1>}, {pipeline_mode = #tpu.pipeline_mode<synchronous>, transform_indices = @transform_3, window_bounds = array<i64: 9, 16, 10>}, {pipeline_mode = #tpu.pipeline_mode<synchronous>, transform_indices = @transform_4, window_bounds = array<i64: 16, 1>}, {pipeline_mode = #tpu.pipeline_mode<synchronous>, transform_indices = @transform_5, window_bounds = array<i64: 9, 32, 16>}, {pipeline_mode = #tpu.pipeline_mode<synchronous>, transform_indices = @transform_6, window_bounds = array<i64: 32, 1>}, {pipeline_mode = #tpu.pipeline_mode<synchronous>, transform_indices = @transform_7, window_bounds = array<i64: 783, 256>}, {pipeline_mode = #tpu.pipeline_mode<synchronous>, transform_indices = @transform_8, window_bounds = array<i64: 151, 36>}, {pipeline_mode = #tpu.pipeline_mode<synchronous>, transform_indices = @transform_9, window_bounds = array<i64: 1152, 64>}, {pipeline_mode = #tpu.pipeline_mode<synchronous>, transform_indices = @transform_10, window_bounds = array<i64: 1, 64>}, {pipeline_mode = #tpu.pipeline_mode<synchronous>, transform_indices = @transform_11, window_bounds = array<i64: 64, 10>}, {pipeline_mode = #tpu.pipeline_mode<synchronous>, transform_indices = @transform_12, window_bounds = array<i64: 1, 10>}, {transform_indices = @transform_13, window_bounds = array<i64: 1, 1, 10>}]} {
    %cst = arith.constant 0.000000e+00 : f32
    %0 = vector.broadcast %cst : f32 to vector<10x784xf32>
    %c0 = arith.constant 0 : index
    %c0_0 = arith.constant 0 : index
    %c0_1 = arith.constant 0 : index
    %1 = vector.load %arg2[%c0, %c0_0, %c0_1] : memref<9x10x1xf32, #tpu.memory_space<vmem>>, vector<1x10x1xf32>
    %2 = vector.shape_cast %1 : vector<1x10x1xf32> to vector<10x1xf32>
    %c0_2 = arith.constant 0 : index
    %c0_3 = arith.constant 0 : index
    %c0_4 = arith.constant 0 : index
    %3 = vector.load %arg1[%c0_2, %c0_3, %c0_4] : memref<1x1x896xf32, #tpu.memory_space<vmem>>, vector<1x1x784xf32>
    %4 = vector.shape_cast %3 : vector<1x1x784xf32> to vector<1x784xf32>
    %5 = vector.broadcast %2 : vector<10x1xf32> to vector<10x784xf32>
    %6 = vector.broadcast %4 : vector<1x784xf32> to vector<10x784xf32>
    %7 = arith.mulf %5, %6 : vector<10x784xf32>
    %8 = arith.addf %0, %7 : vector<10x784xf32>
    %c1 = arith.constant 1 : index
    %c0_5 = arith.constant 0 : index
    %c0_6 = arith.constant 0 : index
    %9 = vector.load %arg2[%c1, %c0_5, %c0_6] : memref<9x10x1xf32, #tpu.memory_space<vmem>>, vector<1x10x1xf32>
    %10 = vector.shape_cast %9 : vector<1x10x1xf32> to vector<10x1xf32>
    %c0_7 = arith.constant 0 : index
    %c0_8 = arith.constant 0 : index
    %c1_9 = arith.constant 1 : index
    %11 = vector.load %arg1[%c0_7, %c0_8, %c1_9] : memref<1x1x896xf32, #tpu.memory_space<vmem>>, vector<1x1x784xf32>
    %12 = vector.shape_cast %11 : vector<1x1x784xf32> to vector<1x784xf32>
    %13 = vector.broadcast %10 : vector<10x1xf32> to vector<10x784xf32>
    %14 = vector.broadcast %12 : vector<1x784xf32> to vector<10x784xf32>
    %15 = arith.mulf %13, %14 : vector<10x784xf32>
    %16 = arith.addf %8, %15 : vector<10x784xf32>
    %c2 = arith.constant 2 : index
    %c0_10 = arith.constant 0 : index
    %c0_11 = arith.constant 0 : index
    %17 = vector.load %arg2[%c2, %c0_10, %c0_11] : memref<9x10x1xf32, #tpu.memory_space<vmem>>, vector<1x10x1xf32>
    %18 = vector.shape_cast %17 : vector<1x10x1xf32> to vector<10x1xf32>
    %c0_12 = arith.constant 0 : index
    %c0_13 = arith.constant 0 : index
    %c2_14 = arith.constant 2 : index
    %19 = vector.load %arg1[%c0_12, %c0_13, %c2_14] : memref<1x1x896xf32, #tpu.memory_space<vmem>>, vector<1x1x784xf32>
    %20 = vector.shape_cast %19 : vector<1x1x784xf32> to vector<1x784xf32>
    %21 = vector.broadcast %18 : vector<10x1xf32> to vector<10x784xf32>
    %22 = vector.broadcast %20 : vector<1x784xf32> to vector<10x784xf32>
    %23 = arith.mulf %21, %22 : vector<10x784xf32>
    %24 = arith.addf %16, %23 : vector<10x784xf32>
    %c3 = arith.constant 3 : index
    %c0_15 = arith.constant 0 : index
    %c0_16 = arith.constant 0 : index
    %25 = vector.load %arg2[%c3, %c0_15, %c0_16] : memref<9x10x1xf32, #tpu.memory_space<vmem>>, vector<1x10x1xf32>
    %26 = vector.shape_cast %25 : vector<1x10x1xf32> to vector<10x1xf32>
    %c0_17 = arith.constant 0 : index
    %c0_18 = arith.constant 0 : index
    %c28 = arith.constant 28 : index
    %27 = vector.load %arg1[%c0_17, %c0_18, %c28] : memref<1x1x896xf32, #tpu.memory_space<vmem>>, vector<1x1x784xf32>
    %28 = vector.shape_cast %27 : vector<1x1x784xf32> to vector<1x784xf32>
    %29 = vector.broadcast %26 : vector<10x1xf32> to vector<10x784xf32>
    %30 = vector.broadcast %28 : vector<1x784xf32> to vector<10x784xf32>
    %31 = arith.mulf %29, %30 : vector<10x784xf32>
    %32 = arith.addf %24, %31 : vector<10x784xf32>
    %c4 = arith.constant 4 : index
    %c0_19 = arith.constant 0 : index
    %c0_20 = arith.constant 0 : index
    %33 = vector.load %arg2[%c4, %c0_19, %c0_20] : memref<9x10x1xf32, #tpu.memory_space<vmem>>, vector<1x10x1xf32>
    %34 = vector.shape_cast %33 : vector<1x10x1xf32> to vector<10x1xf32>
    %c0_21 = arith.constant 0 : index
    %c0_22 = arith.constant 0 : index
    %c29 = arith.constant 29 : index
    %35 = vector.load %arg1[%c0_21, %c0_22, %c29] : memref<1x1x896xf32, #tpu.memory_space<vmem>>, vector<1x1x784xf32>
    %36 = vector.shape_cast %35 : vector<1x1x784xf32> to vector<1x784xf32>
    %37 = vector.broadcast %34 : vector<10x1xf32> to vector<10x784xf32>
    %38 = vector.broadcast %36 : vector<1x784xf32> to vector<10x784xf32>
    %39 = arith.mulf %37, %38 : vector<10x784xf32>
    %40 = arith.addf %32, %39 : vector<10x784xf32>
    %c5 = arith.constant 5 : index
    %c0_23 = arith.constant 0 : index
    %c0_24 = arith.constant 0 : index
    %41 = vector.load %arg2[%c5, %c0_23, %c0_24] : memref<9x10x1xf32, #tpu.memory_space<vmem>>, vector<1x10x1xf32>
    %42 = vector.shape_cast %41 : vector<1x10x1xf32> to vector<10x1xf32>
    %c0_25 = arith.constant 0 : index
    %c0_26 = arith.constant 0 : index
    %c30 = arith.constant 30 : index
    %43 = vector.load %arg1[%c0_25, %c0_26, %c30] : memref<1x1x896xf32, #tpu.memory_space<vmem>>, vector<1x1x784xf32>
    %44 = vector.shape_cast %43 : vector<1x1x784xf32> to vector<1x784xf32>
    %45 = vector.broadcast %42 : vector<10x1xf32> to vector<10x784xf32>
    %46 = vector.broadcast %44 : vector<1x784xf32> to vector<10x784xf32>
    %47 = arith.mulf %45, %46 : vector<10x784xf32>
    %48 = arith.addf %40, %47 : vector<10x784xf32>
    %c6 = arith.constant 6 : index
    %c0_27 = arith.constant 0 : index
    %c0_28 = arith.constant 0 : index
    %49 = vector.load %arg2[%c6, %c0_27, %c0_28] : memref<9x10x1xf32, #tpu.memory_space<vmem>>, vector<1x10x1xf32>
    %50 = vector.shape_cast %49 : vector<1x10x1xf32> to vector<10x1xf32>
    %c0_29 = arith.constant 0 : index
    %c0_30 = arith.constant 0 : index
    %c56 = arith.constant 56 : index
    %51 = vector.load %arg1[%c0_29, %c0_30, %c56] : memref<1x1x896xf32, #tpu.memory_space<vmem>>, vector<1x1x784xf32>
    %52 = vector.shape_cast %51 : vector<1x1x784xf32> to vector<1x784xf32>
    %53 = vector.broadcast %50 : vector<10x1xf32> to vector<10x784xf32>
    %54 = vector.broadcast %52 : vector<1x784xf32> to vector<10x784xf32>
    %55 = arith.mulf %53, %54 : vector<10x784xf32>
    %56 = arith.addf %48, %55 : vector<10x784xf32>
    %c7 = arith.constant 7 : index
    %c0_31 = arith.constant 0 : index
    %c0_32 = arith.constant 0 : index
    %57 = vector.load %arg2[%c7, %c0_31, %c0_32] : memref<9x10x1xf32, #tpu.memory_space<vmem>>, vector<1x10x1xf32>
    %58 = vector.shape_cast %57 : vector<1x10x1xf32> to vector<10x1xf32>
    %c0_33 = arith.constant 0 : index
    %c0_34 = arith.constant 0 : index
    %c57 = arith.constant 57 : index
    %59 = vector.load %arg1[%c0_33, %c0_34, %c57] : memref<1x1x896xf32, #tpu.memory_space<vmem>>, vector<1x1x784xf32>
    %60 = vector.shape_cast %59 : vector<1x1x784xf32> to vector<1x784xf32>
    %61 = vector.broadcast %58 : vector<10x1xf32> to vector<10x784xf32>
    %62 = vector.broadcast %60 : vector<1x784xf32> to vector<10x784xf32>
    %63 = arith.mulf %61, %62 : vector<10x784xf32>
    %64 = arith.addf %56, %63 : vector<10x784xf32>
    %c8 = arith.constant 8 : index
    %c0_35 = arith.constant 0 : index
    %c0_36 = arith.constant 0 : index
    %65 = vector.load %arg2[%c8, %c0_35, %c0_36] : memref<9x10x1xf32, #tpu.memory_space<vmem>>, vector<1x10x1xf32>
    %66 = vector.shape_cast %65 : vector<1x10x1xf32> to vector<10x1xf32>
    %c0_37 = arith.constant 0 : index
    %c0_38 = arith.constant 0 : index
    %c58 = arith.constant 58 : index
    %67 = vector.load %arg1[%c0_37, %c0_38, %c58] : memref<1x1x896xf32, #tpu.memory_space<vmem>>, vector<1x1x784xf32>
    %68 = vector.shape_cast %67 : vector<1x1x784xf32> to vector<1x784xf32>
    %69 = vector.broadcast %66 : vector<10x1xf32> to vector<10x784xf32>
    %70 = vector.broadcast %68 : vector<1x784xf32> to vector<10x784xf32>
    %71 = arith.mulf %69, %70 : vector<10x784xf32>
    %72 = arith.addf %64, %71 : vector<10x784xf32>
    %c0_39 = arith.constant 0 : index
    %c0_40 = arith.constant 0 : index
    %73 = vector.load %arg3[%c0_39, %c0_40] : memref<10x1xf32, #tpu.memory_space<vmem>>, vector<10x1xf32>
    %74 = vector.broadcast %73 : vector<10x1xf32> to vector<10x784xf32>
    %75 = arith.addf %72, %74 : vector<10x784xf32>
    %cst_41 = arith.constant 0.000000e+00 : f32
    %76 = vector.broadcast %cst_41 : f32 to vector<10x784xf32>
    %77 = arith.maximumf %75, %76 : vector<10x784xf32>
    %c0_42 = arith.constant 0 : index
    %c0_43 = arith.constant 0 : index
    %78 = vector.load %arg15[%c0_42, %c0_43] : memref<10x896xf32, #tpu.memory_space<vmem>>, vector<10x784xf32>
    tpu.vector_store %arg15[%c0_42, %c0_43], %77 {strides = array<i32>} : memref<10x896xf32, #tpu.memory_space<vmem>>, vector<10x784xf32>,
    %cst_44 = arith.constant 0.000000e+00 : f32
    %79 = vector.broadcast %cst_44 : f32 to vector<10x112xf32>
    %c0_45 = arith.constant 0 : index
    %c784 = arith.constant 784 : index
    %80 = vector.load %arg15[%c0_45, %c784] : memref<10x896xf32, #tpu.memory_space<vmem>>, vector<10x112xf32>
    tpu.vector_store %arg15[%c0_45, %c784], %79 {strides = array<i32>} : memref<10x896xf32, #tpu.memory_space<vmem>>, vector<10x112xf32>,
    %cst_46 = arith.constant 0.000000e+00 : f32
    %81 = vector.broadcast %cst_46 : f32 to vector<16x812xf32>
    %c0_47 = arith.constant 0 : index
    %c0_48 = arith.constant 0 : index
    %82 = vector.load %arg15[%c0_47, %c0_48] : memref<10x896xf32, #tpu.memory_space<vmem>>, vector<10x812xf32>
    %83 = arith.truncf %82 : vector<10x812xf32> to vector<10x812xbf16>
    %c0_49 = arith.constant 0 : index
    %c0_50 = arith.constant 0 : index
    %c0_51 = arith.constant 0 : index
    %84 = vector.load %arg4[%c0_49, %c0_50, %c0_51] : memref<9x16x10xbf16, #tpu.memory_space<vmem>>, vector<1x16x10xbf16>
    %85 = vector.shape_cast %84 : vector<1x16x10xbf16> to vector<16x10xbf16>
    %cst_52 = arith.constant dense<0.000000e+00> : vector<16x812xf32>
    %86 = tpu.matmul %85, %83, %cst_52 {dimension_numbers = #tpu.dot_dimension_numbers<[1], [0], [0], [1], [0, 0, 1, 1], [], []>} : vector<16x10xbf16>, vector<10x812xbf16>, vector<16x812xf32> -> vector<16x812xf32>
    %87 = arith.addf %81, %86 : vector<16x812xf32>
    %c0_53 = arith.constant 0 : index
    %c1_54 = arith.constant 1 : index
    %88 = vector.load %arg15[%c0_53, %c1_54] : memref<10x896xf32, #tpu.memory_space<vmem>>, vector<10x812xf32>
    %89 = arith.truncf %88 : vector<10x812xf32> to vector<10x812xbf16>
    %c1_55 = arith.constant 1 : index
    %c0_56 = arith.constant 0 : index
    %c0_57 = arith.constant 0 : index
    %90 = vector.load %arg4[%c1_55, %c0_56, %c0_57] : memref<9x16x10xbf16, #tpu.memory_space<vmem>>, vector<1x16x10xbf16>
    %91 = vector.shape_cast %90 : vector<1x16x10xbf16> to vector<16x10xbf16>
    %cst_58 = arith.constant dense<0.000000e+00> : vector<16x812xf32>
    %92 = tpu.matmul %91, %89, %cst_58 {dimension_numbers = #tpu.dot_dimension_numbers<[1], [0], [0], [1], [0, 0, 1, 1], [], []>} : vector<16x10xbf16>, vector<10x812xbf16>, vector<16x812xf32> -> vector<16x812xf32>
    %93 = arith.addf %87, %92 : vector<16x812xf32>
    %c0_59 = arith.constant 0 : index
    %c2_60 = arith.constant 2 : index
    %94 = vector.load %arg15[%c0_59, %c2_60] : memref<10x896xf32, #tpu.memory_space<vmem>>, vector<10x812xf32>
    %95 = arith.truncf %94 : vector<10x812xf32> to vector<10x812xbf16>
    %c2_61 = arith.constant 2 : index
    %c0_62 = arith.constant 0 : index
    %c0_63 = arith.constant 0 : index
    %96 = vector.load %arg4[%c2_61, %c0_62, %c0_63] : memref<9x16x10xbf16, #tpu.memory_space<vmem>>, vector<1x16x10xbf16>
    %97 = vector.shape_cast %96 : vector<1x16x10xbf16> to vector<16x10xbf16>
    %cst_64 = arith.constant dense<0.000000e+00> : vector<16x812xf32>
    %98 = tpu.matmul %97, %95, %cst_64 {dimension_numbers = #tpu.dot_dimension_numbers<[1], [0], [0], [1], [0, 0, 1, 1], [], []>} : vector<16x10xbf16>, vector<10x812xbf16>, vector<16x812xf32> -> vector<16x812xf32>
    %99 = arith.addf %93, %98 : vector<16x812xf32>
    %c0_65 = arith.constant 0 : index
    %c28_66 = arith.constant 28 : index
    %100 = vector.load %arg15[%c0_65, %c28_66] : memref<10x896xf32, #tpu.memory_space<vmem>>, vector<10x812xf32>
    %101 = arith.truncf %100 : vector<10x812xf32> to vector<10x812xbf16>
    %c3_67 = arith.constant 3 : index
    %c0_68 = arith.constant 0 : index
    %c0_69 = arith.constant 0 : index
    %102 = vector.load %arg4[%c3_67, %c0_68, %c0_69] : memref<9x16x10xbf16, #tpu.memory_space<vmem>>, vector<1x16x10xbf16>
    %103 = vector.shape_cast %102 : vector<1x16x10xbf16> to vector<16x10xbf16>
    %cst_70 = arith.constant dense<0.000000e+00> : vector<16x812xf32>
    %104 = tpu.matmul %103, %101, %cst_70 {dimension_numbers = #tpu.dot_dimension_numbers<[1], [0], [0], [1], [0, 0, 1, 1], [], []>} : vector<16x10xbf16>, vector<10x812xbf16>, vector<16x812xf32> -> vector<16x812xf32>
    %105 = arith.addf %99, %104 : vector<16x812xf32>
    %c0_71 = arith.constant 0 : index
    %c29_72 = arith.constant 29 : index
    %106 = vector.load %arg15[%c0_71, %c29_72] : memref<10x896xf32, #tpu.memory_space<vmem>>, vector<10x812xf32>
    %107 = arith.truncf %106 : vector<10x812xf32> to vector<10x812xbf16>
    %c4_73 = arith.constant 4 : index
    %c0_74 = arith.constant 0 : index
    %c0_75 = arith.constant 0 : index
    %108 = vector.load %arg4[%c4_73, %c0_74, %c0_75] : memref<9x16x10xbf16, #tpu.memory_space<vmem>>, vector<1x16x10xbf16>
    %109 = vector.shape_cast %108 : vector<1x16x10xbf16> to vector<16x10xbf16>
    %cst_76 = arith.constant dense<0.000000e+00> : vector<16x812xf32>
    %110 = tpu.matmul %109, %107, %cst_76 {dimension_numbers = #tpu.dot_dimension_numbers<[1], [0], [0], [1], [0, 0, 1, 1], [], []>} : vector<16x10xbf16>, vector<10x812xbf16>, vector<16x812xf32> -> vector<16x812xf32>
    %111 = arith.addf %105, %110 : vector<16x812xf32>
    %c0_77 = arith.constant 0 : index
    %c30_78 = arith.constant 30 : index
    %112 = vector.load %arg15[%c0_77, %c30_78] : memref<10x896xf32, #tpu.memory_space<vmem>>, vector<10x812xf32>
    %113 = arith.truncf %112 : vector<10x812xf32> to vector<10x812xbf16>
    %c5_79 = arith.constant 5 : index
    %c0_80 = arith.constant 0 : index
    %c0_81 = arith.constant 0 : index
    %114 = vector.load %arg4[%c5_79, %c0_80, %c0_81] : memref<9x16x10xbf16, #tpu.memory_space<vmem>>, vector<1x16x10xbf16>
    %115 = vector.shape_cast %114 : vector<1x16x10xbf16> to vector<16x10xbf16>
    %cst_82 = arith.constant dense<0.000000e+00> : vector<16x812xf32>
    %116 = tpu.matmul %115, %113, %cst_82 {dimension_numbers = #tpu.dot_dimension_numbers<[1], [0], [0], [1], [0, 0, 1, 1], [], []>} : vector<16x10xbf16>, vector<10x812xbf16>, vector<16x812xf32> -> vector<16x812xf32>
    %117 = arith.addf %111, %116 : vector<16x812xf32>
    %c0_83 = arith.constant 0 : index
    %c56_84 = arith.constant 56 : index
    %118 = vector.load %arg15[%c0_83, %c56_84] : memref<10x896xf32, #tpu.memory_space<vmem>>, vector<10x812xf32>
    %119 = arith.truncf %118 : vector<10x812xf32> to vector<10x812xbf16>
    %c6_85 = arith.constant 6 : index
    %c0_86 = arith.constant 0 : index
    %c0_87 = arith.constant 0 : index
    %120 = vector.load %arg4[%c6_85, %c0_86, %c0_87] : memref<9x16x10xbf16, #tpu.memory_space<vmem>>, vector<1x16x10xbf16>
    %121 = vector.shape_cast %120 : vector<1x16x10xbf16> to vector<16x10xbf16>
    %cst_88 = arith.constant dense<0.000000e+00> : vector<16x812xf32>
    %122 = tpu.matmul %121, %119, %cst_88 {dimension_numbers = #tpu.dot_dimension_numbers<[1], [0], [0], [1], [0, 0, 1, 1], [], []>} : vector<16x10xbf16>, vector<10x812xbf16>, vector<16x812xf32> -> vector<16x812xf32>
    %123 = arith.addf %117, %122 : vector<16x812xf32>
    %c0_89 = arith.constant 0 : index
    %c57_90 = arith.constant 57 : index
    %124 = vector.load %arg15[%c0_89, %c57_90] : memref<10x896xf32, #tpu.memory_space<vmem>>, vector<10x812xf32>
    %125 = arith.truncf %124 : vector<10x812xf32> to vector<10x812xbf16>
    %c7_91 = arith.constant 7 : index
    %c0_92 = arith.constant 0 : index
    %c0_93 = arith.constant 0 : index
    %126 = vector.load %arg4[%c7_91, %c0_92, %c0_93] : memref<9x16x10xbf16, #tpu.memory_space<vmem>>, vector<1x16x10xbf16>
    %127 = vector.shape_cast %126 : vector<1x16x10xbf16> to vector<16x10xbf16>
    %cst_94 = arith.constant dense<0.000000e+00> : vector<16x812xf32>
    %128 = tpu.matmul %127, %125, %cst_94 {dimension_numbers = #tpu.dot_dimension_numbers<[1], [0], [0], [1], [0, 0, 1, 1], [], []>} : vector<16x10xbf16>, vector<10x812xbf16>, vector<16x812xf32> -> vector<16x812xf32>
    %129 = arith.addf %123, %128 : vector<16x812xf32>
    %c0_95 = arith.constant 0 : index
    %c58_96 = arith.constant 58 : index
    %130 = vector.load %arg15[%c0_95, %c58_96] : memref<10x896xf32, #tpu.memory_space<vmem>>, vector<10x812xf32>
    %131 = arith.truncf %130 : vector<10x812xf32> to vector<10x812xbf16>
    %c8_97 = arith.constant 8 : index
    %c0_98 = arith.constant 0 : index
    %c0_99 = arith.constant 0 : index
    %132 = vector.load %arg4[%c8_97, %c0_98, %c0_99] : memref<9x16x10xbf16, #tpu.memory_space<vmem>>, vector<1x16x10xbf16>
    %133 = vector.shape_cast %132 : vector<1x16x10xbf16> to vector<16x10xbf16>
    %cst_100 = arith.constant dense<0.000000e+00> : vector<16x812xf32>
    %134 = tpu.matmul %133, %131, %cst_100 {dimension_numbers = #tpu.dot_dimension_numbers<[1], [0], [0], [1], [0, 0, 1, 1], [], []>} : vector<16x10xbf16>, vector<10x812xbf16>, vector<16x812xf32> -> vector<16x812xf32>
    %135 = arith.addf %129, %134 : vector<16x812xf32>
    %c0_101 = arith.constant 0 : index
    %c0_102 = arith.constant 0 : index
    %136 = vector.load %arg5[%c0_101, %c0_102] : memref<16x1xf32, #tpu.memory_space<vmem>>, vector<16x1xf32>
    %137 = vector.broadcast %136 : vector<16x1xf32> to vector<16x812xf32>
    %138 = arith.addf %135, %137 : vector<16x812xf32>
    %cst_103 = arith.constant 0.000000e+00 : f32
    %139 = vector.broadcast %cst_103 : f32 to vector<16x812xf32>
    %140 = arith.maximumf %138, %139 : vector<16x812xf32>
    %141 = vector.extract_strided_slice %140 {offsets = [0, 0], sizes = [16, 784], strides = [1, 1]} : vector<16x812xf32> to vector<16x784xf32>
    %142 = vector.extract_strided_slice %140 {offsets = [0, 28], sizes = [16, 784], strides = [1, 1]} : vector<16x812xf32> to vector<16x784xf32>
    %143 = arith.maximumf %141, %142 : vector<16x784xf32>
    %144 = vector.extract_strided_slice %143 {offsets = [0, 0], sizes = [16, 783], strides = [1, 1]} : vector<16x784xf32> to vector<16x783xf32>
    %145 = vector.extract_strided_slice %143 {offsets = [0, 1], sizes = [16, 783], strides = [1, 1]} : vector<16x784xf32> to vector<16x783xf32>
    %146 = arith.maximumf %144, %145 : vector<16x783xf32>
    %147 = arith.truncf %146 : vector<16x783xf32> to vector<16x783xbf16>
    %c0_104 = arith.constant 0 : index
    %c0_105 = arith.constant 0 : index
    %148 = vector.load %arg8[%c0_104, %c0_105] : memref<783x256xbf16, #tpu.memory_space<vmem>>, vector<783x256xbf16>
    %cst_106 = arith.constant dense<0.000000e+00> : vector<16x256xf32>
    %149 = tpu.matmul %147, %148, %cst_106 {dimension_numbers = #tpu.dot_dimension_numbers<[1], [0], [0], [1], [0, 0, 1, 1], [], []>} : vector<16x783xbf16>, vector<783x256xbf16>, vector<16x256xf32> -> vector<16x256xf32>
    %150 = arith.truncf %149 : vector<16x256xf32> to vector<16x256xbf16>
    %cst_107 = arith.constant 0.000000e+00 : f32
    %151 = vector.broadcast %cst_107 : f32 to vector<32x166xf32>
    %c0_108 = arith.constant 0 : index
    %c0_109 = arith.constant 0 : index
    %c0_110 = arith.constant 0 : index
    %152 = vector.load %arg6[%c0_108, %c0_109, %c0_110] : memref<9x32x16xbf16, #tpu.memory_space<vmem>>, vector<1x32x16xbf16>
    %153 = vector.shape_cast %152 : vector<1x32x16xbf16> to vector<32x16xbf16>
    %154 = vector.extract_strided_slice %150 {offsets = [0, 0], sizes = [16, 166], strides = [1, 1]} : vector<16x256xbf16> to vector<16x166xbf16>
    %cst_111 = arith.constant dense<0.000000e+00> : vector<32x166xf32>
    %155 = tpu.matmul %153, %154, %cst_111 {dimension_numbers = #tpu.dot_dimension_numbers<[1], [0], [0], [1], [0, 0, 1, 1], [], []>} : vector<32x16xbf16>, vector<16x166xbf16>, vector<32x166xf32> -> vector<32x166xf32>
    %156 = arith.addf %151, %155 : vector<32x166xf32>
    %c1_112 = arith.constant 1 : index
    %c0_113 = arith.constant 0 : index
    %c0_114 = arith.constant 0 : index
    %157 = vector.load %arg6[%c1_112, %c0_113, %c0_114] : memref<9x32x16xbf16, #tpu.memory_space<vmem>>, vector<1x32x16xbf16>
    %158 = vector.shape_cast %157 : vector<1x32x16xbf16> to vector<32x16xbf16>
    %159 = vector.extract_strided_slice %150 {offsets = [0, 1], sizes = [16, 166], strides = [1, 1]} : vector<16x256xbf16> to vector<16x166xbf16>
    %cst_115 = arith.constant dense<0.000000e+00> : vector<32x166xf32>
    %160 = tpu.matmul %158, %159, %cst_115 {dimension_numbers = #tpu.dot_dimension_numbers<[1], [0], [0], [1], [0, 0, 1, 1], [], []>} : vector<32x16xbf16>, vector<16x166xbf16>, vector<32x166xf32> -> vector<32x166xf32>
    %161 = arith.addf %156, %160 : vector<32x166xf32>
    %c2_116 = arith.constant 2 : index
    %c0_117 = arith.constant 0 : index
    %c0_118 = arith.constant 0 : index
    %162 = vector.load %arg6[%c2_116, %c0_117, %c0_118] : memref<9x32x16xbf16, #tpu.memory_space<vmem>>, vector<1x32x16xbf16>
    %163 = vector.shape_cast %162 : vector<1x32x16xbf16> to vector<32x16xbf16>
    %164 = vector.extract_strided_slice %150 {offsets = [0, 2], sizes = [16, 166], strides = [1, 1]} : vector<16x256xbf16> to vector<16x166xbf16>
    %cst_119 = arith.constant dense<0.000000e+00> : vector<32x166xf32>
    %165 = tpu.matmul %163, %164, %cst_119 {dimension_numbers = #tpu.dot_dimension_numbers<[1], [0], [0], [1], [0, 0, 1, 1], [], []>} : vector<32x16xbf16>, vector<16x166xbf16>, vector<32x166xf32> -> vector<32x166xf32>
    %166 = arith.addf %161, %165 : vector<32x166xf32>
    %c3_120 = arith.constant 3 : index
    %c0_121 = arith.constant 0 : index
    %c0_122 = arith.constant 0 : index
    %167 = vector.load %arg6[%c3_120, %c0_121, %c0_122] : memref<9x32x16xbf16, #tpu.memory_space<vmem>>, vector<1x32x16xbf16>
    %168 = vector.shape_cast %167 : vector<1x32x16xbf16> to vector<32x16xbf16>
    %169 = vector.extract_strided_slice %150 {offsets = [0, 14], sizes = [16, 166], strides = [1, 1]} : vector<16x256xbf16> to vector<16x166xbf16>
    %cst_123 = arith.constant dense<0.000000e+00> : vector<32x166xf32>
    %170 = tpu.matmul %168, %169, %cst_123 {dimension_numbers = #tpu.dot_dimension_numbers<[1], [0], [0], [1], [0, 0, 1, 1], [], []>} : vector<32x16xbf16>, vector<16x166xbf16>, vector<32x166xf32> -> vector<32x166xf32>
    %171 = arith.addf %166, %170 : vector<32x166xf32>
    %c4_124 = arith.constant 4 : index
    %c0_125 = arith.constant 0 : index
    %c0_126 = arith.constant 0 : index
    %172 = vector.load %arg6[%c4_124, %c0_125, %c0_126] : memref<9x32x16xbf16, #tpu.memory_space<vmem>>, vector<1x32x16xbf16>
    %173 = vector.shape_cast %172 : vector<1x32x16xbf16> to vector<32x16xbf16>
    %174 = vector.extract_strided_slice %150 {offsets = [0, 15], sizes = [16, 166], strides = [1, 1]} : vector<16x256xbf16> to vector<16x166xbf16>
    %cst_127 = arith.constant dense<0.000000e+00> : vector<32x166xf32>
    %175 = tpu.matmul %173, %174, %cst_127 {dimension_numbers = #tpu.dot_dimension_numbers<[1], [0], [0], [1], [0, 0, 1, 1], [], []>} : vector<32x16xbf16>, vector<16x166xbf16>, vector<32x166xf32> -> vector<32x166xf32>
    %176 = arith.addf %171, %175 : vector<32x166xf32>
    %c5_128 = arith.constant 5 : index
    %c0_129 = arith.constant 0 : index
    %c0_130 = arith.constant 0 : index
    %177 = vector.load %arg6[%c5_128, %c0_129, %c0_130] : memref<9x32x16xbf16, #tpu.memory_space<vmem>>, vector<1x32x16xbf16>
    %178 = vector.shape_cast %177 : vector<1x32x16xbf16> to vector<32x16xbf16>
    %179 = vector.extract_strided_slice %150 {offsets = [0, 16], sizes = [16, 166], strides = [1, 1]} : vector<16x256xbf16> to vector<16x166xbf16>
    %cst_131 = arith.constant dense<0.000000e+00> : vector<32x166xf32>
    %180 = tpu.matmul %178, %179, %cst_131 {dimension_numbers = #tpu.dot_dimension_numbers<[1], [0], [0], [1], [0, 0, 1, 1], [], []>} : vector<32x16xbf16>, vector<16x166xbf16>, vector<32x166xf32> -> vector<32x166xf32>
    %181 = arith.addf %176, %180 : vector<32x166xf32>
    %c6_132 = arith.constant 6 : index
    %c0_133 = arith.constant 0 : index
    %c0_134 = arith.constant 0 : index
    %182 = vector.load %arg6[%c6_132, %c0_133, %c0_134] : memref<9x32x16xbf16, #tpu.memory_space<vmem>>, vector<1x32x16xbf16>
    %183 = vector.shape_cast %182 : vector<1x32x16xbf16> to vector<32x16xbf16>
    %184 = vector.extract_strided_slice %150 {offsets = [0, 28], sizes = [16, 166], strides = [1, 1]} : vector<16x256xbf16> to vector<16x166xbf16>
    %cst_135 = arith.constant dense<0.000000e+00> : vector<32x166xf32>
    %185 = tpu.matmul %183, %184, %cst_135 {dimension_numbers = #tpu.dot_dimension_numbers<[1], [0], [0], [1], [0, 0, 1, 1], [], []>} : vector<32x16xbf16>, vector<16x166xbf16>, vector<32x166xf32> -> vector<32x166xf32>
    %186 = arith.addf %181, %185 : vector<32x166xf32>
    %c7_136 = arith.constant 7 : index
    %c0_137 = arith.constant 0 : index
    %c0_138 = arith.constant 0 : index
    %187 = vector.load %arg6[%c7_136, %c0_137, %c0_138] : memref<9x32x16xbf16, #tpu.memory_space<vmem>>, vector<1x32x16xbf16>
    %188 = vector.shape_cast %187 : vector<1x32x16xbf16> to vector<32x16xbf16>
    %189 = vector.extract_strided_slice %150 {offsets = [0, 29], sizes = [16, 166], strides = [1, 1]} : vector<16x256xbf16> to vector<16x166xbf16>
    %cst_139 = arith.constant dense<0.000000e+00> : vector<32x166xf32>
    %190 = tpu.matmul %188, %189, %cst_139 {dimension_numbers = #tpu.dot_dimension_numbers<[1], [0], [0], [1], [0, 0, 1, 1], [], []>} : vector<32x16xbf16>, vector<16x166xbf16>, vector<32x166xf32> -> vector<32x166xf32>
    %191 = arith.addf %186, %190 : vector<32x166xf32>
    %c8_140 = arith.constant 8 : index
    %c0_141 = arith.constant 0 : index
    %c0_142 = arith.constant 0 : index
    %192 = vector.load %arg6[%c8_140, %c0_141, %c0_142] : memref<9x32x16xbf16, #tpu.memory_space<vmem>>, vector<1x32x16xbf16>
    %193 = vector.shape_cast %192 : vector<1x32x16xbf16> to vector<32x16xbf16>
    %194 = vector.extract_strided_slice %150 {offsets = [0, 30], sizes = [16, 166], strides = [1, 1]} : vector<16x256xbf16> to vector<16x166xbf16>
    %cst_143 = arith.constant dense<0.000000e+00> : vector<32x166xf32>
    %195 = tpu.matmul %193, %194, %cst_143 {dimension_numbers = #tpu.dot_dimension_numbers<[1], [0], [0], [1], [0, 0, 1, 1], [], []>} : vector<32x16xbf16>, vector<16x166xbf16>, vector<32x166xf32> -> vector<32x166xf32>
    %196 = arith.addf %191, %195 : vector<32x166xf32>
    %c0_144 = arith.constant 0 : index
    %c0_145 = arith.constant 0 : index
    %197 = vector.load %arg7[%c0_144, %c0_145] : memref<32x1xf32, #tpu.memory_space<vmem>>, vector<32x1xf32>
    %198 = vector.broadcast %197 : vector<32x1xf32> to vector<32x166xf32>
    %199 = arith.addf %196, %198 : vector<32x166xf32>
    %cst_146 = arith.constant 0.000000e+00 : f32
    %200 = vector.broadcast %cst_146 : f32 to vector<32x166xf32>
    %201 = arith.maximumf %199, %200 : vector<32x166xf32>
    %202 = vector.extract_strided_slice %201 {offsets = [0, 0], sizes = [32, 152], strides = [1, 1]} : vector<32x166xf32> to vector<32x152xf32>
    %203 = vector.extract_strided_slice %201 {offsets = [0, 14], sizes = [32, 152], strides = [1, 1]} : vector<32x166xf32> to vector<32x152xf32>
    %204 = arith.maximumf %202, %203 : vector<32x152xf32>
    %205 = vector.extract_strided_slice %204 {offsets = [0, 0], sizes = [32, 151], strides = [1, 1]} : vector<32x152xf32> to vector<32x151xf32>
    %206 = vector.extract_strided_slice %204 {offsets = [0, 1], sizes = [32, 151], strides = [1, 1]} : vector<32x152xf32> to vector<32x151xf32>
    %207 = arith.maximumf %205, %206 : vector<32x151xf32>
    %208 = arith.truncf %207 : vector<32x151xf32> to vector<32x151xbf16>
    %c0_147 = arith.constant 0 : index
    %c0_148 = arith.constant 0 : index
    %209 = vector.load %arg9[%c0_147, %c0_148] : memref<151x36xbf16, #tpu.memory_space<vmem>>, vector<151x36xbf16>
    %cst_149 = arith.constant dense<0.000000e+00> : vector<32x36xf32>
    %210 = tpu.matmul %208, %209, %cst_149 {dimension_numbers = #tpu.dot_dimension_numbers<[1], [0], [0], [1], [0, 0, 1, 1], [], []>} : vector<32x151xbf16>, vector<151x36xbf16>, vector<32x36xf32> -> vector<32x36xf32>
    %c0_150 = arith.constant 0 : index
    %c0_151 = arith.constant 0 : index
    %211 = vector.load %arg16[%c0_150, %c0_151] : memref<32x36xf32, #tpu.memory_space<vmem>>, vector<32x36xf32>
    tpu.vector_store %arg16[%c0_150, %c0_151], %210 {strides = array<i32>} : memref<32x36xf32, #tpu.memory_space<vmem>>, vector<32x36xf32>,
    %c0_152 = arith.constant 0 : index
    %c0_153 = arith.constant 0 : index
    %212 = vector.load %arg16[%c0_152, %c0_153] : memref<32x36xf32, #tpu.memory_space<vmem>>, vector<1x36xf32>
    %213 = vector.shape_cast %212 : vector<1x36xf32> to vector<36xf32>
    %c0_154 = arith.constant 0 : index
    %c0_155 = arith.constant 0 : index
    %214 = vector.load %arg17[%c0_154, %c0_155] : memref<1x1152xf32, #tpu.memory_space<vmem>>, vector<1x36xf32>
    %215 = vector.shape_cast %214 : vector<1x36xf32> to vector<36xf32>
    %216 = vector.shape_cast %213 : vector<36xf32> to vector<1x36xf32>
    tpu.vector_store %arg17[%c0_154, %c0_155], %216 {strides = array<i32>} : memref<1x1152xf32, #tpu.memory_space<vmem>>, vector<1x36xf32>,
    %c1_156 = arith.constant 1 : index
    %c0_157 = arith.constant 0 : index
    %217 = vector.load %arg16[%c1_156, %c0_157] : memref<32x36xf32, #tpu.memory_space<vmem>>, vector<1x36xf32>
    %218 = vector.shape_cast %217 : vector<1x36xf32> to vector<36xf32>
    %c0_158 = arith.constant 0 : index
    %c36 = arith.constant 36 : index
    %219 = vector.load %arg17[%c0_158, %c36] : memref<1x1152xf32, #tpu.memory_space<vmem>>, vector<1x36xf32>
    %220 = vector.shape_cast %219 : vector<1x36xf32> to vector<36xf32>
    %221 = vector.shape_cast %218 : vector<36xf32> to vector<1x36xf32>
    tpu.vector_store %arg17[%c0_158, %c36], %221 {strides = array<i32>} : memref<1x1152xf32, #tpu.memory_space<vmem>>, vector<1x36xf32>,
    %c2_159 = arith.constant 2 : index
    %c0_160 = arith.constant 0 : index
    %222 = vector.load %arg16[%c2_159, %c0_160] : memref<32x36xf32, #tpu.memory_space<vmem>>, vector<1x36xf32>
    %223 = vector.shape_cast %222 : vector<1x36xf32> to vector<36xf32>
    %c0_161 = arith.constant 0 : index
    %c72 = arith.constant 72 : index
    %224 = vector.load %arg17[%c0_161, %c72] : memref<1x1152xf32, #tpu.memory_space<vmem>>, vector<1x36xf32>
    %225 = vector.shape_cast %224 : vector<1x36xf32> to vector<36xf32>
    %226 = vector.shape_cast %223 : vector<36xf32> to vector<1x36xf32>
    tpu.vector_store %arg17[%c0_161, %c72], %226 {strides = array<i32>} : memref<1x1152xf32, #tpu.memory_space<vmem>>, vector<1x36xf32>,
    %c3_162 = arith.constant 3 : index
    %c0_163 = arith.constant 0 : index
    %227 = vector.load %arg16[%c3_162, %c0_163] : memref<32x36xf32, #tpu.memory_space<vmem>>, vector<1x36xf32>
    %228 = vector.shape_cast %227 : vector<1x36xf32> to vector<36xf32>
    %c0_164 = arith.constant 0 : index
    %c108 = arith.constant 108 : index
    %229 = vector.load %arg17[%c0_164, %c108] : memref<1x1152xf32, #tpu.memory_space<vmem>>, vector<1x36xf32>
    %230 = vector.shape_cast %229 : vector<1x36xf32> to vector<36xf32>
    %231 = vector.shape_cast %228 : vector<36xf32> to vector<1x36xf32>
    tpu.vector_store %arg17[%c0_164, %c108], %231 {strides = array<i32>} : memref<1x1152xf32, #tpu.memory_space<vmem>>, vector<1x36xf32>,
    %c4_165 = arith.constant 4 : index
    %c0_166 = arith.constant 0 : index
    %232 = vector.load %arg16[%c4_165, %c0_166] : memref<32x36xf32, #tpu.memory_space<vmem>>, vector<1x36xf32>
    %233 = vector.shape_cast %232 : vector<1x36xf32> to vector<36xf32>
    %c0_167 = arith.constant 0 : index
    %c144 = arith.constant 144 : index
    %234 = vector.load %arg17[%c0_167, %c144] : memref<1x1152xf32, #tpu.memory_space<vmem>>, vector<1x36xf32>
    %235 = vector.shape_cast %234 : vector<1x36xf32> to vector<36xf32>
    %236 = vector.shape_cast %233 : vector<36xf32> to vector<1x36xf32>
    tpu.vector_store %arg17[%c0_167, %c144], %236 {strides = array<i32>} : memref<1x1152xf32, #tpu.memory_space<vmem>>, vector<1x36xf32>,
    %c5_168 = arith.constant 5 : index
    %c0_169 = arith.constant 0 : index
    %237 = vector.load %arg16[%c5_168, %c0_169] : memref<32x36xf32, #tpu.memory_space<vmem>>, vector<1x36xf32>
    %238 = vector.shape_cast %237 : vector<1x36xf32> to vector<36xf32>
    %c0_170 = arith.constant 0 : index
    %c180 = arith.constant 180 : index
    %239 = vector.load %arg17[%c0_170, %c180] : memref<1x1152xf32, #tpu.memory_space<vmem>>, vector<1x36xf32>
    %240 = vector.shape_cast %239 : vector<1x36xf32> to vector<36xf32>
    %241 = vector.shape_cast %238 : vector<36xf32> to vector<1x36xf32>
    tpu.vector_store %arg17[%c0_170, %c180], %241 {strides = array<i32>} : memref<1x1152xf32, #tpu.memory_space<vmem>>, vector<1x36xf32>,
    %c6_171 = arith.constant 6 : index
    %c0_172 = arith.constant 0 : index
    %242 = vector.load %arg16[%c6_171, %c0_172] : memref<32x36xf32, #tpu.memory_space<vmem>>, vector<1x36xf32>
    %243 = vector.shape_cast %242 : vector<1x36xf32> to vector<36xf32>
    %c0_173 = arith.constant 0 : index
    %c216 = arith.constant 216 : index
    %244 = vector.load %arg17[%c0_173, %c216] : memref<1x1152xf32, #tpu.memory_space<vmem>>, vector<1x36xf32>
    %245 = vector.shape_cast %244 : vector<1x36xf32> to vector<36xf32>
    %246 = vector.shape_cast %243 : vector<36xf32> to vector<1x36xf32>
    tpu.vector_store %arg17[%c0_173, %c216], %246 {strides = array<i32>} : memref<1x1152xf32, #tpu.memory_space<vmem>>, vector<1x36xf32>,
    %c7_174 = arith.constant 7 : index
    %c0_175 = arith.constant 0 : index
    %247 = vector.load %arg16[%c7_174, %c0_175] : memref<32x36xf32, #tpu.memory_space<vmem>>, vector<1x36xf32>
    %248 = vector.shape_cast %247 : vector<1x36xf32> to vector<36xf32>
    %c0_176 = arith.constant 0 : index
    %c252 = arith.constant 252 : index
    %249 = vector.load %arg17[%c0_176, %c252] : memref<1x1152xf32, #tpu.memory_space<vmem>>, vector<1x36xf32>
    %250 = vector.shape_cast %249 : vector<1x36xf32> to vector<36xf32>
    %251 = vector.shape_cast %248 : vector<36xf32> to vector<1x36xf32>
    tpu.vector_store %arg17[%c0_176, %c252], %251 {strides = array<i32>} : memref<1x1152xf32, #tpu.memory_space<vmem>>, vector<1x36xf32>,
    %c8_177 = arith.constant 8 : index
    %c0_178 = arith.constant 0 : index
    %252 = vector.load %arg16[%c8_177, %c0_178] : memref<32x36xf32, #tpu.memory_space<vmem>>, vector<1x36xf32>
    %253 = vector.shape_cast %252 : vector<1x36xf32> to vector<36xf32>
    %c0_179 = arith.constant 0 : index
    %c288 = arith.constant 288 : index
    %254 = vector.load %arg17[%c0_179, %c288] : memref<1x1152xf32, #tpu.memory_space<vmem>>, vector<1x36xf32>
    %255 = vector.shape_cast %254 : vector<1x36xf32> to vector<36xf32>
    %256 = vector.shape_cast %253 : vector<36xf32> to vector<1x36xf32>
    tpu.vector_store %arg17[%c0_179, %c288], %256 {strides = array<i32>} : memref<1x1152xf32, #tpu.memory_space<vmem>>, vector<1x36xf32>,
    %c9 = arith.constant 9 : index
    %c0_180 = arith.constant 0 : index
    %257 = vector.load %arg16[%c9, %c0_180] : memref<32x36xf32, #tpu.memory_space<vmem>>, vector<1x36xf32>
    %258 = vector.shape_cast %257 : vector<1x36xf32> to vector<36xf32>
    %c0_181 = arith.constant 0 : index
    %c324 = arith.constant 324 : index
    %259 = vector.load %arg17[%c0_181, %c324] : memref<1x1152xf32, #tpu.memory_space<vmem>>, vector<1x36xf32>
    %260 = vector.shape_cast %259 : vector<1x36xf32> to vector<36xf32>
    %261 = vector.shape_cast %258 : vector<36xf32> to vector<1x36xf32>
    tpu.vector_store %arg17[%c0_181, %c324], %261 {strides = array<i32>} : memref<1x1152xf32, #tpu.memory_space<vmem>>, vector<1x36xf32>,
    %c10 = arith.constant 10 : index
    %c0_182 = arith.constant 0 : index
    %262 = vector.load %arg16[%c10, %c0_182] : memref<32x36xf32, #tpu.memory_space<vmem>>, vector<1x36xf32>
    %263 = vector.shape_cast %262 : vector<1x36xf32> to vector<36xf32>
    %c0_183 = arith.constant 0 : index
    %c360 = arith.constant 360 : index
    %264 = vector.load %arg17[%c0_183, %c360] : memref<1x1152xf32, #tpu.memory_space<vmem>>, vector<1x36xf32>
    %265 = vector.shape_cast %264 : vector<1x36xf32> to vector<36xf32>
    %266 = vector.shape_cast %263 : vector<36xf32> to vector<1x36xf32>
    tpu.vector_store %arg17[%c0_183, %c360], %266 {strides = array<i32>} : memref<1x1152xf32, #tpu.memory_space<vmem>>, vector<1x36xf32>,
    %c11 = arith.constant 11 : index
    %c0_184 = arith.constant 0 : index
    %267 = vector.load %arg16[%c11, %c0_184] : memref<32x36xf32, #tpu.memory_space<vmem>>, vector<1x36xf32>
    %268 = vector.shape_cast %267 : vector<1x36xf32> to vector<36xf32>
    %c0_185 = arith.constant 0 : index
    %c396 = arith.constant 396 : index
    %269 = vector.load %arg17[%c0_185, %c396] : memref<1x1152xf32, #tpu.memory_space<vmem>>, vector<1x36xf32>
    %270 = vector.shape_cast %269 : vector<1x36xf32> to vector<36xf32>
    %271 = vector.shape_cast %268 : vector<36xf32> to vector<1x36xf32>
    tpu.vector_store %arg17[%c0_185, %c396], %271 {strides = array<i32>} : memref<1x1152xf32, #tpu.memory_space<vmem>>, vector<1x36xf32>,
    %c12 = arith.constant 12 : index
    %c0_186 = arith.constant 0 : index
    %272 = vector.load %arg16[%c12, %c0_186] : memref<32x36xf32, #tpu.memory_space<vmem>>, vector<1x36xf32>
    %273 = vector.shape_cast %272 : vector<1x36xf32> to vector<36xf32>
    %c0_187 = arith.constant 0 : index
    %c432 = arith.constant 432 : index
    %274 = vector.load %arg17[%c0_187, %c432] : memref<1x1152xf32, #tpu.memory_space<vmem>>, vector<1x36xf32>
    %275 = vector.shape_cast %274 : vector<1x36xf32> to vector<36xf32>
    %276 = vector.shape_cast %273 : vector<36xf32> to vector<1x36xf32>
    tpu.vector_store %arg17[%c0_187, %c432], %276 {strides = array<i32>} : memref<1x1152xf32, #tpu.memory_space<vmem>>, vector<1x36xf32>,
    %c13 = arith.constant 13 : index
    %c0_188 = arith.constant 0 : index
    %277 = vector.load %arg16[%c13, %c0_188] : memref<32x36xf32, #tpu.memory_space<vmem>>, vector<1x36xf32>
    %278 = vector.shape_cast %277 : vector<1x36xf32> to vector<36xf32>
    %c0_189 = arith.constant 0 : index
    %c468 = arith.constant 468 : index
    %279 = vector.load %arg17[%c0_189, %c468] : memref<1x1152xf32, #tpu.memory_space<vmem>>, vector<1x36xf32>
    %280 = vector.shape_cast %279 : vector<1x36xf32> to vector<36xf32>
    %281 = vector.shape_cast %278 : vector<36xf32> to vector<1x36xf32>
    tpu.vector_store %arg17[%c0_189, %c468], %281 {strides = array<i32>} : memref<1x1152xf32, #tpu.memory_space<vmem>>, vector<1x36xf32>,
    %c14 = arith.constant 14 : index
    %c0_190 = arith.constant 0 : index
    %282 = vector.load %arg16[%c14, %c0_190] : memref<32x36xf32, #tpu.memory_space<vmem>>, vector<1x36xf32>
    %283 = vector.shape_cast %282 : vector<1x36xf32> to vector<36xf32>
    %c0_191 = arith.constant 0 : index
    %c504 = arith.constant 504 : index
    %284 = vector.load %arg17[%c0_191, %c504] : memref<1x1152xf32, #tpu.memory_space<vmem>>, vector<1x36xf32>
    %285 = vector.shape_cast %284 : vector<1x36xf32> to vector<36xf32>
    %286 = vector.shape_cast %283 : vector<36xf32> to vector<1x36xf32>
    tpu.vector_store %arg17[%c0_191, %c504], %286 {strides = array<i32>} : memref<1x1152xf32, #tpu.memory_space<vmem>>, vector<1x36xf32>,
    %c15 = arith.constant 15 : index
    %c0_192 = arith.constant 0 : index
    %287 = vector.load %arg16[%c15, %c0_192] : memref<32x36xf32, #tpu.memory_space<vmem>>, vector<1x36xf32>
    %288 = vector.shape_cast %287 : vector<1x36xf32> to vector<36xf32>
    %c0_193 = arith.constant 0 : index
    %c540 = arith.constant 540 : index
    %289 = vector.load %arg17[%c0_193, %c540] : memref<1x1152xf32, #tpu.memory_space<vmem>>, vector<1x36xf32>
    %290 = vector.shape_cast %289 : vector<1x36xf32> to vector<36xf32>
    %291 = vector.shape_cast %288 : vector<36xf32> to vector<1x36xf32>
    tpu.vector_store %arg17[%c0_193, %c540], %291 {strides = array<i32>} : memref<1x1152xf32, #tpu.memory_space<vmem>>, vector<1x36xf32>,
    %c16 = arith.constant 16 : index
    %c0_194 = arith.constant 0 : index
    %292 = vector.load %arg16[%c16, %c0_194] : memref<32x36xf32, #tpu.memory_space<vmem>>, vector<1x36xf32>
    %293 = vector.shape_cast %292 : vector<1x36xf32> to vector<36xf32>
    %c0_195 = arith.constant 0 : index
    %c576 = arith.constant 576 : index
    %294 = vector.load %arg17[%c0_195, %c576] : memref<1x1152xf32, #tpu.memory_space<vmem>>, vector<1x36xf32>
    %295 = vector.shape_cast %294 : vector<1x36xf32> to vector<36xf32>
    %296 = vector.shape_cast %293 : vector<36xf32> to vector<1x36xf32>
    tpu.vector_store %arg17[%c0_195, %c576], %296 {strides = array<i32>} : memref<1x1152xf32, #tpu.memory_space<vmem>>, vector<1x36xf32>,
    %c17 = arith.constant 17 : index
    %c0_196 = arith.constant 0 : index
    %297 = vector.load %arg16[%c17, %c0_196] : memref<32x36xf32, #tpu.memory_space<vmem>>, vector<1x36xf32>
    %298 = vector.shape_cast %297 : vector<1x36xf32> to vector<36xf32>
    %c0_197 = arith.constant 0 : index
    %c612 = arith.constant 612 : index
    %299 = vector.load %arg17[%c0_197, %c612] : memref<1x1152xf32, #tpu.memory_space<vmem>>, vector<1x36xf32>
    %300 = vector.shape_cast %299 : vector<1x36xf32> to vector<36xf32>
    %301 = vector.shape_cast %298 : vector<36xf32> to vector<1x36xf32>
    tpu.vector_store %arg17[%c0_197, %c612], %301 {strides = array<i32>} : memref<1x1152xf32, #tpu.memory_space<vmem>>, vector<1x36xf32>,
    %c18 = arith.constant 18 : index
    %c0_198 = arith.constant 0 : index
    %302 = vector.load %arg16[%c18, %c0_198] : memref<32x36xf32, #tpu.memory_space<vmem>>, vector<1x36xf32>
    %303 = vector.shape_cast %302 : vector<1x36xf32> to vector<36xf32>
    %c0_199 = arith.constant 0 : index
    %c648 = arith.constant 648 : index
    %304 = vector.load %arg17[%c0_199, %c648] : memref<1x1152xf32, #tpu.memory_space<vmem>>, vector<1x36xf32>
    %305 = vector.shape_cast %304 : vector<1x36xf32> to vector<36xf32>
    %306 = vector.shape_cast %303 : vector<36xf32> to vector<1x36xf32>
    tpu.vector_store %arg17[%c0_199, %c648], %306 {strides = array<i32>} : memref<1x1152xf32, #tpu.memory_space<vmem>>, vector<1x36xf32>,
    %c19 = arith.constant 19 : index
    %c0_200 = arith.constant 0 : index
    %307 = vector.load %arg16[%c19, %c0_200] : memref<32x36xf32, #tpu.memory_space<vmem>>, vector<1x36xf32>
    %308 = vector.shape_cast %307 : vector<1x36xf32> to vector<36xf32>
    %c0_201 = arith.constant 0 : index
    %c684 = arith.constant 684 : index
    %309 = vector.load %arg17[%c0_201, %c684] : memref<1x1152xf32, #tpu.memory_space<vmem>>, vector<1x36xf32>
    %310 = vector.shape_cast %309 : vector<1x36xf32> to vector<36xf32>
    %311 = vector.shape_cast %308 : vector<36xf32> to vector<1x36xf32>
    tpu.vector_store %arg17[%c0_201, %c684], %311 {strides = array<i32>} : memref<1x1152xf32, #tpu.memory_space<vmem>>, vector<1x36xf32>,
    %c20 = arith.constant 20 : index
    %c0_202 = arith.constant 0 : index
    %312 = vector.load %arg16[%c20, %c0_202] : memref<32x36xf32, #tpu.memory_space<vmem>>, vector<1x36xf32>
    %313 = vector.shape_cast %312 : vector<1x36xf32> to vector<36xf32>
    %c0_203 = arith.constant 0 : index
    %c720 = arith.constant 720 : index
    %314 = vector.load %arg17[%c0_203, %c720] : memref<1x1152xf32, #tpu.memory_space<vmem>>, vector<1x36xf32>
    %315 = vector.shape_cast %314 : vector<1x36xf32> to vector<36xf32>
    %316 = vector.shape_cast %313 : vector<36xf32> to vector<1x36xf32>
    tpu.vector_store %arg17[%c0_203, %c720], %316 {strides = array<i32>} : memref<1x1152xf32, #tpu.memory_space<vmem>>, vector<1x36xf32>,
    %c21 = arith.constant 21 : index
    %c0_204 = arith.constant 0 : index
    %317 = vector.load %arg16[%c21, %c0_204] : memref<32x36xf32, #tpu.memory_space<vmem>>, vector<1x36xf32>
    %318 = vector.shape_cast %317 : vector<1x36xf32> to vector<36xf32>
    %c0_205 = arith.constant 0 : index
    %c756 = arith.constant 756 : index
    %319 = vector.load %arg17[%c0_205, %c756] : memref<1x1152xf32, #tpu.memory_space<vmem>>, vector<1x36xf32>
    %320 = vector.shape_cast %319 : vector<1x36xf32> to vector<36xf32>
    %321 = vector.shape_cast %318 : vector<36xf32> to vector<1x36xf32>
    tpu.vector_store %arg17[%c0_205, %c756], %321 {strides = array<i32>} : memref<1x1152xf32, #tpu.memory_space<vmem>>, vector<1x36xf32>,
    %c22 = arith.constant 22 : index
    %c0_206 = arith.constant 0 : index
    %322 = vector.load %arg16[%c22, %c0_206] : memref<32x36xf32, #tpu.memory_space<vmem>>, vector<1x36xf32>
    %323 = vector.shape_cast %322 : vector<1x36xf32> to vector<36xf32>
    %c0_207 = arith.constant 0 : index
    %c792 = arith.constant 792 : index
    %324 = vector.load %arg17[%c0_207, %c792] : memref<1x1152xf32, #tpu.memory_space<vmem>>, vector<1x36xf32>
    %325 = vector.shape_cast %324 : vector<1x36xf32> to vector<36xf32>
    %326 = vector.shape_cast %323 : vector<36xf32> to vector<1x36xf32>
    tpu.vector_store %arg17[%c0_207, %c792], %326 {strides = array<i32>} : memref<1x1152xf32, #tpu.memory_space<vmem>>, vector<1x36xf32>,
    %c23 = arith.constant 23 : index
    %c0_208 = arith.constant 0 : index
    %327 = vector.load %arg16[%c23, %c0_208] : memref<32x36xf32, #tpu.memory_space<vmem>>, vector<1x36xf32>
    %328 = vector.shape_cast %327 : vector<1x36xf32> to vector<36xf32>
    %c0_209 = arith.constant 0 : index
    %c828 = arith.constant 828 : index
    %329 = vector.load %arg17[%c0_209, %c828] : memref<1x1152xf32, #tpu.memory_space<vmem>>, vector<1x36xf32>
    %330 = vector.shape_cast %329 : vector<1x36xf32> to vector<36xf32>
    %331 = vector.shape_cast %328 : vector<36xf32> to vector<1x36xf32>
    tpu.vector_store %arg17[%c0_209, %c828], %331 {strides = array<i32>} : memref<1x1152xf32, #tpu.memory_space<vmem>>, vector<1x36xf32>,
    %c24 = arith.constant 24 : index
    %c0_210 = arith.constant 0 : index
    %332 = vector.load %arg16[%c24, %c0_210] : memref<32x36xf32, #tpu.memory_space<vmem>>, vector<1x36xf32>
    %333 = vector.shape_cast %332 : vector<1x36xf32> to vector<36xf32>
    %c0_211 = arith.constant 0 : index
    %c864 = arith.constant 864 : index
    %334 = vector.load %arg17[%c0_211, %c864] : memref<1x1152xf32, #tpu.memory_space<vmem>>, vector<1x36xf32>
    %335 = vector.shape_cast %334 : vector<1x36xf32> to vector<36xf32>
    %336 = vector.shape_cast %333 : vector<36xf32> to vector<1x36xf32>
    tpu.vector_store %arg17[%c0_211, %c864], %336 {strides = array<i32>} : memref<1x1152xf32, #tpu.memory_space<vmem>>, vector<1x36xf32>,
    %c25 = arith.constant 25 : index
    %c0_212 = arith.constant 0 : index
    %337 = vector.load %arg16[%c25, %c0_212] : memref<32x36xf32, #tpu.memory_space<vmem>>, vector<1x36xf32>
    %338 = vector.shape_cast %337 : vector<1x36xf32> to vector<36xf32>
    %c0_213 = arith.constant 0 : index
    %c900 = arith.constant 900 : index
    %339 = vector.load %arg17[%c0_213, %c900] : memref<1x1152xf32, #tpu.memory_space<vmem>>, vector<1x36xf32>
    %340 = vector.shape_cast %339 : vector<1x36xf32> to vector<36xf32>
    %341 = vector.shape_cast %338 : vector<36xf32> to vector<1x36xf32>
    tpu.vector_store %arg17[%c0_213, %c900], %341 {strides = array<i32>} : memref<1x1152xf32, #tpu.memory_space<vmem>>, vector<1x36xf32>,
    %c26 = arith.constant 26 : index
    %c0_214 = arith.constant 0 : index
    %342 = vector.load %arg16[%c26, %c0_214] : memref<32x36xf32, #tpu.memory_space<vmem>>, vector<1x36xf32>
    %343 = vector.shape_cast %342 : vector<1x36xf32> to vector<36xf32>
    %c0_215 = arith.constant 0 : index
    %c936 = arith.constant 936 : index
    %344 = vector.load %arg17[%c0_215, %c936] : memref<1x1152xf32, #tpu.memory_space<vmem>>, vector<1x36xf32>
    %345 = vector.shape_cast %344 : vector<1x36xf32> to vector<36xf32>
    %346 = vector.shape_cast %343 : vector<36xf32> to vector<1x36xf32>
    tpu.vector_store %arg17[%c0_215, %c936], %346 {strides = array<i32>} : memref<1x1152xf32, #tpu.memory_space<vmem>>, vector<1x36xf32>,
    %c27 = arith.constant 27 : index
    %c0_216 = arith.constant 0 : index
    %347 = vector.load %arg16[%c27, %c0_216] : memref<32x36xf32, #tpu.memory_space<vmem>>, vector<1x36xf32>
    %348 = vector.shape_cast %347 : vector<1x36xf32> to vector<36xf32>
    %c0_217 = arith.constant 0 : index
    %c972 = arith.constant 972 : index
    %349 = vector.load %arg17[%c0_217, %c972] : memref<1x1152xf32, #tpu.memory_space<vmem>>, vector<1x36xf32>
    %350 = vector.shape_cast %349 : vector<1x36xf32> to vector<36xf32>
    %351 = vector.shape_cast %348 : vector<36xf32> to vector<1x36xf32>
    tpu.vector_store %arg17[%c0_217, %c972], %351 {strides = array<i32>} : memref<1x1152xf32, #tpu.memory_space<vmem>>, vector<1x36xf32>,
    %c28_218 = arith.constant 28 : index
    %c0_219 = arith.constant 0 : index
    %352 = vector.load %arg16[%c28_218, %c0_219] : memref<32x36xf32, #tpu.memory_space<vmem>>, vector<1x36xf32>
    %353 = vector.shape_cast %352 : vector<1x36xf32> to vector<36xf32>
    %c0_220 = arith.constant 0 : index
    %c1008 = arith.constant 1008 : index
    %354 = vector.load %arg17[%c0_220, %c1008] : memref<1x1152xf32, #tpu.memory_space<vmem>>, vector<1x36xf32>
    %355 = vector.shape_cast %354 : vector<1x36xf32> to vector<36xf32>
    %356 = vector.shape_cast %353 : vector<36xf32> to vector<1x36xf32>
    tpu.vector_store %arg17[%c0_220, %c1008], %356 {strides = array<i32>} : memref<1x1152xf32, #tpu.memory_space<vmem>>, vector<1x36xf32>,
    %c29_221 = arith.constant 29 : index
    %c0_222 = arith.constant 0 : index
    %357 = vector.load %arg16[%c29_221, %c0_222] : memref<32x36xf32, #tpu.memory_space<vmem>>, vector<1x36xf32>
    %358 = vector.shape_cast %357 : vector<1x36xf32> to vector<36xf32>
    %c0_223 = arith.constant 0 : index
    %c1044 = arith.constant 1044 : index
    %359 = vector.load %arg17[%c0_223, %c1044] : memref<1x1152xf32, #tpu.memory_space<vmem>>, vector<1x36xf32>
    %360 = vector.shape_cast %359 : vector<1x36xf32> to vector<36xf32>
    %361 = vector.shape_cast %358 : vector<36xf32> to vector<1x36xf32>
    tpu.vector_store %arg17[%c0_223, %c1044], %361 {strides = array<i32>} : memref<1x1152xf32, #tpu.memory_space<vmem>>, vector<1x36xf32>,
    %c30_224 = arith.constant 30 : index
    %c0_225 = arith.constant 0 : index
    %362 = vector.load %arg16[%c30_224, %c0_225] : memref<32x36xf32, #tpu.memory_space<vmem>>, vector<1x36xf32>
    %363 = vector.shape_cast %362 : vector<1x36xf32> to vector<36xf32>
    %c0_226 = arith.constant 0 : index
    %c1080 = arith.constant 1080 : index
    %364 = vector.load %arg17[%c0_226, %c1080] : memref<1x1152xf32, #tpu.memory_space<vmem>>, vector<1x36xf32>
    %365 = vector.shape_cast %364 : vector<1x36xf32> to vector<36xf32>
    %366 = vector.shape_cast %363 : vector<36xf32> to vector<1x36xf32>
    tpu.vector_store %arg17[%c0_226, %c1080], %366 {strides = array<i32>} : memref<1x1152xf32, #tpu.memory_space<vmem>>, vector<1x36xf32>,
    %c31 = arith.constant 31 : index
    %c0_227 = arith.constant 0 : index
    %367 = vector.load %arg16[%c31, %c0_227] : memref<32x36xf32, #tpu.memory_space<vmem>>, vector<1x36xf32>
    %368 = vector.shape_cast %367 : vector<1x36xf32> to vector<36xf32>
    %c0_228 = arith.constant 0 : index
    %c1116 = arith.constant 1116 : index
    %369 = vector.load %arg17[%c0_228, %c1116] : memref<1x1152xf32, #tpu.memory_space<vmem>>, vector<1x36xf32>
    %370 = vector.shape_cast %369 : vector<1x36xf32> to vector<36xf32>
    %371 = vector.shape_cast %368 : vector<36xf32> to vector<1x36xf32>
    tpu.vector_store %arg17[%c0_228, %c1116], %371 {strides = array<i32>} : memref<1x1152xf32, #tpu.memory_space<vmem>>, vector<1x36xf32>,
    %c0_229 = arith.constant 0 : index
    %c0_230 = arith.constant 0 : index
    %372 = vector.load %arg17[%c0_229, %c0_230] : memref<1x1152xf32, #tpu.memory_space<vmem>>, vector<1x1152xf32>
    %373 = arith.truncf %372 : vector<1x1152xf32> to vector<1x1152xbf16>
    %c0_231 = arith.constant 0 : index
    %c0_232 = arith.constant 0 : index
    %374 = vector.load %arg10[%c0_231, %c0_232] : memref<1152x64xbf16, #tpu.memory_space<vmem>>, vector<1152x64xbf16>
    %cst_233 = arith.constant dense<0.000000e+00> : vector<1x64xf32>
    %375 = tpu.matmul %373, %374, %cst_233 {dimension_numbers = #tpu.dot_dimension_numbers<[1], [0], [0], [1], [0, 0, 1, 1], [], []>} : vector<1x1152xbf16>, vector<1152x64xbf16>, vector<1x64xf32> -> vector<1x64xf32>
    %c0_234 = arith.constant 0 : index
    %c0_235 = arith.constant 0 : index
    %376 = vector.load %arg11[%c0_234, %c0_235] : memref<1x64xf32, #tpu.memory_space<vmem>>, vector<1x64xf32>
    %377 = arith.addf %375, %376 : vector<1x64xf32>
    %cst_236 = arith.constant 0.000000e+00 : f32
    %378 = vector.broadcast %cst_236 : f32 to vector<1x64xf32>
    %379 = arith.maximumf %377, %378 : vector<1x64xf32>
    %380 = arith.truncf %379 : vector<1x64xf32> to vector<1x64xbf16>
    %c0_237 = arith.constant 0 : index
    %c0_238 = arith.constant 0 : index
    %381 = vector.load %arg12[%c0_237, %c0_238] : memref<64x10xbf16, #tpu.memory_space<vmem>>, vector<64x10xbf16>
    %cst_239 = arith.constant dense<0.000000e+00> : vector<1x10xf32>
    %382 = tpu.matmul %380, %381, %cst_239 {dimension_numbers = #tpu.dot_dimension_numbers<[1], [0], [0], [1], [0, 0, 1, 1], [], []>} : vector<1x64xbf16>, vector<64x10xbf16>, vector<1x10xf32> -> vector<1x10xf32>
    %c0_240 = arith.constant 0 : index
    %c0_241 = arith.constant 0 : index
    %383 = vector.load %arg13[%c0_240, %c0_241] : memref<1x10xf32, #tpu.memory_space<vmem>>, vector<1x10xf32>
    %384 = arith.addf %382, %383 : vector<1x10xf32>
    %cst_242 = arith.constant dense<0xFF800000> : vector<1xf32>
    %385 = vector.multi_reduction <maximumf>, %384, %cst_242 [1] : vector<1x10xf32> to vector<1xf32>
    %386 = vector.shape_cast %385 : vector<1xf32> to vector<1x1xf32>
    %387 = vector.broadcast %386 : vector<1x1xf32> to vector<1x10xf32>
    %388 = arith.subf %384, %387 : vector<1x10xf32>
    %389 = math.exp %388 : vector<1x10xf32>
    %cst_243 = arith.constant dense<0.000000e+00> : vector<1xf32>
    %390 = vector.multi_reduction <add>, %389, %cst_243 [1] : vector<1x10xf32> to vector<1xf32>
    %391 = vector.shape_cast %390 : vector<1xf32> to vector<1x1xf32>
    %392 = math.log %391 : vector<1x1xf32>
    %393 = vector.broadcast %392 : vector<1x1xf32> to vector<1x10xf32>
    %394 = arith.subf %388, %393 : vector<1x10xf32>
    %c0_244 = arith.constant 0 : index
    %c0_245 = arith.constant 0 : index
    %c0_246 = arith.constant 0 : index
    %395 = vector.load %arg14[%c0_244, %c0_245, %c0_246] : memref<1x1x10xf32, #tpu.memory_space<vmem>>, vector<1x1x10xf32>
    %396 = vector.shape_cast %395 : vector<1x1x10xf32> to vector<1x10xf32>
    %397 = vector.shape_cast %394 : vector<1x10xf32> to vector<1x1x10xf32>
    tpu.vector_store %arg14[%c0_244, %c0_245, %c0_246], %397 {strides = array<i32>} : memref<1x1x10xf32, #tpu.memory_space<vmem>>, vector<1x1x10xf32>,
    return
  }
  func.func @transform_0(%arg0: i32) -> (i32, i32, i32) {
    %c0_i32 = arith.constant 0 : i32
    %c0_i32_0 = arith.constant 0 : i32
    %c0_i32_1 = arith.constant 0 : i32
    return %arg0, %c0_i32, %c0_i32_0 : i32, i32, i32
  }
  func.func @transform_1(%arg0: i32) -> (i32, i32, i32) {
    %c0_i32 = arith.constant 0 : i32
    %c0_i32_0 = arith.constant 0 : i32
    %c0_i32_1 = arith.constant 0 : i32
    %c0_i32_2 = arith.constant 0 : i32
    return %c0_i32, %c0_i32_0, %c0_i32_1 : i32, i32, i32
  }
  func.func @transform_2(%arg0: i32) -> (i32, i32) {
    %c0_i32 = arith.constant 0 : i32
    %c0_i32_0 = arith.constant 0 : i32
    %c0_i32_1 = arith.constant 0 : i32
    return %c0_i32, %c0_i32_0 : i32, i32
  }
  func.func @transform_3(%arg0: i32) -> (i32, i32, i32) {
    %c0_i32 = arith.constant 0 : i32
    %c0_i32_0 = arith.constant 0 : i32
    %c0_i32_1 = arith.constant 0 : i32
    %c0_i32_2 = arith.constant 0 : i32
    return %c0_i32, %c0_i32_0, %c0_i32_1 : i32, i32, i32
  }
  func.func @transform_4(%arg0: i32) -> (i32, i32) {
    %c0_i32 = arith.constant 0 : i32
    %c0_i32_0 = arith.constant 0 : i32
    %c0_i32_1 = arith.constant 0 : i32
    return %c0_i32, %c0_i32_0 : i32, i32
  }
  func.func @transform_5(%arg0: i32) -> (i32, i32, i32) {
    %c0_i32 = arith.constant 0 : i32
    %c0_i32_0 = arith.constant 0 : i32
    %c0_i32_1 = arith.constant 0 : i32
    %c0_i32_2 = arith.constant 0 : i32
    return %c0_i32, %c0_i32_0, %c0_i32_1 : i32, i32, i32
  }
  func.func @transform_6(%arg0: i32) -> (i32, i32) {
    %c0_i32 = arith.constant 0 : i32
    %c0_i32_0 = arith.constant 0 : i32
    %c0_i32_1 = arith.constant 0 : i32
    return %c0_i32, %c0_i32_0 : i32, i32
  }
  func.func @transform_7(%arg0: i32) -> (i32, i32) {
    %c0_i32 = arith.constant 0 : i32
    %c0_i32_0 = arith.constant 0 : i32
    %c0_i32_1 = arith.constant 0 : i32
    return %c0_i32, %c0_i32_0 : i32, i32
  }
  func.func @transform_8(%arg0: i32) -> (i32, i32) {
    %c0_i32 = arith.constant 0 : i32
    %c0_i32_0 = arith.constant 0 : i32
    %c0_i32_1 = arith.constant 0 : i32
    return %c0_i32, %c0_i32_0 : i32, i32
  }
  func.func @transform_9(%arg0: i32) -> (i32, i32) {
    %c0_i32 = arith.constant 0 : i32
    %c0_i32_0 = arith.constant 0 : i32
    %c0_i32_1 = arith.constant 0 : i32
    return %c0_i32, %c0_i32_0 : i32, i32
  }
  func.func @transform_10(%arg0: i32) -> (i32, i32) {
    %c0_i32 = arith.constant 0 : i32
    %c0_i32_0 = arith.constant 0 : i32
    %c0_i32_1 = arith.constant 0 : i32
    return %c0_i32, %c0_i32_0 : i32, i32
  }
  func.func @transform_11(%arg0: i32) -> (i32, i32) {
    %c0_i32 = arith.constant 0 : i32
    %c0_i32_0 = arith.constant 0 : i32
    %c0_i32_1 = arith.constant 0 : i32
    return %c0_i32, %c0_i32_0 : i32, i32
  }
  func.func @transform_12(%arg0: i32) -> (i32, i32) {
    %c0_i32 = arith.constant 0 : i32
    %c0_i32_0 = arith.constant 0 : i32
    %c0_i32_1 = arith.constant 0 : i32
    return %c0_i32, %c0_i32_0 : i32, i32
  }
  func.func @transform_13(%arg0: i32) -> (i32, i32, i32) {
    %c0_i32 = arith.constant 0 : i32
    %c0_i32_0 = arith.constant 0 : i32
    %c0_i32_1 = arith.constant 0 : i32
    return %arg0, %c0_i32, %c0_i32_0 : i32, i32, i32
  }
}

</mosaic_0001>

<llo_original>
// kernel: quanv_nn_forward.1
$region0: #{quanv_nn_forward.1}
  #allocation0 [shape = 'u32[]', space=smem, size = 0x4, offset = 0x4, fixed_abs, tag = 'smem constant byte address 0x4 - core index']
  #allocation1 [shape = 'u32[72,128]{1,0:T(1,128)}', space=vmem, size = 0x9000, scoped, tag = 'internal scratch']
  #allocation2 [shape = 'f32[10,896]{1,0:T(8,128)}', space=vmem, size = 0xe000, scoped, tag = 'scratch operand']
  #allocation3 [shape = 'f32[32,36]{1,0:T(8,128)}', space=vmem, size = 0x4000, scoped, tag = 'scratch operand']
  #allocation4 [shape = 'f32[1,1152]{1,0:T(1,128)}', space=vmem, size = 0x1200, scoped, tag = 'scratch operand']
  %s0 = inlined_call_operand.vmem [shape: f32[2,1,896], index: 0, kind: input, shape index: {}]
  %s1 = inlined_call_operand.vmem [shape: f32[9,10,1], index: 1, kind: input, shape index: {}]
  %s2 = inlined_call_operand.vmem [shape: f32[10,1], index: 2, kind: input, shape index: {}]
  %s3 = inlined_call_operand.vmem [shape: bf16[9,16,10], index: 3, kind: input, shape index: {}]
  %s4 = inlined_call_operand.vmem [shape: f32[16,1], index: 4, kind: input, shape index: {}]
  %s5 = inlined_call_operand.vmem [shape: bf16[9,32,16], index: 5, kind: input, shape index: {}]
  %s6 = inlined_call_operand.vmem [shape: f32[32,1], index: 6, kind: input, shape index: {}]
  %s7 = inlined_call_operand.vmem [shape: bf16[783,256], index: 7, kind: input, shape index: {}]
  %s8 = inlined_call_operand.vmem [shape: bf16[151,36], index: 8, kind: input, shape index: {}]
  %s9 = inlined_call_operand.vmem [shape: bf16[1152,64], index: 9, kind: input, shape index: {}]
  %s10 = inlined_call_operand.vmem [shape: f32[1,64], index: 10, kind: input, shape index: {}]
  %s11 = inlined_call_operand.vmem [shape: bf16[64,10], index: 11, kind: input, shape index: {}]
  %s12 = inlined_call_operand.vmem [shape: f32[1,10], index: 12, kind: input, shape index: {}]
  %s13 = inlined_call_operand.hbm [shape: f32[2,1,10], index: 13, kind: output, shape index: {}]
  %s14 = sld [smem:[#allocation0]]
  $region85: #{quanv_nn_forward.1} parent=0
    _
  %s16 = ssub.s32 1, %s14
  %s17 = scalar_select 0, %s16, %s14
  $region1: #{quanv_nn_forward.1} parent=0
    #allocation5 [shape = 'u8[1024]{0}', space=vmem, size = 0x400, scoped, tag = 'output window, operand 0']
    #allocation6 [shape = 's32[2]{0}', space=sflag, size = 0x8, scoped, tag = 'scoped memory for quanv_nn_forward.1']
    %18 = vsyncpa [#allocation6], 0
    %s19 = scalar_lea.sflag [#allocation6], 1
    %20 = vsyncpa %s19, 0
    loop: start=0, step=1, limit=4
    $region2: #{quanv_nn_forward.1} parent=1 // loop_pre_header
      _
    $region3: #{quanv_nn_forward.1} parent=1 // loop_header
      %s22 = sphi 0, %s26
      %p23 = scmp.ge.s32.totalorder %s22, 4
      %s32 = sphi 0, %s34
      %s35 = sphi 0, %s32
      %s36 = sphi 0, %s35
      %s52 = sphi 0, %s36
      %s56 = sphi 0, %s56
      %s58 = sphi 0, %s56
      %s59 = sphi 0, %s58
      %s73 = sphi 0, %s59
      %s77 = sphi 0, %s77
      %s79 = sphi 0, %s77
      %s80 = sphi 0, %s79
      %s94 = sphi 0, %s80
      %s98 = sphi 0, %s98
      %s100 = sphi 0, %s98
      %s101 = sphi 0, %s100
      %s115 = sphi 0, %s101
      %s119 = sphi 0, %s119
      %s121 = sphi 0, %s119
      %s122 = sphi 0, %s121
      %s136 = sphi 0, %s122
      %s140 = sphi 0, %s140
      %s142 = sphi 0, %s140
      %s143 = sphi 0, %s142
      %s157 = sphi 0, %s143
      %s161 = sphi 0, %s161
      %s163 = sphi 0, %s161
      %s164 = sphi 0, %s163
      %s178 = sphi 0, %s164
      %s182 = sphi 0, %s182
      %s184 = sphi 0, %s182
      %s185 = sphi 0, %s184
      %s199 = sphi 0, %s185
      %s203 = sphi 0, %s203
      %s205 = sphi 0, %s203
      %s206 = sphi 0, %s205
      %s220 = sphi 0, %s206
      %s224 = sphi 0, %s224
      %s226 = sphi 0, %s224
      %s227 = sphi 0, %s226
      %s241 = sphi 0, %s227
      %s245 = sphi 0, %s245
      %s247 = sphi 0, %s245
      %s248 = sphi 0, %s247
      %s262 = sphi 0, %s248
      %s266 = sphi 0, %s266
      %s268 = sphi 0, %s266
      %s269 = sphi 0, %s268
      %s283 = sphi 0, %s269
      %s287 = sphi 0, %s287
      %s289 = sphi 0, %s287
      %s290 = sphi 0, %s289
      %s304 = sphi 0, %s290
      %s310 = sphi 0, %s312
      %s313 = sphi 0, %s310
      %s314 = sphi 0, %s313
      %s330 = sphi 0, %s314
    $region4: #{quanv_nn_forward.1} parent=1 // loop_header_branch
      %25 = sbr.rel (%p23) target = $region8
    $region5: #{quanv_nn_forward.1} parent=1 // loop_body
      %s27 = ssub.s32 %s22, 1
      %s28 = ssub.s32 %s22, 2
      %s29 = sadd.s32 %s22, 1
      %s30 = ssub.s32 %s22, %s29
      %p31 = scmp.eq.s32.totalorder %s30, 0
      %s33 = sadd.s32 %s32, 1
      %s34 = scalar_select %p31, %s32, %s33
      %p37 = pneg %p31
      %p38 = scmp.eq.s32.totalorder %s22, 1
      %p39 = por %p37, %p38
      %p40 = scmp.ne.s32.totalorder %s32, %s35
      %p41 = scmp.eq.s32.totalorder %s22, 0
      %p42 = por %p40, %p41
      %p43 = scmp.ne.s32.totalorder %s32, %s35
      %p44 = scmp.eq.s32.totalorder %s27, 1
      %p45 = por %p43, %p44
      %p46 = scmp.ne.s32.totalorder %s35, %s36
      %p47 = scmp.eq.s32.totalorder %s27, 0
      %p48 = por %p46, %p47
      %p49 = scmp.ne.s32.totalorder %s35, %s36
      %p50 = scmp.eq.s32.totalorder %s28, 1
      %p51 = por %p49, %p50
      %p53 = scmp.ne.s32.totalorder %s36, %s52
      %p54 = scmp.eq.s32.totalorder %s28, 0
      %p55 = por %p53, %p54
      %s57 = sadd.s32 %s56, 1
      %p60 = scmp.eq.s32.totalorder %s22, 1
      %p61 = scmp.ne.s32.totalorder %s56, %s58
      %p62 = scmp.eq.s32.totalorder %s22, 0
      %p63 = por %p61, %p62
      %p64 = scmp.ne.s32.totalorder %s56, %s58
      %p65 = scmp.eq.s32.totalorder %s27, 1
      %p66 = por %p64, %p65
      %p67 = scmp.ne.s32.totalorder %s58, %s59
      %p68 = scmp.eq.s32.totalorder %s27, 0
      %p69 = por %p67, %p68
      %p70 = scmp.ne.s32.totalorder %s58, %s59
      %p71 = scmp.eq.s32.totalorder %s28, 1
      %p72 = por %p70, %p71
      %p74 = scmp.ne.s32.totalorder %s59, %s73
      %p75 = scmp.eq.s32.totalorder %s28, 0
      %p76 = por %p74, %p75
      %s78 = sadd.s32 %s77, 1
      %p81 = scmp.eq.s32.totalorder %s22, 1
      %p82 = scmp.ne.s32.totalorder %s77, %s79
      %p83 = scmp.eq.s32.totalorder %s22, 0
      %p84 = por %p82, %p83
      %p85 = scmp.ne.s32.totalorder %s77, %s79
      %p86 = scmp.eq.s32.totalorder %s27, 1
      %p87 = por %p85, %p86
      %p88 = scmp.ne.s32.totalorder %s79, %s80
      %p89 = scmp.eq.s32.totalorder %s27, 0
      %p90 = por %p88, %p89
      %p91 = scmp.ne.s32.totalorder %s79, %s80
      %p92 = scmp.eq.s32.totalorder %s28, 1
      %p93 = por %p91, %p92
      %p95 = scmp.ne.s32.totalorder %s80, %s94
      %p96 = scmp.eq.s32.totalorder %s28, 0
      %p97 = por %p95, %p96
      %s99 = sadd.s32 %s98, 1
      %p102 = scmp.eq.s32.totalorder %s22, 1
      %p103 = scmp.ne.s32.totalorder %s98, %s100
      %p104 = scmp.eq.s32.totalorder %s22, 0
      %p105 = por %p103, %p104
      %p106 = scmp.ne.s32.totalorder %s98, %s100
      %p107 = scmp.eq.s32.totalorder %s27, 1
      %p108 = por %p106, %p107
      %p109 = scmp.ne.s32.totalorder %s100, %s101
      %p110 = scmp.eq.s32.totalorder %s27, 0
      %p111 = por %p109, %p110
      %p112 = scmp.ne.s32.totalorder %s100, %s101
      %p113 = scmp.eq.s32.totalorder %s28, 1
      %p114 = por %p112, %p113
      %p116 = scmp.ne.s32.totalorder %s101, %s115
      %p117 = scmp.eq.s32.totalorder %s28, 0
      %p118 = por %p116, %p117
      %s120 = sadd.s32 %s119, 1
      %p123 = scmp.eq.s32.totalorder %s22, 1
      %p124 = scmp.ne.s32.totalorder %s119, %s121
      %p125 = scmp.eq.s32.totalorder %s22, 0
      %p126 = por %p124, %p125
      %p127 = scmp.ne.s32.totalorder %s119, %s121
      %p128 = scmp.eq.s32.totalorder %s27, 1
      %p129 = por %p127, %p128
      %p130 = scmp.ne.s32.totalorder %s121, %s122
      %p131 = scmp.eq.s32.totalorder %s27, 0
      %p132 = por %p130, %p131
      %p133 = scmp.ne.s32.totalorder %s121, %s122
      %p134 = scmp.eq.s32.totalorder %s28, 1
      %p135 = por %p133, %p134
      %p137 = scmp.ne.s32.totalorder %s122, %s136
      %p138 = scmp.eq.s32.totalorder %s28, 0
      %p139 = por %p137, %p138
      %s141 = sadd.s32 %s140, 1
      %p144 = scmp.eq.s32.totalorder %s22, 1
      %p145 = scmp.ne.s32.totalorder %s140, %s142
      %p146 = scmp.eq.s32.totalorder %s22, 0
      %p147 = por %p145, %p146
      %p148 = scmp.ne.s32.totalorder %s140, %s142
      %p149 = scmp.eq.s32.totalorder %s27, 1
      %p150 = por %p148, %p149
      %p151 = scmp.ne.s32.totalorder %s142, %s143
      %p152 = scmp.eq.s32.totalorder %s27, 0
      %p153 = por %p151, %p152
      %p154 = scmp.ne.s32.totalorder %s142, %s143
      %p155 = scmp.eq.s32.totalorder %s28, 1
      %p156 = por %p154, %p155
      %p158 = scmp.ne.s32.totalorder %s143, %s157
      %p159 = scmp.eq.s32.totalorder %s28, 0
      %p160 = por %p158, %p159
      %s162 = sadd.s32 %s161, 1
      %p165 = scmp.eq.s32.totalorder %s22, 1
      %p166 = scmp.ne.s32.totalorder %s161, %s163
      %p167 = scmp.eq.s32.totalorder %s22, 0
      %p168 = por %p166, %p167
      %p169 = scmp.ne.s32.totalorder %s161, %s163
      %p170 = scmp.eq.s32.totalorder %s27, 1
      %p171 = por %p169, %p170
      %p172 = scmp.ne.s32.totalorder %s163, %s164
      %p173 = scmp.eq.s32.totalorder %s27, 0
      %p174 = por %p172, %p173
      %p175 = scmp.ne.s32.totalorder %s163, %s164
      %p176 = scmp.eq.s32.totalorder %s28, 1
      %p177 = por %p175, %p176
      %p179 = scmp.ne.s32.totalorder %s164, %s178
      %p180 = scmp.eq.s32.totalorder %s28, 0
      %p181 = por %p179, %p180
      %s183 = sadd.s32 %s182, 1
      %p186 = scmp.eq.s32.totalorder %s22, 1
      %p187 = scmp.ne.s32.totalorder %s182, %s184
      %p188 = scmp.eq.s32.totalorder %s22, 0
      %p189 = por %p187, %p188
      %p190 = scmp.ne.s32.totalorder %s182, %s184
      %p191 = scmp.eq.s32.totalorder %s27, 1
      %p192 = por %p190, %p191
      %p193 = scmp.ne.s32.totalorder %s184, %s185
      %p194 = scmp.eq.s32.totalorder %s27, 0
      %p195 = por %p193, %p194
      %p196 = scmp.ne.s32.totalorder %s184, %s185
      %p197 = scmp.eq.s32.totalorder %s28, 1
      %p198 = por %p196, %p197
      %p200 = scmp.ne.s32.totalorder %s185, %s199
      %p201 = scmp.eq.s32.totalorder %s28, 0
      %p202 = por %p200, %p201
      %s204 = sadd.s32 %s203, 1
      %p207 = scmp.eq.s32.totalorder %s22, 1
      %p208 = scmp.ne.s32.totalorder %s203, %s205
      %p209 = scmp.eq.s32.totalorder %s22, 0
      %p210 = por %p208, %p209
      %p211 = scmp.ne.s32.totalorder %s203, %s205
      %p212 = scmp.eq.s32.totalorder %s27, 1
      %p213 = por %p211, %p212
      %p214 = scmp.ne.s32.totalorder %s205, %s206
      %p215 = scmp.eq.s32.totalorder %s27, 0
      %p216 = por %p214, %p215
      %p217 = scmp.ne.s32.totalorder %s205, %s206
      %p218 = scmp.eq.s32.totalorder %s28, 1
      %p219 = por %p217, %p218
      %p221 = scmp.ne.s32.totalorder %s206, %s220
      %p222 = scmp.eq.s32.totalorder %s28, 0
      %p223 = por %p221, %p222
      %s225 = sadd.s32 %s224, 1
      %p228 = scmp.eq.s32.totalorder %s22, 1
      %p229 = scmp.ne.s32.totalorder %s224, %s226
      %p230 = scmp.eq.s32.totalorder %s22, 0
      %p231 = por %p229, %p230
      %p232 = scmp.ne.s32.totalorder %s224, %s226
      %p233 = scmp.eq.s32.totalorder %s27, 1
      %p234 = por %p232, %p233
      %p235 = scmp.ne.s32.totalorder %s226, %s227
      %p236 = scmp.eq.s32.totalorder %s27, 0
      %p237 = por %p235, %p236
      %p238 = scmp.ne.s32.totalorder %s226, %s227
      %p239 = scmp.eq.s32.totalorder %s28, 1
      %p240 = por %p238, %p239
      %p242 = scmp.ne.s32.totalorder %s227, %s241
      %p243 = scmp.eq.s32.totalorder %s28, 0
      %p244 = por %p242, %p243
      %s246 = sadd.s32 %s245, 1
      %p249 = scmp.eq.s32.totalorder %s22, 1
      %p250 = scmp.ne.s32.totalorder %s245, %s247
      %p251 = scmp.eq.s32.totalorder %s22, 0
      %p252 = por %p250, %p251
      %p253 = scmp.ne.s32.totalorder %s245, %s247
      %p254 = scmp.eq.s32.totalorder %s27, 1
      %p255 = por %p253, %p254
      %p256 = scmp.ne.s32.totalorder %s247, %s248
      %p257 = scmp.eq.s32.totalorder %s27, 0
      %p258 = por %p256, %p257
      %p259 = scmp.ne.s32.totalorder %s247, %s248
      %p260 = scmp.eq.s32.totalorder %s28, 1
      %p261 = por %p259, %p260
      %p263 = scmp.ne.s32.totalorder %s248, %s262
      %p264 = scmp.eq.s32.totalorder %s28, 0
      %p265 = por %p263, %p264
      %s267 = sadd.s32 %s266, 1
      %p270 = scmp.eq.s32.totalorder %s22, 1
      %p271 = scmp.ne.s32.totalorder %s266, %s268
      %p272 = scmp.eq.s32.totalorder %s22, 0
      %p273 = por %p271, %p272
      %p274 = scmp.ne.s32.totalorder %s266, %s268
      %p275 = scmp.eq.s32.totalorder %s27, 1
      %p276 = por %p274, %p275
      %p277 = scmp.ne.s32.totalorder %s268, %s269
      %p278 = scmp.eq.s32.totalorder %s27, 0
      %p279 = por %p277, %p278
      %p280 = scmp.ne.s32.totalorder %s268, %s269
      %p281 = scmp.eq.s32.totalorder %s28, 1
      %p282 = por %p280, %p281
      %p284 = scmp.ne.s32.totalorder %s269, %s283
      %p285 = scmp.eq.s32.totalorder %s28, 0
      %p286 = por %p284, %p285
      %s288 = sadd.s32 %s287, 1
      %p291 = scmp.eq.s32.totalorder %s22, 1
      %p292 = scmp.ne.s32.totalorder %s287, %s289
      %p293 = scmp.eq.s32.totalorder %s22, 0
      %p294 = por %p292, %p293
      %p295 = scmp.ne.s32.totalorder %s287, %s289
      %p296 = scmp.eq.s32.totalorder %s27, 1
      %p297 = por %p295, %p296
      %p298 = scmp.ne.s32.totalorder %s289, %s290
      %p299 = scmp.eq.s32.totalorder %s27, 0
      %p300 = por %p298, %p299
      %p301 = scmp.ne.s32.totalorder %s289, %s290
      %p302 = scmp.eq.s32.totalorder %s28, 1
      %p303 = por %p301, %p302
      %p305 = scmp.ne.s32.totalorder %s290, %s304
      %p306 = scmp.eq.s32.totalorder %s28, 0
      %p307 = por %p305, %p306
      %s308 = ssub.s32 %s22, %s29
      %p309 = scmp.eq.s32.totalorder %s308, 0
      %s311 = sadd.s32 %s310, 1
      %s312 = scalar_select %p309, %s310, %s311
      %p315 = pneg %p309
      %p316 = scmp.eq.s32.totalorder %s22, 1
      %p317 = por %p315, %p316
      %p318 = scmp.ne.s32.totalorder %s310, %s313
      %p319 = scmp.eq.s32.totalorder %s22, 0
      %p320 = por %p318, %p319
      %p321 = scmp.ne.s32.totalorder %s310, %s313
      %p322 = scmp.eq.s32.totalorder %s27, 1
      %p323 = por %p321, %p322
      %p324 = scmp.ne.s32.totalorder %s313, %s314
      %p325 = scmp.eq.s32.totalorder %s27, 0
      %p326 = por %p324, %p325
      %p327 = scmp.ne.s32.totalorder %s313, %s314
      %p328 = scmp.eq.s32.totalorder %s28, 1
      %p329 = por %p327, %p328
      %p331 = scmp.ne.s32.totalorder %s314, %s330
      %p332 = scmp.eq.s32.totalorder %s28, 0
      %p333 = por %p331, %p332
      %p334 = scmp.le.s32.totalorder 1, %s22
      %p335 = scmp.lt.s32.totalorder %s22, 3
      %p336 = pnand %p334, %p335
      %p337 = pneg %p336
      // Predicated region
      $region9: #{quanv_nn_forward.1} parent=5 // pred_check
        _
      $region10: #{quanv_nn_forward.1} parent=5 // pred_check_branch
        %339 = sbr.rel (%p336) target = $region12
      $region11: #{quanv_nn_forward.1} parent=5 // pred_region
        %s340 = ssub.s32 %s22, 1
        // Predicated region
        $region13: #{quanv_nn_forward.1} parent=11 // pred_check
          %p341 = pneg %p69
        $region14: #{quanv_nn_forward.1} parent=11 // pred_check_branch
          %343 = sbr.rel (%p341) target = $region16
        $region15: #{quanv_nn_forward.1} parent=11 // pred_region
          _
        $region16: #{quanv_nn_forward.1} parent=11 // pred_fallthru
          _
        // Predicated region
        $region17: #{quanv_nn_forward.1} parent=11 // pred_check
          %p344 = pneg %p90
        $region18: #{quanv_nn_forward.1} parent=11 // pred_check_branch
          %346 = sbr.rel (%p344) target = $region20
        $region19: #{quanv_nn_forward.1} parent=11 // pred_region
          _
        $region20: #{quanv_nn_forward.1} parent=11 // pred_fallthru
          _
        // Predicated region
        $region21: #{quanv_nn_forward.1} parent=11 // pred_check
          %p347 = pneg %p111
        $region22: #{quanv_nn_forward.1} parent=11 // pred_check_branch
          %349 = sbr.rel (%p347) target = $region24
        $region23: #{quanv_nn_forward.1} parent=11 // pred_region
          _
        $region24: #{quanv_nn_forward.1} parent=11 // pred_fallthru
          _
        // Predicated region
        $region25: #{quanv_nn_forward.1} parent=11 // pred_check
          %p350 = pneg %p132
        $region26: #{quanv_nn_forward.1} parent=11 // pred_check_branch
          %352 = sbr.rel (%p350) target = $region28
        $region27: #{quanv_nn_forward.1} parent=11 // pred_region
          _
        $region28: #{quanv_nn_forward.1} parent=11 // pred_fallthru
          _
        // Predicated region
        $region29: #{quanv_nn_forward.1} parent=11 // pred_check
          %p353 = pneg %p153
        $region30: #{quanv_nn_forward.1} parent=11 // pred_check_branch
          %355 = sbr.rel (%p353) target = $region32
        $region31: #{quanv_nn_forward.1} parent=11 // pred_region
          _
        $region32: #{quanv_nn_forward.1} parent=11 // pred_fallthru
          _
        // Predicated region
        $region33: #{quanv_nn_forward.1} parent=11 // pred_check
          %p356 = pneg %p174
        $region34: #{quanv_nn_forward.1} parent=11 // pred_check_branch
          %358 = sbr.rel (%p356) target = $region36
        $region35: #{quanv_nn_forward.1} parent=11 // pred_region
          _
        $region36: #{quanv_nn_forward.1} parent=11 // pred_fallthru
          _
        // Predicated region
        $region37: #{quanv_nn_forward.1} parent=11 // pred_check
          %p359 = pneg %p195
        $region38: #{quanv_nn_forward.1} parent=11 // pred_check_branch
          %361 = sbr.rel (%p359) target = $region40
        $region39: #{quanv_nn_forward.1} parent=11 // pred_region
          _
        $region40: #{quanv_nn_forward.1} parent=11 // pred_fallthru
          _
        // Predicated region
        $region41: #{quanv_nn_forward.1} parent=11 // pred_check
          %p362 = pneg %p216
        $region42: #{quanv_nn_forward.1} parent=11 // pred_check_branch
          %364 = sbr.rel (%p362) target = $region44
        $region43: #{quanv_nn_forward.1} parent=11 // pred_region
          _
        $region44: #{quanv_nn_forward.1} parent=11 // pred_fallthru
          _
        // Predicated region
        $region45: #{quanv_nn_forward.1} parent=11 // pred_check
          %p365 = pneg %p237
        $region46: #{quanv_nn_forward.1} parent=11 // pred_check_branch
          %367 = sbr.rel (%p365) target = $region48
        $region47: #{quanv_nn_forward.1} parent=11 // pred_region
          _
        $region48: #{quanv_nn_forward.1} parent=11 // pred_fallthru
          _
        // Predicated region
        $region49: #{quanv_nn_forward.1} parent=11 // pred_check
          %p368 = pneg %p258
        $region50: #{quanv_nn_forward.1} parent=11 // pred_check_branch
          %370 = sbr.rel (%p368) target = $region52
        $region51: #{quanv_nn_forward.1} parent=11 // pred_region
          _
        $region52: #{quanv_nn_forward.1} parent=11 // pred_fallthru
          _
        // Predicated region
        $region53: #{quanv_nn_forward.1} parent=11 // pred_check
          %p371 = pneg %p279
        $region54: #{quanv_nn_forward.1} parent=11 // pred_check_branch
          %373 = sbr.rel (%p371) target = $region56
        $region55: #{quanv_nn_forward.1} parent=11 // pred_region
          _
        $region56: #{quanv_nn_forward.1} parent=11 // pred_fallthru
          _
        // Predicated region
        $region57: #{quanv_nn_forward.1} parent=11 // pred_check
          %p374 = pneg %p300
        $region58: #{quanv_nn_forward.1} parent=11 // pred_check_branch
          %376 = sbr.rel (%p374) target = $region60
        $region59: #{quanv_nn_forward.1} parent=11 // pred_region
          _
        $region60: #{quanv_nn_forward.1} parent=11 // pred_fallthru
          _
      $region12: #{quanv_nn_forward.1} parent=5 // pred_fallthru
        _
      %p377 = scmp.lt.s32.totalorder %s22, 2
      // Predicated region
      $region61: #{quanv_nn_forward.1} parent=5 // pred_check
        %p378 = pneg %p377
      $region62: #{quanv_nn_forward.1} parent=5 // pred_check_branch
        %380 = sbr.rel (%p378) target = $region64
      $region63: #{quanv_nn_forward.1} parent=5 // pred_region
        // Predicated region
        $region65: #{quanv_nn_forward.1} parent=63 // pred_check
          %p381 = pneg %p42
        $region66: #{quanv_nn_forward.1} parent=63 // pred_check_branch
          %383 = sbr.rel (%p381) target = $region68
        $region67: #{quanv_nn_forward.1} parent=63 // pred_region
          %p384 = scmp.lt.s32.totalorder %s22, 1
          %s385 = scalar_select %p384, %s22, 1
          %s386 = smul.addr %s385, 7
          %s387 = scalar_lea.vmem %s0, %s386
        $region68: #{quanv_nn_forward.1} parent=63 // pred_fallthru
          _
      $region64: #{quanv_nn_forward.1} parent=5 // pred_fallthru
        _
      %p388 = scmp.le.s32.totalorder 1, %s22
      %p389 = scmp.lt.s32.totalorder %s22, 3
      %p390 = pnand %p388, %p389
      %p391 = pneg %p390
      // Predicated region
      $region69: #{quanv_nn_forward.1} parent=5 // pred_check
        _
      $region70: #{quanv_nn_forward.1} parent=5 // pred_check_branch
        %393 = sbr.rel (%p390) target = $region72
      $region71: #{quanv_nn_forward.1} parent=5 // pred_region
        %s394 = ssub.s32 %s22, 1
        %p395 = scmp.lt.s32.totalorder %s27, 1
        %s396 = scalar_select %p395, %s27, 1
        %s397 = smul.addr %s396, 7
        %s398 = scalar_lea.vmem %s0, %s397
        %p399 = pneg %p48
        %p400 = pneg %p45
        %p401 = pneg %p69
        %p402 = pneg %p66
        %p403 = pneg %p90
        %p404 = pneg %p87
        %p405 = pneg %p111
        %p406 = pneg %p108
        %p407 = pneg %p132
        %p408 = pneg %p129
        %p409 = pneg %p153
        %p410 = pneg %p150
        %p411 = pneg %p174
        %p412 = pneg %p171
        %p413 = pneg %p195
        %p414 = pneg %p192
        %p415 = pneg %p216
        %p416 = pneg %p213
        %p417 = pneg %p237
        %p418 = pneg %p234
        %p419 = pneg %p258
        %p420 = pneg %p255
        %p421 = pneg %p279
        %p422 = pneg %p276
        %p423 = pneg %p300
        %p424 = pneg %p297
        %p425 = pneg %p326
        %p426 = pneg %p323
        %s427 = sand.u32 %s313, 1
        %s428 = scalar_lea.sflag [#allocation6], %s427
        %s429 = sand.u32 %s313, 1
        %s430 = scalar_lea.vmem [#allocation5], %s429
        %p431 = scmp.lt.s32.totalorder %s27, 1
        %s432 = scalar_select %p431, %s27, 1
        %s433 = smul.addr %s432, 7
        %s434 = scalar_lea.vmem %s0, %s433
        %v436 = vld [vmem:[%s1] sm:$0xff]
        %v437 = vld [vmem:[%s1 + $0x8] sm:$0x3]
        %v438 = vld [vmem:[%s434] sm:$0x7f]
        %440 = vset.pattern.permute.xlu0 0
        %441 = vperm.xlu0 %440, %v436
        %v442 = vpop.permute.xlu0 %441
        %445 = vset.pattern.permute.xlu0 0
        %446 = vperm.xlu0 %445, %v437
        %v447 = vpop.permute.xlu0 %446
        %v450 = vperm.slane %v438, 0
        %v451 = vperm.slane %v438, 1
        %v452 = vperm.slane %v438, 2
        %v453 = vperm.slane %v438, 3
        %v454 = vperm.slane %v438, 4
        %v455 = vperm.slane %v438, 5
        %v456 = vperm.slane %v438, 6
        %v464 = vmul.f32 %v442, %v450
        %v465 = vmul.f32 %v442, %v451
        %v466 = vmul.f32 %v442, %v452
        %v467 = vmul.f32 %v442, %v453
        %v468 = vmul.f32 %v442, %v454
        %v469 = vmul.f32 %v442, %v455
        %v470 = vmul.f32 %v442, %v456
        %v471 = vmul.f32 %v447, %v450
        %v472 = vmul.f32 %v447, %v451
        %v473 = vmul.f32 %v447, %v452
        %v474 = vmul.f32 %v447, %v453
        %v475 = vmul.f32 %v447, %v454
        %v476 = vmul.f32 %v447, %v455
        %v477 = vmul.f32 %v447, %v456
        %v478 = vadd.f32 %v464, 0.0
        %v479 = vadd.f32 %v465, 0.0
        %v480 = vadd.f32 %v466, 0.0
        %v481 = vadd.f32 %v467, 0.0
        %v482 = vadd.f32 %v468, 0.0
        %v483 = vadd.f32 %v469, 0.0
        %v484 = vadd.f32 %v470, 0.0
        %v485 = vadd.f32 %v471, 0.0
        %v486 = vadd.f32 %v472, 0.0
        %v487 = vadd.f32 %v473, 0.0
        %v488 = vadd.f32 %v474, 0.0
        %v489 = vadd.f32 %v475, 0.0
        %v490 = vadd.f32 %v476, 0.0
        %v491 = vadd.f32 %v477, 0.0
        %s492 = scalar_lea.vmem %s1, 16
        %v493 = vld [vmem:[%s492] sm:$0xff]
        %v494 = vld [vmem:[%s492 + $0x8] sm:$0x3]
        %496 = vset.pattern.permute.xlu0 0
        %497 = vperm.xlu0 %496, %v493
        %v498 = vpop.permute.xlu0 %497
        %501 = vset.pattern.permute.xlu0 0
        %502 = vperm.xlu0 %501, %v494
        %v503 = vpop.permute.xlu0 %502
        %v505 = vmul.f32 %v498, %v450
        %v506 = vmul.f32 %v498, %v451
        %v507 = vmul.f32 %v498, %v452
        %v508 = vmul.f32 %v498, %v453
        %v509 = vmul.f32 %v498, %v454
        %v510 = vmul.f32 %v498, %v455
        %v511 = vmul.f32 %v498, %v456
        %v512 = vmul.f32 %v503, %v450
        %v513 = vmul.f32 %v503, %v451
        %v514 = vmul.f32 %v503, %v452
        %v515 = vmul.f32 %v503, %v453
        %v516 = vmul.f32 %v503, %v454
        %v517 = vmul.f32 %v503, %v455
        %v518 = vmul.f32 %v503, %v456
        %533 = vrot.lane.b32.xlu0 %v505, 127
        %v534 = vpop.permute.xlu0 %533
        %535 = vrot.lane.b32.xlu0 %v506, 127
        %v536 = vpop.permute.xlu0 %535
        %537 = vrot.lane.b32.xlu0 %v507, 127
        %v538 = vpop.permute.xlu0 %537
        %539 = vrot.lane.b32.xlu0 %v508, 127
        %v540 = vpop.permute.xlu0 %539
        %541 = vrot.lane.b32.xlu0 %v509, 127
        %v542 = vpop.permute.xlu0 %541
        %543 = vrot.lane.b32.xlu0 %v510, 127
        %v544 = vpop.permute.xlu0 %543
        %545 = vrot.lane.b32.xlu0 %v511, 127
        %v546 = vpop.permute.xlu0 %545
        %547 = vrot.lane.b32.xlu0 %v512, 127
        %v548 = vpop.permute.xlu0 %547
        %549 = vrot.lane.b32.xlu0 %v513, 127
        %v550 = vpop.permute.xlu0 %549
        %551 = vrot.lane.b32.xlu0 %v514, 127
        %v552 = vpop.permute.xlu0 %551
        %553 = vrot.lane.b32.xlu0 %v515, 127
        %v554 = vpop.permute.xlu0 %553
        %555 = vrot.lane.b32.xlu0 %v516, 127
        %v556 = vpop.permute.xlu0 %555
        %557 = vrot.lane.b32.xlu0 %v517, 127
        %v558 = vpop.permute.xlu0 %557
        %559 = vrot.lane.b32.xlu0 %v518, 127
        %v560 = vpop.permute.xlu0 %559
        %vm561 = vcmask 1039360
        %v562 = vsel %vm561, %v534, %v536
        %v563 = vsel %vm561, %v536, %v538
        %v564 = vsel %vm561, %v538, %v540
        %v565 = vsel %vm561, %v540, %v542
        %v566 = vsel %vm561, %v542, %v544
        %v567 = vsel %vm561, %v544, %v546
        %v568 = vsel %vm561, %v548, %v550
        %v569 = vsel %vm561, %v550, %v552
        %v570 = vsel %vm561, %v552, %v554
        %v571 = vsel %vm561, %v554, %v556
        %v572 = vsel %vm561, %v556, %v558
        %v573 = vsel %vm561, %v558, %v560
        %v588 = vadd.f32 %v478, %v562
        %v589 = vadd.f32 %v479, %v563
        %v590 = vadd.f32 %v480, %v564
        %v591 = vadd.f32 %v481, %v565
        %v592 = vadd.f32 %v482, %v566
        %v593 = vadd.f32 %v483, %v567
        %v594 = vadd.f32 %v484, %v546
        %v595 = vadd.f32 %v485, %v568
        %v596 = vadd.f32 %v486, %v569
        %v597 = vadd.f32 %v487, %v570
        %v598 = vadd.f32 %v488, %v571
        %v599 = vadd.f32 %v489, %v572
        %v600 = vadd.f32 %v490, %v573
        %v601 = vadd.f32 %v491, %v560
        %s602 = scalar_lea.vmem %s1, 32
        %v603 = vld [vmem:[%s602] sm:$0xff]
        %v604 = vld [vmem:[%s602 + $0x8] sm:$0x3]
        %606 = vset.pattern.permute.xlu0 0
        %607 = vperm.xlu0 %606, %v603
        %v608 = vpop.permute.xlu0 %607
        %611 = vset.pattern.permute.xlu0 0
        %612 = vperm.xlu0 %611, %v604
        %v613 = vpop.permute.xlu0 %612
        %v615 = vmul.f32 %v608, %v450
        %v616 = vmul.f32 %v608, %v451
        %v617 = vmul.f32 %v608, %v452
        %v618 = vmul.f32 %v608, %v453
        %v619 = vmul.f32 %v608, %v454
        %v620 = vmul.f32 %v608, %v455
        %v621 = vmul.f32 %v608, %v456
        %v622 = vmul.f32 %v613, %v450
        %v623 = vmul.f32 %v613, %v451
        %v624 = vmul.f32 %v613, %v452
        %v625 = vmul.f32 %v613, %v453
        %v626 = vmul.f32 %v613, %v454
        %v627 = vmul.f32 %v613, %v455
        %v628 = vmul.f32 %v613, %v456
        %643 = vrot.lane.b32.xlu0 %v615, 126
        %v644 = vpop.permute.xlu0 %643
        %645 = vrot.lane.b32.xlu0 %v616, 126
        %v646 = vpop.permute.xlu0 %645
        %647 = vrot.lane.b32.xlu0 %v617, 126
        %v648 = vpop.permute.xlu0 %647
        %649 = vrot.lane.b32.xlu0 %v618, 126
        %v650 = vpop.permute.xlu0 %649
        %651 = vrot.lane.b32.xlu0 %v619, 126
        %v652 = vpop.permute.xlu0 %651
        %653 = vrot.lane.b32.xlu0 %v620, 126
        %v654 = vpop.permute.xlu0 %653
        %655 = vrot.lane.b32.xlu0 %v621, 126
        %v656 = vpop.permute.xlu0 %655
        %657 = vrot.lane.b32.xlu0 %v622, 126
        %v658 = vpop.permute.xlu0 %657
        %659 = vrot.lane.b32.xlu0 %v623, 126
        %v660 = vpop.permute.xlu0 %659
        %661 = vrot.lane.b32.xlu0 %v624, 126
        %v662 = vpop.permute.xlu0 %661
        %663 = vrot.lane.b32.xlu0 %v625, 126
        %v664 = vpop.permute.xlu0 %663
        %665 = vrot.lane.b32.xlu0 %v626, 126
        %v666 = vpop.permute.xlu0 %665
        %667 = vrot.lane.b32.xlu0 %v627, 126
        %v668 = vpop.permute.xlu0 %667
        %669 = vrot.lane.b32.xlu0 %v628, 126
        %v670 = vpop.permute.xlu0 %669
        %vm671 = vcmask 1031168
        %v672 = vsel %vm671, %v644, %v646
        %v673 = vsel %vm671, %v646, %v648
        %v674 = vsel %vm671, %v648, %v650
        %v675 = vsel %vm671, %v650, %v652
        %v676 = vsel %vm671, %v652, %v654
        %v677 = vsel %vm671, %v654, %v656
        %v678 = vsel %vm671, %v658, %v660
        %v679 = vsel %vm671, %v660, %v662
        %v680 = vsel %vm671, %v662, %v664
        %v681 = vsel %vm671, %v664, %v666
        %v682 = vsel %vm671, %v666, %v668
        %v683 = vsel %vm671, %v668, %v670
        %v698 = vadd.f32 %v588, %v672
        %v699 = vadd.f32 %v589, %v673
        %v700 = vadd.f32 %v590, %v674
        %v701 = vadd.f32 %v591, %v675
        %v702 = vadd.f32 %v592, %v676
        %v703 = vadd.f32 %v593, %v677
        %v704 = vadd.f32 %v594, %v656
        %v705 = vadd.f32 %v595, %v678
        %v706 = vadd.f32 %v596, %v679
        %v707 = vadd.f32 %v597, %v680
        %v708 = vadd.f32 %v598, %v681
        %v709 = vadd.f32 %v599, %v682
        %v710 = vadd.f32 %v600, %v683
        %v711 = vadd.f32 %v601, %v670
        %s712 = scalar_lea.vmem %s1, 48
        %v713 = vld [vmem:[%s712] sm:$0xff]
        %v714 = vld [vmem:[%s712 + $0x8] sm:$0x3]
        %716 = vset.pattern.permute.xlu0 0
        %717 = vperm.xlu0 %716, %v713
        %v718 = vpop.permute.xlu0 %717
        %721 = vset.pattern.permute.xlu0 0
        %722 = vperm.xlu0 %721, %v714
        %v723 = vpop.permute.xlu0 %722
        %v725 = vmul.f32 %v718, %v450
        %v726 = vmul.f32 %v718, %v451
        %v727 = vmul.f32 %v718, %v452
        %v728 = vmul.f32 %v718, %v453
        %v729 = vmul.f32 %v718, %v454
        %v730 = vmul.f32 %v718, %v455
        %v731 = vmul.f32 %v718, %v456
        %v732 = vmul.f32 %v723, %v450
        %v733 = vmul.f32 %v723, %v451
        %v734 = vmul.f32 %v723, %v452
        %v735 = vmul.f32 %v723, %v453
        %v736 = vmul.f32 %v723, %v454
        %v737 = vmul.f32 %v723, %v455
        %v738 = vmul.f32 %v723, %v456
        %753 = vrot.lane.b32.xlu0 %v725, 100
        %v754 = vpop.permute.xlu0 %753
        %755 = vrot.lane.b32.xlu0 %v726, 100
        %v756 = vpop.permute.xlu0 %755
        %757 = vrot.lane.b32.xlu0 %v727, 100
        %v758 = vpop.permute.xlu0 %757
        %759 = vrot.lane.b32.xlu0 %v728, 100
        %v760 = vpop.permute.xlu0 %759
        %761 = vrot.lane.b32.xlu0 %v729, 100
        %v762 = vpop.permute.xlu0 %761
        %763 = vrot.lane.b32.xlu0 %v730, 100
        %v764 = vpop.permute.xlu0 %763
        %765 = vrot.lane.b32.xlu0 %v731, 100
        %v766 = vpop.permute.xlu0 %765
        %767 = vrot.lane.b32.xlu0 %v732, 100
        %v768 = vpop.permute.xlu0 %767
        %769 = vrot.lane.b32.xlu0 %v733, 100
        %v770 = vpop.permute.xlu0 %769
        %771 = vrot.lane.b32.xlu0 %v734, 100
        %v772 = vpop.permute.xlu0 %771
        %773 = vrot.lane.b32.xlu0 %v735, 100
        %v774 = vpop.permute.xlu0 %773
        %775 = vrot.lane.b32.xlu0 %v736, 100
        %v776 = vpop.permute.xlu0 %775
        %777 = vrot.lane.b32.xlu0 %v737, 100
        %v778 = vpop.permute.xlu0 %777
        %779 = vrot.lane.b32.xlu0 %v738, 100
        %v780 = vpop.permute.xlu0 %779
        %vm781 = vcmask 818176
        %v782 = vsel %vm781, %v754, %v756
        %v783 = vsel %vm781, %v756, %v758
        %v784 = vsel %vm781, %v758, %v760
        %v785 = vsel %vm781, %v760, %v762
        %v786 = vsel %vm781, %v762, %v764
        %v787 = vsel %vm781, %v764, %v766
        %v788 = vsel %vm781, %v768, %v770
        %v789 = vsel %vm781, %v770, %v772
        %v790 = vsel %vm781, %v772, %v774
        %v791 = vsel %vm781, %v774, %v776
        %v792 = vsel %vm781, %v776, %v778
        %v793 = vsel %vm781, %v778, %v780
        %v808 = vadd.f32 %v698, %v782
        %v809 = vadd.f32 %v699, %v783
        %v810 = vadd.f32 %v700, %v784
        %v811 = vadd.f32 %v701, %v785
        %v812 = vadd.f32 %v702, %v786
        %v813 = vadd.f32 %v703, %v787
        %v814 = vadd.f32 %v704, %v766
        %v815 = vadd.f32 %v705, %v788
        %v816 = vadd.f32 %v706, %v789
        %v817 = vadd.f32 %v707, %v790
        %v818 = vadd.f32 %v708, %v791
        %v819 = vadd.f32 %v709, %v792
        %v820 = vadd.f32 %v710, %v793
        %v821 = vadd.f32 %v711, %v780
        %s822 = scalar_lea.vmem %s1, 64
        %v823 = vld [vmem:[%s822] sm:$0xff]
        %v824 = vld [vmem:[%s822 + $0x8] sm:$0x3]
        %826 = vset.pattern.permute.xlu0 0
        %827 = vperm.xlu0 %826, %v823
        %v828 = vpop.permute.xlu0 %827
        %831 = vset.pattern.permute.xlu0 0
        %832 = vperm.xlu0 %831, %v824
        %v833 = vpop.permute.xlu0 %832
        %v835 = vmul.f32 %v828, %v450
        %v836 = vmul.f32 %v828, %v451
        %v837 = vmul.f32 %v828, %v452
        %v838 = vmul.f32 %v828, %v453
        %v839 = vmul.f32 %v828, %v454
        %v840 = vmul.f32 %v828, %v455
        %v841 = vmul.f32 %v828, %v456
        %v842 = vmul.f32 %v833, %v450
        %v843 = vmul.f32 %v833, %v451
        %v844 = vmul.f32 %v833, %v452
        %v845 = vmul.f32 %v833, %v453
        %v846 = vmul.f32 %v833, %v454
        %v847 = vmul.f32 %v833, %v455
        %v848 = vmul.f32 %v833, %v456
        %863 = vrot.lane.b32.xlu0 %v835, 99
        %v864 = vpop.permute.xlu0 %863
        %865 = vrot.lane.b32.xlu0 %v836, 99
        %v866 = vpop.permute.xlu0 %865
        %867 = vrot.lane.b32.xlu0 %v837, 99
        %v868 = vpop.permute.xlu0 %867
        %869 = vrot.lane.b32.xlu0 %v838, 99
        %v870 = vpop.permute.xlu0 %869
        %871 = vrot.lane.b32.xlu0 %v839, 99
        %v872 = vpop.permute.xlu0 %871
        %873 = vrot.lane.b32.xlu0 %v840, 99
        %v874 = vpop.permute.xlu0 %873
        %875 = vrot.lane.b32.xlu0 %v841, 99
        %v876 = vpop.permute.xlu0 %875
        %877 = vrot.lane.b32.xlu0 %v842, 99
        %v878 = vpop.permute.xlu0 %877
        %879 = vrot.lane.b32.xlu0 %v843, 99
        %v880 = vpop.permute.xlu0 %879
        %881 = vrot.lane.b32.xlu0 %v844, 99
        %v882 = vpop.permute.xlu0 %881
        %883 = vrot.lane.b32.xlu0 %v845, 99
        %v884 = vpop.permute.xlu0 %883
        %885 = vrot.lane.b32.xlu0 %v846, 99
        %v886 = vpop.permute.xlu0 %885
        %887 = vrot.lane.b32.xlu0 %v847, 99
        %v888 = vpop.permute.xlu0 %887
        %889 = vrot.lane.b32.xlu0 %v848, 99
        %v890 = vpop.permute.xlu0 %889
        %vm891 = vcmask 809984
        %v892 = vsel %vm891, %v864, %v866
        %v893 = vsel %vm891, %v866, %v868
        %v894 = vsel %vm891, %v868, %v870
        %v895 = vsel %vm891, %v870, %v872
        %v896 = vsel %vm891, %v872, %v874
        %v897 = vsel %vm891, %v874, %v876
        %v898 = vsel %vm891, %v878, %v880
        %v899 = vsel %vm891, %v880, %v882
        %v900 = vsel %vm891, %v882, %v884
        %v901 = vsel %vm891, %v884, %v886
        %v902 = vsel %vm891, %v886, %v888
        %v903 = vsel %vm891, %v888, %v890
        %v918 = vadd.f32 %v808, %v892
        %v919 = vadd.f32 %v809, %v893
        %v920 = vadd.f32 %v810, %v894
        %v921 = vadd.f32 %v811, %v895
        %v922 = vadd.f32 %v812, %v896
        %v923 = vadd.f32 %v813, %v897
        %v924 = vadd.f32 %v814, %v876
        %v925 = vadd.f32 %v815, %v898
        %v926 = vadd.f32 %v816, %v899
        %v927 = vadd.f32 %v817, %v900
        %v928 = vadd.f32 %v818, %v901
        %v929 = vadd.f32 %v819, %v902
        %v930 = vadd.f32 %v820, %v903
        %v931 = vadd.f32 %v821, %v890
        %s932 = scalar_lea.vmem %s1, 80
        %v933 = vld [vmem:[%s932] sm:$0xff]
        %v934 = vld [vmem:[%s932 + $0x8] sm:$0x3]
        %936 = vset.pattern.permute.xlu0 0
        %937 = vperm.xlu0 %936, %v933
        %v938 = vpop.permute.xlu0 %937
        %941 = vset.pattern.permute.xlu0 0
        %942 = vperm.xlu0 %941, %v934
        %v943 = vpop.permute.xlu0 %942
        %v945 = vmul.f32 %v938, %v450
        %v946 = vmul.f32 %v938, %v451
        %v947 = vmul.f32 %v938, %v452
        %v948 = vmul.f32 %v938, %v453
        %v949 = vmul.f32 %v938, %v454
        %v950 = vmul.f32 %v938, %v455
        %v951 = vmul.f32 %v938, %v456
        %v952 = vmul.f32 %v943, %v450
        %v953 = vmul.f32 %v943, %v451
        %v954 = vmul.f32 %v943, %v452
        %v955 = vmul.f32 %v943, %v453
        %v956 = vmul.f32 %v943, %v454
        %v957 = vmul.f32 %v943, %v455
        %v958 = vmul.f32 %v943, %v456
        %973 = vrot.lane.b32.xlu0 %v945, 98
        %v974 = vpop.permute.xlu0 %973
        %975 = vrot.lane.b32.xlu0 %v946, 98
        %v976 = vpop.permute.xlu0 %975
        %977 = vrot.lane.b32.xlu0 %v947, 98
        %v978 = vpop.permute.xlu0 %977
        %979 = vrot.lane.b32.xlu0 %v948, 98
        %v980 = vpop.permute.xlu0 %979
        %981 = vrot.lane.b32.xlu0 %v949, 98
        %v982 = vpop.permute.xlu0 %981
        %983 = vrot.lane.b32.xlu0 %v950, 98
        %v984 = vpop.permute.xlu0 %983
        %985 = vrot.lane.b32.xlu0 %v951, 98
        %v986 = vpop.permute.xlu0 %985
        %987 = vrot.lane.b32.xlu0 %v952, 98
        %v988 = vpop.permute.xlu0 %987
        %989 = vrot.lane.b32.xlu0 %v953, 98
        %v990 = vpop.permute.xlu0 %989
        %991 = vrot.lane.b32.xlu0 %v954, 98
        %v992 = vpop.permute.xlu0 %991
        %993 = vrot.lane.b32.xlu0 %v955, 98
        %v994 = vpop.permute.xlu0 %993
        %995 = vrot.lane.b32.xlu0 %v956, 98
        %v996 = vpop.permute.xlu0 %995
        %997 = vrot.lane.b32.xlu0 %v957, 98
        %v998 = vpop.permute.xlu0 %997
        %999 = vrot.lane.b32.xlu0 %v958, 98
        %v1000 = vpop.permute.xlu0 %999
        %vm1001 = vcmask 801792
        %v1002 = vsel %vm1001, %v974, %v976
        %v1003 = vsel %vm1001, %v976, %v978
        %v1004 = vsel %vm1001, %v978, %v980
        %v1005 = vsel %vm1001, %v980, %v982
        %v1006 = vsel %vm1001, %v982, %v984
        %v1007 = vsel %vm1001, %v984, %v986
        %v1008 = vsel %vm1001, %v988, %v990
        %v1009 = vsel %vm1001, %v990, %v992
        %v1010 = vsel %vm1001, %v992, %v994
        %v1011 = vsel %vm1001, %v994, %v996
        %v1012 = vsel %vm1001, %v996, %v998
        %v1013 = vsel %vm1001, %v998, %v1000
        %v1028 = vadd.f32 %v918, %v1002
        %v1029 = vadd.f32 %v919, %v1003
        %v1030 = vadd.f32 %v920, %v1004
        %v1031 = vadd.f32 %v921, %v1005
        %v1032 = vadd.f32 %v922, %v1006
        %v1033 = vadd.f32 %v923, %v1007
        %v1034 = vadd.f32 %v924, %v986
        %v1035 = vadd.f32 %v925, %v1008
        %v1036 = vadd.f32 %v926, %v1009
        %v1037 = vadd.f32 %v927, %v1010
        %v1038 = vadd.f32 %v928, %v1011
        %v1039 = vadd.f32 %v929, %v1012
        %v1040 = vadd.f32 %v930, %v1013
        %v1041 = vadd.f32 %v931, %v1000
        %s1042 = scalar_lea.vmem %s1, 96
        %v1043 = vld [vmem:[%s1042] sm:$0xff]
        %v1044 = vld [vmem:[%s1042 + $0x8] sm:$0x3]
        %1046 = vset.pattern.permute.xlu0 0
        %1047 = vperm.xlu0 %1046, %v1043
        %v1048 = vpop.permute.xlu0 %1047
        %1051 = vset.pattern.permute.xlu0 0
        %1052 = vperm.xlu0 %1051, %v1044
        %v1053 = vpop.permute.xlu0 %1052
        %v1055 = vmul.f32 %v1048, %v450
        %v1056 = vmul.f32 %v1048, %v451
        %v1057 = vmul.f32 %v1048, %v452
        %v1058 = vmul.f32 %v1048, %v453
        %v1059 = vmul.f32 %v1048, %v454
        %v1060 = vmul.f32 %v1048, %v455
        %v1061 = vmul.f32 %v1048, %v456
        %v1062 = vmul.f32 %v1053, %v450
        %v1063 = vmul.f32 %v1053, %v451
        %v1064 = vmul.f32 %v1053, %v452
        %v1065 = vmul.f32 %v1053, %v453
        %v1066 = vmul.f32 %v1053, %v454
        %v1067 = vmul.f32 %v1053, %v455
        %v1068 = vmul.f32 %v1053, %v456
        %1083 = vrot.lane.b32.xlu0 %v1055, 72
        %v1084 = vpop.permute.xlu0 %1083
        %1085 = vrot.lane.b32.xlu0 %v1056, 72
        %v1086 = vpop.permute.xlu0 %1085
        %1087 = vrot.lane.b32.xlu0 %v1057, 72
        %v1088 = vpop.permute.xlu0 %1087
        %1089 = vrot.lane.b32.xlu0 %v1058, 72
        %v1090 = vpop.permute.xlu0 %1089
        %1091 = vrot.lane.b32.xlu0 %v1059, 72
        %v1092 = vpop.permute.xlu0 %1091
        %1093 = vrot.lane.b32.xlu0 %v1060, 72
        %v1094 = vpop.permute.xlu0 %1093
        %1095 = vrot.lane.b32.xlu0 %v1061, 72
        %v1096 = vpop.permute.xlu0 %1095
        %1097 = vrot.lane.b32.xlu0 %v1062, 72
        %v1098 = vpop.permute.xlu0 %1097
        %1099 = vrot.lane.b32.xlu0 %v1063, 72
        %v1100 = vpop.permute.xlu0 %1099
        %1101 = vrot.lane.b32.xlu0 %v1064, 72
        %v1102 = vpop.permute.xlu0 %1101
        %1103 = vrot.lane.b32.xlu0 %v1065, 72
        %v1104 = vpop.permute.xlu0 %1103
        %1105 = vrot.lane.b32.xlu0 %v1066, 72
        %v1106 = vpop.permute.xlu0 %1105
        %1107 = vrot.lane.b32.xlu0 %v1067, 72
        %v1108 = vpop.permute.xlu0 %1107
        %1109 = vrot.lane.b32.xlu0 %v1068, 72
        %v1110 = vpop.permute.xlu0 %1109
        %vm1111 = vcmask 588800
        %v1112 = vsel %vm1111, %v1084, %v1086
        %v1113 = vsel %vm1111, %v1086, %v1088
        %v1114 = vsel %vm1111, %v1088, %v1090
        %v1115 = vsel %vm1111, %v1090, %v1092
        %v1116 = vsel %vm1111, %v1092, %v1094
        %v1117 = vsel %vm1111, %v1094, %v1096
        %v1118 = vsel %vm1111, %v1098, %v1100
        %v1119 = vsel %vm1111, %v1100, %v1102
        %v1120 = vsel %vm1111, %v1102, %v1104
        %v1121 = vsel %vm1111, %v1104, %v1106
        %v1122 = vsel %vm1111, %v1106, %v1108
        %v1123 = vsel %vm1111, %v1108, %v1110
        %v1138 = vadd.f32 %v1028, %v1112
        %v1139 = vadd.f32 %v1029, %v1113
        %v1140 = vadd.f32 %v1030, %v1114
        %v1141 = vadd.f32 %v1031, %v1115
        %v1142 = vadd.f32 %v1032, %v1116
        %v1143 = vadd.f32 %v1033, %v1117
        %v1144 = vadd.f32 %v1034, %v1096
        %v1145 = vadd.f32 %v1035, %v1118
        %v1146 = vadd.f32 %v1036, %v1119
        %v1147 = vadd.f32 %v1037, %v1120
        %v1148 = vadd.f32 %v1038, %v1121
        %v1149 = vadd.f32 %v1039, %v1122
        %v1150 = vadd.f32 %v1040, %v1123
        %v1151 = vadd.f32 %v1041, %v1110
        %s1152 = scalar_lea.vmem %s1, 112
        %v1153 = vld [vmem:[%s1152] sm:$0xff]
        %v1154 = vld [vmem:[%s1152 + $0x8] sm:$0x3]
        %1156 = vset.pattern.permute.xlu0 0
        %1157 = vperm.xlu0 %1156, %v1153
        %v1158 = vpop.permute.xlu0 %1157
        %1161 = vset.pattern.permute.xlu0 0
        %1162 = vperm.xlu0 %1161, %v1154
        %v1163 = vpop.permute.xlu0 %1162
        %v1165 = vmul.f32 %v1158, %v450
        %v1166 = vmul.f32 %v1158, %v451
        %v1167 = vmul.f32 %v1158, %v452
        %v1168 = vmul.f32 %v1158, %v453
        %v1169 = vmul.f32 %v1158, %v454
        %v1170 = vmul.f32 %v1158, %v455
        %v1171 = vmul.f32 %v1158, %v456
        %v1172 = vmul.f32 %v1163, %v450
        %v1173 = vmul.f32 %v1163, %v451
        %v1174 = vmul.f32 %v1163, %v452
        %v1175 = vmul.f32 %v1163, %v453
        %v1176 = vmul.f32 %v1163, %v454
        %v1177 = vmul.f32 %v1163, %v455
        %v1178 = vmul.f32 %v1163, %v456
        %1193 = vrot.lane.b32.xlu0 %v1165, 71
        %v1194 = vpop.permute.xlu0 %1193
        %1195 = vrot.lane.b32.xlu0 %v1166, 71
        %v1196 = vpop.permute.xlu0 %1195
        %1197 = vrot.lane.b32.xlu0 %v1167, 71
        %v1198 = vpop.permute.xlu0 %1197
        %1199 = vrot.lane.b32.xlu0 %v1168, 71
        %v1200 = vpop.permute.xlu0 %1199
        %1201 = vrot.lane.b32.xlu0 %v1169, 71
        %v1202 = vpop.permute.xlu0 %1201
        %1203 = vrot.lane.b32.xlu0 %v1170, 71
        %v1204 = vpop.permute.xlu0 %1203
        %1205 = vrot.lane.b32.xlu0 %v1171, 71
        %v1206 = vpop.permute.xlu0 %1205
        %1207 = vrot.lane.b32.xlu0 %v1172, 71
        %v1208 = vpop.permute.xlu0 %1207
        %1209 = vrot.lane.b32.xlu0 %v1173, 71
        %v1210 = vpop.permute.xlu0 %1209
        %1211 = vrot.lane.b32.xlu0 %v1174, 71
        %v1212 = vpop.permute.xlu0 %1211
        %1213 = vrot.lane.b32.xlu0 %v1175, 71
        %v1214 = vpop.permute.xlu0 %1213
        %1215 = vrot.lane.b32.xlu0 %v1176, 71
        %v1216 = vpop.permute.xlu0 %1215
        %1217 = vrot.lane.b32.xlu0 %v1177, 71
        %v1218 = vpop.permute.xlu0 %1217
        %1219 = vrot.lane.b32.xlu0 %v1178, 71
        %v1220 = vpop.permute.xlu0 %1219
        %vm1221 = vcmask 580608
        %v1222 = vsel %vm1221, %v1194, %v1196
        %v1223 = vsel %vm1221, %v1196, %v1198
        %v1224 = vsel %vm1221, %v1198, %v1200
        %v1225 = vsel %vm1221, %v1200, %v1202
        %v1226 = vsel %vm1221, %v1202, %v1204
        %v1227 = vsel %vm1221, %v1204, %v1206
        %v1228 = vsel %vm1221, %v1208, %v1210
        %v1229 = vsel %vm1221, %v1210, %v1212
        %v1230 = vsel %vm1221, %v1212, %v1214
        %v1231 = vsel %vm1221, %v1214, %v1216
        %v1232 = vsel %vm1221, %v1216, %v1218
        %v1233 = vsel %vm1221, %v1218, %v1220
        %v1248 = vadd.f32 %v1138, %v1222
        %v1249 = vadd.f32 %v1139, %v1223
        %v1250 = vadd.f32 %v1140, %v1224
        %v1251 = vadd.f32 %v1141, %v1225
        %v1252 = vadd.f32 %v1142, %v1226
        %v1253 = vadd.f32 %v1143, %v1227
        %v1254 = vadd.f32 %v1144, %v1206
        %v1255 = vadd.f32 %v1145, %v1228
        %v1256 = vadd.f32 %v1146, %v1229
        %v1257 = vadd.f32 %v1147, %v1230
        %v1258 = vadd.f32 %v1148, %v1231
        %v1259 = vadd.f32 %v1149, %v1232
        %v1260 = vadd.f32 %v1150, %v1233
        %v1261 = vadd.f32 %v1151, %v1220
        %s1262 = scalar_lea.vmem %s1, 128
        %v1263 = vld [vmem:[%s1262] sm:$0xff]
        %v1264 = vld [vmem:[%s1262 + $0x8] sm:$0x3]
        %1266 = vset.pattern.permute.xlu0 0
        %1267 = vperm.xlu0 %1266, %v1263
        %v1268 = vpop.permute.xlu0 %1267
        %1271 = vset.pattern.permute.xlu0 0
        %1272 = vperm.xlu0 %1271, %v1264
        %v1273 = vpop.permute.xlu0 %1272
        %v1275 = vmul.f32 %v1268, %v450
        %v1276 = vmul.f32 %v1268, %v451
        %v1277 = vmul.f32 %v1268, %v452
        %v1278 = vmul.f32 %v1268, %v453
        %v1279 = vmul.f32 %v1268, %v454
        %v1280 = vmul.f32 %v1268, %v455
        %v1281 = vmul.f32 %v1268, %v456
        %v1282 = vmul.f32 %v1273, %v450
        %v1283 = vmul.f32 %v1273, %v451
        %v1284 = vmul.f32 %v1273, %v452
        %v1285 = vmul.f32 %v1273, %v453
        %v1286 = vmul.f32 %v1273, %v454
        %v1287 = vmul.f32 %v1273, %v455
        %v1288 = vmul.f32 %v1273, %v456
        %1303 = vrot.lane.b32.xlu0 %v1275, 70
        %v1304 = vpop.permute.xlu0 %1303
        %1305 = vrot.lane.b32.xlu0 %v1276, 70
        %v1306 = vpop.permute.xlu0 %1305
        %1307 = vrot.lane.b32.xlu0 %v1277, 70
        %v1308 = vpop.permute.xlu0 %1307
        %1309 = vrot.lane.b32.xlu0 %v1278, 70
        %v1310 = vpop.permute.xlu0 %1309
        %1311 = vrot.lane.b32.xlu0 %v1279, 70
        %v1312 = vpop.permute.xlu0 %1311
        %1313 = vrot.lane.b32.xlu0 %v1280, 70
        %v1314 = vpop.permute.xlu0 %1313
        %1315 = vrot.lane.b32.xlu0 %v1281, 70
        %v1316 = vpop.permute.xlu0 %1315
        %1317 = vrot.lane.b32.xlu0 %v1282, 70
        %v1318 = vpop.permute.xlu0 %1317
        %1319 = vrot.lane.b32.xlu0 %v1283, 70
        %v1320 = vpop.permute.xlu0 %1319
        %1321 = vrot.lane.b32.xlu0 %v1284, 70
        %v1322 = vpop.permute.xlu0 %1321
        %1323 = vrot.lane.b32.xlu0 %v1285, 70
        %v1324 = vpop.permute.xlu0 %1323
        %1325 = vrot.lane.b32.xlu0 %v1286, 70
        %v1326 = vpop.permute.xlu0 %1325
        %1327 = vrot.lane.b32.xlu0 %v1287, 70
        %v1328 = vpop.permute.xlu0 %1327
        %1329 = vrot.lane.b32.xlu0 %v1288, 70
        %v1330 = vpop.permute.xlu0 %1329
        %vm1331 = vcmask 572416
        %v1332 = vsel %vm1331, %v1304, %v1306
        %v1333 = vsel %vm1331, %v1306, %v1308
        %v1334 = vsel %vm1331, %v1308, %v1310
        %v1335 = vsel %vm1331, %v1310, %v1312
        %v1336 = vsel %vm1331, %v1312, %v1314
        %v1337 = vsel %vm1331, %v1314, %v1316
        %v1338 = vsel %vm1331, %v1318, %v1320
        %v1339 = vsel %vm1331, %v1320, %v1322
        %v1340 = vsel %vm1331, %v1322, %v1324
        %v1341 = vsel %vm1331, %v1324, %v1326
        %v1342 = vsel %vm1331, %v1326, %v1328
        %v1343 = vsel %vm1331, %v1328, %v1330
        %v1358 = vadd.f32 %v1248, %v1332
        %v1359 = vadd.f32 %v1249, %v1333
        %v1360 = vadd.f32 %v1250, %v1334
        %v1361 = vadd.f32 %v1251, %v1335
        %v1362 = vadd.f32 %v1252, %v1336
        %v1363 = vadd.f32 %v1253, %v1337
        %v1364 = vadd.f32 %v1254, %v1316
        %v1365 = vadd.f32 %v1255, %v1338
        %v1366 = vadd.f32 %v1256, %v1339
        %v1367 = vadd.f32 %v1257, %v1340
        %v1368 = vadd.f32 %v1258, %v1341
        %v1369 = vadd.f32 %v1259, %v1342
        %v1370 = vadd.f32 %v1260, %v1343
        %v1371 = vadd.f32 %v1261, %v1330
        %v1372 = vld [vmem:[%s2] sm:$0xff]
        %v1373 = vld [vmem:[%s2 + $0x8] sm:$0x3]
        %1375 = vset.pattern.permute.xlu0 0
        %1376 = vperm.xlu0 %1375, %v1372
        %v1377 = vpop.permute.xlu0 %1376
        %1380 = vset.pattern.permute.xlu0 0
        %1381 = vperm.xlu0 %1380, %v1373
        %v1382 = vpop.permute.xlu0 %1381
        %v1384 = vadd.f32 %v1358, %v1377
        %v1385 = vadd.f32 %v1359, %v1377
        %v1386 = vadd.f32 %v1360, %v1377
        %v1387 = vadd.f32 %v1361, %v1377
        %v1388 = vadd.f32 %v1362, %v1377
        %v1389 = vadd.f32 %v1363, %v1377
        %v1390 = vadd.f32 %v1364, %v1377
        %v1391 = vadd.f32 %v1365, %v1382
        %v1392 = vadd.f32 %v1366, %v1382
        %v1393 = vadd.f32 %v1367, %v1382
        %v1394 = vadd.f32 %v1368, %v1382
        %v1395 = vadd.f32 %v1369, %v1382
        %v1396 = vadd.f32 %v1370, %v1382
        %v1397 = vadd.f32 %v1371, %v1382
        %v1398 = vmax.f32 %v1384, 0.0
        %v1399 = vmax.f32 %v1385, 0.0
        %v1400 = vmax.f32 %v1386, 0.0
        %v1401 = vmax.f32 %v1387, 0.0
        %v1402 = vmax.f32 %v1388, 0.0
        %v1403 = vmax.f32 %v1389, 0.0
        %v1404 = vmax.f32 %v1390, 0.0
        %v1405 = vmax.f32 %v1391, 0.0
        %v1406 = vmax.f32 %v1392, 0.0
        %v1407 = vmax.f32 %v1393, 0.0
        %v1408 = vmax.f32 %v1394, 0.0
        %v1409 = vmax.f32 %v1395, 0.0
        %v1410 = vmax.f32 %v1396, 0.0
        %v1411 = vmax.f32 %v1397, 0.0
        %1412 = vst [vmem:[#allocation2] sm:$0xff] %v1398
        %1413 = vst [vmem:[#allocation2 + $0x8] sm:$0xff] %v1399
        %1414 = vst [vmem:[#allocation2 + $0x10] sm:$0xff] %v1400
        %1415 = vst [vmem:[#allocation2 + $0x18] sm:$0xff] %v1401
        %1416 = vst [vmem:[#allocation2 + $0x20] sm:$0xff] %v1402
        %1417 = vst [vmem:[#allocation2 + $0x28] sm:$0xff] %v1403
        %vm1418 = vcmask 130048
        %1419 = vst.msk [vmem:[#allocation2 + $0x30] sm:$0xff] %vm1418, %v1404
        %1420 = vst [vmem:[#allocation2 + $0x38] sm:$0x3] %v1405
        %1421 = vst [vmem:[#allocation2 + $0x40] sm:$0x3] %v1406
        %1422 = vst [vmem:[#allocation2 + $0x48] sm:$0x3] %v1407
        %1423 = vst [vmem:[#allocation2 + $0x50] sm:$0x3] %v1408
        %1424 = vst [vmem:[#allocation2 + $0x58] sm:$0x3] %v1409
        %1425 = vst [vmem:[#allocation2 + $0x60] sm:$0x3] %v1410
        %vm1426 = vcmask 123904
        %1427 = vst.msk [vmem:[#allocation2 + $0x68] sm:$0x3] %vm1426, %v1411
        %vm1428 = vcmask 1047680
        %1429 = vst.msk [vmem:[#allocation2 + $0x30] sm:$0xff] %vm1428, 0.0
        %vm1430 = vcmask 1041536
        %1431 = vst.msk [vmem:[#allocation2 + $0x68] sm:$0x3] %vm1430, 0.0
        %v1432 = vld [vmem:[#allocation2] sm:$0xff]
        %v1433 = vld [vmem:[#allocation2 + $0x8] sm:$0xff]
        %v1434 = vld [vmem:[#allocation2 + $0x10] sm:$0xff]
        %v1435 = vld [vmem:[#allocation2 + $0x18] sm:$0xff]
        %v1436 = vld [vmem:[#allocation2 + $0x20] sm:$0xff]
        %v1437 = vld [vmem:[#allocation2 + $0x28] sm:$0xff]
        %v1438 = vld [vmem:[#allocation2 + $0x30] sm:$0xff]
        %v1439 = vld [vmem:[#allocation2 + $0x38] sm:$0x3]
        %v1440 = vld [vmem:[#allocation2 + $0x40] sm:$0x3]
        %v1441 = vld [vmem:[#allocation2 + $0x48] sm:$0x3]
        %v1442 = vld [vmem:[#allocation2 + $0x50] sm:$0x3]
        %v1443 = vld [vmem:[#allocation2 + $0x58] sm:$0x3]
        %v1444 = vld [vmem:[#allocation2 + $0x60] sm:$0x3]
        %v1445 = vld [vmem:[#allocation2 + $0x68] sm:$0x3]
        %v1446 = vpack.c.bf16 %v1439, %v1432
        %v1447 = vpack.c.bf16 %v1440, %v1433
        %v1448 = vpack.c.bf16 %v1441, %v1434
        %v1449 = vpack.c.bf16 %v1442, %v1435
        %v1450 = vpack.c.bf16 %v1443, %v1436
        %v1451 = vpack.c.bf16 %v1444, %v1437
        %v1452 = vpack.c.bf16 %v1445, %v1438
        %v1453 = vld [vmem:[%s3] sm:$0xf]
        %v1454 = vld [vmem:[%s3 + $0x4] sm:$0xf]
        %s1455 = scalar_lea.vmem %s3, 8
        %v1456 = vld [vmem:[%s1455] sm:$0xf]
        %v1457 = vld [vmem:[%s1455 + $0x4] sm:$0xf]
        %v1460 = vunpack.c.l.b16 %v1456
        %v1461 = vunpack.c.l.b16 %v1457
        %v1462 = vpack.c.b16 %v1461, %v1460
        %1470 = vrot.lane.b32.xlu0 %v1446, 127
        %v1471 = vpop.permute.xlu0 %1470
        %1472 = vrot.lane.b32.xlu0 %v1447, 127
        %v1473 = vpop.permute.xlu0 %1472
        %1474 = vrot.lane.b32.xlu0 %v1448, 127
        %v1475 = vpop.permute.xlu0 %1474
        %1476 = vrot.lane.b32.xlu0 %v1449, 127
        %v1477 = vpop.permute.xlu0 %1476
        %1478 = vrot.lane.b32.xlu0 %v1450, 127
        %v1479 = vpop.permute.xlu0 %1478
        %1480 = vrot.lane.b32.xlu0 %v1451, 127
        %v1481 = vpop.permute.xlu0 %1480
        %1482 = vrot.lane.b32.xlu0 %v1452, 127
        %v1483 = vpop.permute.xlu0 %1482
        %vm1484 = vcmask 1039360
        %v1485 = vsel %vm1484, %v1471, %v1473
        %v1486 = vsel %vm1484, %v1473, %v1475
        %v1487 = vsel %vm1484, %v1475, %v1477
        %v1488 = vsel %vm1484, %v1477, %v1479
        %v1489 = vsel %vm1484, %v1479, %v1481
        %v1490 = vsel %vm1484, %v1481, %v1483
        %vm1491 = vcmask 80896
        %v1493 = vsel %vm1491, %v1462, 0
        %vm1495 = vcmask 1044480
        %v1497 = vsel %vm1495, %v1485, 0
        %v1500 = vsel %vm1495, %v1486, 0
        %v1503 = vsel %vm1495, %v1487, 0
        %v1506 = vsel %vm1495, %v1488, 0
        %v1509 = vsel %vm1495, %v1489, 0
        %v1512 = vsel %vm1495, %v1490, 0
        %v1515 = vsel %vm1495, %v1483, 0
        %1517 = vmatpush.bf16.msra.mxu0 0
        %1518 = vmatpush.bf16.msra.mxu0 0
        %1519 = vmatpush.bf16.msra.mxu0 0
        %1520 = vmatpush.bf16.msra.mxu0 0
        %1521 = vmatpush.bf16.msra.mxu0 0
        %1522 = vmatpush.bf16.msra.mxu0 0
        %1523 = vmatpush.bf16.msra.mxu0 0
        %1524 = vmatpush.bf16.msra.mxu0 %v1497
        %1525 = vmatmul.bf16.gmra.mxu0 %v1493
        %v1526 = vpop.f32.mrf.mxu0
        %v1527 = vadd.f32 0.0, %v1526
        %v1528 = vpop.f32.mrf.mxu0
        %v1529 = vadd.f32 0.0, %v1528
        %1530 = vdwg.mxu0
        %1531 = vmatpush.bf16.msra.mxu0 0
        %1532 = vmatpush.bf16.msra.mxu0 0
        %1533 = vmatpush.bf16.msra.mxu0 0
        %1534 = vmatpush.bf16.msra.mxu0 0
        %1535 = vmatpush.bf16.msra.mxu0 0
        %1536 = vmatpush.bf16.msra.mxu0 0
        %1537 = vmatpush.bf16.msra.mxu0 0
        %1538 = vmatpush.bf16.msra.mxu0 %v1500
        %1539 = vmatmul.bf16.gmra.mxu0 %v1493
        %v1540 = vpop.f32.mrf.mxu0
        %v1541 = vadd.f32 0.0, %v1540
        %v1542 = vpop.f32.mrf.mxu0
        %v1543 = vadd.f32 0.0, %v1542
        %1544 = vdwg.mxu0
        %1545 = vmatpush.bf16.msra.mxu0 0
        %1546 = vmatpush.bf16.msra.mxu0 0
        %1547 = vmatpush.bf16.msra.mxu0 0
        %1548 = vmatpush.bf16.msra.mxu0 0
        %1549 = vmatpush.bf16.msra.mxu0 0
        %1550 = vmatpush.bf16.msra.mxu0 0
        %1551 = vmatpush.bf16.msra.mxu0 0
        %1552 = vmatpush.bf16.msra.mxu0 %v1503
        %1553 = vmatmul.bf16.gmra.mxu0 %v1493
        %v1554 = vpop.f32.mrf.mxu0
        %v1555 = vadd.f32 0.0, %v1554
        %v1556 = vpop.f32.mrf.mxu0
        %v1557 = vadd.f32 0.0, %v1556
        %1558 = vdwg.mxu0
        %1559 = vmatpush.bf16.msra.mxu0 0
        %1560 = vmatpush.bf16.msra.mxu0 0
        %1561 = vmatpush.bf16.msra.mxu0 0
        %1562 = vmatpush.bf16.msra.mxu0 0
        %1563 = vmatpush.bf16.msra.mxu0 0
        %1564 = vmatpush.bf16.msra.mxu0 0
        %1565 = vmatpush.bf16.msra.mxu0 0
        %1566 = vmatpush.bf16.msra.mxu0 %v1506
        %1567 = vmatmul.bf16.gmra.mxu0 %v1493
        %v1568 = vpop.f32.mrf.mxu0
        %v1569 = vadd.f32 0.0, %v1568
        %v1570 = vpop.f32.mrf.mxu0
        %v1571 = vadd.f32 0.0, %v1570
        %1572 = vdwg.mxu0
        %1573 = vmatpush.bf16.msra.mxu0 0
        %1574 = vmatpush.bf16.msra.mxu0 0
        %1575 = vmatpush.bf16.msra.mxu0 0
        %1576 = vmatpush.bf16.msra.mxu0 0
        %1577 = vmatpush.bf16.msra.mxu0 0
        %1578 = vmatpush.bf16.msra.mxu0 0
        %1579 = vmatpush.bf16.msra.mxu0 0
        %1580 = vmatpush.bf16.msra.mxu0 %v1509
        %1581 = vmatmul.bf16.gmra.mxu0 %v1493
        %v1582 = vpop.f32.mrf.mxu0
        %v1583 = vadd.f32 0.0, %v1582
        %v1584 = vpop.f32.mrf.mxu0
        %v1585 = vadd.f32 0.0, %v1584
        %1586 = vdwg.mxu0
        %1587 = vmatpush.bf16.msra.mxu0 0
        %1588 = vmatpush.bf16.msra.mxu0 0
        %1589 = vmatpush.bf16.msra.mxu0 0
        %1590 = vmatpush.bf16.msra.mxu0 0
        %1591 = vmatpush.bf16.msra.mxu0 0
        %1592 = vmatpush.bf16.msra.mxu0 0
        %1593 = vmatpush.bf16.msra.mxu0 0
        %1594 = vmatpush.bf16.msra.mxu0 %v1512
        %1595 = vmatmul.bf16.gmra.mxu0 %v1493
        %v1596 = vpop.f32.mrf.mxu0
        %v1597 = vadd.f32 0.0, %v1596
        %v1598 = vpop.f32.mrf.mxu0
        %v1599 = vadd.f32 0.0, %v1598
        %1600 = vdwg.mxu0
        %1601 = vmatpush.bf16.msra.mxu0 0
        %1602 = vmatpush.bf16.msra.mxu0 0
        %1603 = vmatpush.bf16.msra.mxu0 0
        %1604 = vmatpush.bf16.msra.mxu0 0
        %1605 = vmatpush.bf16.msra.mxu0 0
        %1606 = vmatpush.bf16.msra.mxu0 0
        %1607 = vmatpush.bf16.msra.mxu0 0
        %1608 = vmatpush.bf16.msra.mxu0 %v1515
        %1609 = vmatmul.bf16.gmra.mxu0 %v1493
        %v1610 = vpop.f32.mrf.mxu0
        %v1611 = vadd.f32 0.0, %v1610
        %v1612 = vpop.f32.mrf.mxu0
        %v1613 = vadd.f32 0.0, %v1612
        %1614 = vdwg.mxu0
        %v1617 = vunpack.c.l.b16 %v1453
        %v1618 = vunpack.c.l.b16 %v1454
        %v1619 = vpack.c.b16 %v1618, %v1617
        %v1621 = vsel %vm1491, %v1619, 0
        %v1624 = vsel %vm1495, %v1446, 0
        %v1627 = vsel %vm1495, %v1447, 0
        %v1630 = vsel %vm1495, %v1448, 0
        %v1633 = vsel %vm1495, %v1449, 0
        %v1636 = vsel %vm1495, %v1450, 0
        %v1639 = vsel %vm1495, %v1451, 0
        %v1642 = vsel %vm1495, %v1452, 0
        %1644 = vmatpush.bf16.msra.mxu0 0
        %1645 = vmatpush.bf16.msra.mxu0 0
        %1646 = vmatpush.bf16.msra.mxu0 0
        %1647 = vmatpush.bf16.msra.mxu0 0
        %1648 = vmatpush.bf16.msra.mxu0 0
        %1649 = vmatpush.bf16.msra.mxu0 0
        %1650 = vmatpush.bf16.msra.mxu0 0
        %1651 = vmatpush.bf16.msra.mxu0 %v1624
        %1652 = vmatmul.bf16.gmra.mxu0 %v1621
        %v1653 = vpop.f32.mrf.mxu0
        %v1654 = vadd.f32 %v1527, %v1653
        %v1655 = vpop.f32.mrf.mxu0
        %v1656 = vadd.f32 %v1529, %v1655
        %1657 = vdwg.mxu0
        %1658 = vmatpush.bf16.msra.mxu0 0
        %1659 = vmatpush.bf16.msra.mxu0 0
        %1660 = vmatpush.bf16.msra.mxu0 0
        %1661 = vmatpush.bf16.msra.mxu0 0
        %1662 = vmatpush.bf16.msra.mxu0 0
        %1663 = vmatpush.bf16.msra.mxu0 0
        %1664 = vmatpush.bf16.msra.mxu0 0
        %1665 = vmatpush.bf16.msra.mxu0 %v1627
        %1666 = vmatmul.bf16.gmra.mxu0 %v1621
        %v1667 = vpop.f32.mrf.mxu0
        %v1668 = vadd.f32 %v1541, %v1667
        %v1669 = vpop.f32.mrf.mxu0
        %v1670 = vadd.f32 %v1543, %v1669
        %1671 = vdwg.mxu0
        %1672 = vmatpush.bf16.msra.mxu0 0
        %1673 = vmatpush.bf16.msra.mxu0 0
        %1674 = vmatpush.bf16.msra.mxu0 0
        %1675 = vmatpush.bf16.msra.mxu0 0
        %1676 = vmatpush.bf16.msra.mxu0 0
        %1677 = vmatpush.bf16.msra.mxu0 0
        %1678 = vmatpush.bf16.msra.mxu0 0
        %1679 = vmatpush.bf16.msra.mxu0 %v1630
        %1680 = vmatmul.bf16.gmra.mxu0 %v1621
        %v1681 = vpop.f32.mrf.mxu0
        %v1682 = vadd.f32 %v1555, %v1681
        %v1683 = vpop.f32.mrf.mxu0
        %v1684 = vadd.f32 %v1557, %v1683
        %1685 = vdwg.mxu0
        %1686 = vmatpush.bf16.msra.mxu0 0
        %1687 = vmatpush.bf16.msra.mxu0 0
        %1688 = vmatpush.bf16.msra.mxu0 0
        %1689 = vmatpush.bf16.msra.mxu0 0
        %1690 = vmatpush.bf16.msra.mxu0 0
        %1691 = vmatpush.bf16.msra.mxu0 0
        %1692 = vmatpush.bf16.msra.mxu0 0
        %1693 = vmatpush.bf16.msra.mxu0 %v1633
        %1694 = vmatmul.bf16.gmra.mxu0 %v1621
        %v1695 = vpop.f32.mrf.mxu0
        %v1696 = vadd.f32 %v1569, %v1695
        %v1697 = vpop.f32.mrf.mxu0
        %v1698 = vadd.f32 %v1571, %v1697
        %1699 = vdwg.mxu0
        %1700 = vmatpush.bf16.msra.mxu0 0
        %1701 = vmatpush.bf16.msra.mxu0 0
        %1702 = vmatpush.bf16.msra.mxu0 0
        %1703 = vmatpush.bf16.msra.mxu0 0
        %1704 = vmatpush.bf16.msra.mxu0 0
        %1705 = vmatpush.bf16.msra.mxu0 0
        %1706 = vmatpush.bf16.msra.mxu0 0
        %1707 = vmatpush.bf16.msra.mxu0 %v1636
        %1708 = vmatmul.bf16.gmra.mxu0 %v1621
        %v1709 = vpop.f32.mrf.mxu0
        %v1710 = vadd.f32 %v1583, %v1709
        %v1711 = vpop.f32.mrf.mxu0
        %v1712 = vadd.f32 %v1585, %v1711
        %1713 = vdwg.mxu0
        %1714 = vmatpush.bf16.msra.mxu0 0
        %1715 = vmatpush.bf16.msra.mxu0 0
        %1716 = vmatpush.bf16.msra.mxu0 0
        %1717 = vmatpush.bf16.msra.mxu0 0
        %1718 = vmatpush.bf16.msra.mxu0 0
        %1719 = vmatpush.bf16.msra.mxu0 0
        %1720 = vmatpush.bf16.msra.mxu0 0
        %1721 = vmatpush.bf16.msra.mxu0 %v1639
        %1722 = vmatmul.bf16.gmra.mxu0 %v1621
        %v1723 = vpop.f32.mrf.mxu0
        %v1724 = vadd.f32 %v1597, %v1723
        %v1725 = vpop.f32.mrf.mxu0
        %v1726 = vadd.f32 %v1599, %v1725
        %1727 = vdwg.mxu0
        %1728 = vmatpush.bf16.msra.mxu0 0
        %1729 = vmatpush.bf16.msra.mxu0 0
        %1730 = vmatpush.bf16.msra.mxu0 0
        %1731 = vmatpush.bf16.msra.mxu0 0
        %1732 = vmatpush.bf16.msra.mxu0 0
        %1733 = vmatpush.bf16.msra.mxu0 0
        %1734 = vmatpush.bf16.msra.mxu0 0
        %1735 = vmatpush.bf16.msra.mxu0 %v1642
        %1736 = vmatmul.bf16.gmra.mxu0 %v1621
        %v1737 = vpop.f32.mrf.mxu0
        %v1738 = vadd.f32 %v1611, %v1737
        %v1739 = vpop.f32.mrf.mxu0
        %v1740 = vadd.f32 %v1613, %v1739
        %1741 = vdwg.mxu0
        %s1742 = scalar_lea.vmem %s3, 16
        %v1743 = vld [vmem:[%s1742] sm:$0xf]
        %v1744 = vld [vmem:[%s1742 + $0x4] sm:$0xf]
        %v1747 = vunpack.c.l.b16 %v1743
        %v1748 = vunpack.c.l.b16 %v1744
        %v1749 = vpack.c.b16 %v1748, %v1747
        %1750 = vrot.lane.b32.xlu0 %v1446, 126
        %v1751 = vpop.permute.xlu0 %1750
        %1752 = vrot.lane.b32.xlu0 %v1447, 126
        %v1753 = vpop.permute.xlu0 %1752
        %1754 = vrot.lane.b32.xlu0 %v1448, 126
        %v1755 = vpop.permute.xlu0 %1754
        %1756 = vrot.lane.b32.xlu0 %v1449, 126
        %v1757 = vpop.permute.xlu0 %1756
        %1758 = vrot.lane.b32.xlu0 %v1450, 126
        %v1759 = vpop.permute.xlu0 %1758
        %1760 = vrot.lane.b32.xlu0 %v1451, 126
        %v1761 = vpop.permute.xlu0 %1760
        %1762 = vrot.lane.b32.xlu0 %v1452, 126
        %v1763 = vpop.permute.xlu0 %1762
        %vm1764 = vcmask 1031168
        %v1765 = vsel %vm1764, %v1751, %v1753
        %v1766 = vsel %vm1764, %v1753, %v1755
        %v1767 = vsel %vm1764, %v1755, %v1757
        %v1768 = vsel %vm1764, %v1757, %v1759
        %v1769 = vsel %vm1764, %v1759, %v1761
        %v1770 = vsel %vm1764, %v1761, %v1763
        %v1772 = vsel %vm1491, %v1749, 0
        %v1775 = vsel %vm1495, %v1765, 0
        %v1778 = vsel %vm1495, %v1766, 0
        %v1781 = vsel %vm1495, %v1767, 0
        %v1784 = vsel %vm1495, %v1768, 0
        %v1787 = vsel %vm1495, %v1769, 0
        %v1790 = vsel %vm1495, %v1770, 0
        %v1793 = vsel %vm1495, %v1763, 0
        %1795 = vmatpush.bf16.msra.mxu0 0
        %1796 = vmatpush.bf16.msra.mxu0 0
        %1797 = vmatpush.bf16.msra.mxu0 0
        %1798 = vmatpush.bf16.msra.mxu0 0
        %1799 = vmatpush.bf16.msra.mxu0 0
        %1800 = vmatpush.bf16.msra.mxu0 0
        %1801 = vmatpush.bf16.msra.mxu0 0
        %1802 = vmatpush.bf16.msra.mxu0 %v1775
        %1803 = vmatmul.bf16.gmra.mxu0 %v1772
        %v1804 = vpop.f32.mrf.mxu0
        %v1805 = vadd.f32 0.0, %v1804
        %v1806 = vpop.f32.mrf.mxu0
        %v1807 = vadd.f32 0.0, %v1806
        %1808 = vdwg.mxu0
        %1809 = vmatpush.bf16.msra.mxu0 0
        %1810 = vmatpush.bf16.msra.mxu0 0
        %1811 = vmatpush.bf16.msra.mxu0 0
        %1812 = vmatpush.bf16.msra.mxu0 0
        %1813 = vmatpush.bf16.msra.mxu0 0
        %1814 = vmatpush.bf16.msra.mxu0 0
        %1815 = vmatpush.bf16.msra.mxu0 0
        %1816 = vmatpush.bf16.msra.mxu0 %v1778
        %1817 = vmatmul.bf16.gmra.mxu0 %v1772
        %v1818 = vpop.f32.mrf.mxu0
        %v1819 = vadd.f32 0.0, %v1818
        %v1820 = vpop.f32.mrf.mxu0
        %v1821 = vadd.f32 0.0, %v1820
        %1822 = vdwg.mxu0
        %1823 = vmatpush.bf16.msra.mxu0 0
        %1824 = vmatpush.bf16.msra.mxu0 0
        %1825 = vmatpush.bf16.msra.mxu0 0
        %1826 = vmatpush.bf16.msra.mxu0 0
        %1827 = vmatpush.bf16.msra.mxu0 0
        %1828 = vmatpush.bf16.msra.mxu0 0
        %1829 = vmatpush.bf16.msra.mxu0 0
        %1830 = vmatpush.bf16.msra.mxu0 %v1781
        %1831 = vmatmul.bf16.gmra.mxu0 %v1772
        %v1832 = vpop.f32.mrf.mxu0
        %v1833 = vadd.f32 0.0, %v1832
        %v1834 = vpop.f32.mrf.mxu0
        %v1835 = vadd.f32 0.0, %v1834
        %1836 = vdwg.mxu0
        %1837 = vmatpush.bf16.msra.mxu0 0
        %1838 = vmatpush.bf16.msra.mxu0 0
        %1839 = vmatpush.bf16.msra.mxu0 0
        %1840 = vmatpush.bf16.msra.mxu0 0
        %1841 = vmatpush.bf16.msra.mxu0 0
        %1842 = vmatpush.bf16.msra.mxu0 0
        %1843 = vmatpush.bf16.msra.mxu0 0
        %1844 = vmatpush.bf16.msra.mxu0 %v1784
        %1845 = vmatmul.bf16.gmra.mxu0 %v1772
        %v1846 = vpop.f32.mrf.mxu0
        %v1847 = vadd.f32 0.0, %v1846
        %v1848 = vpop.f32.mrf.mxu0
        %v1849 = vadd.f32 0.0, %v1848
        %1850 = vdwg.mxu0
        %1851 = vmatpush.bf16.msra.mxu0 0
        %1852 = vmatpush.bf16.msra.mxu0 0
        %1853 = vmatpush.bf16.msra.mxu0 0
        %1854 = vmatpush.bf16.msra.mxu0 0
        %1855 = vmatpush.bf16.msra.mxu0 0
        %1856 = vmatpush.bf16.msra.mxu0 0
        %1857 = vmatpush.bf16.msra.mxu0 0
        %1858 = vmatpush.bf16.msra.mxu0 %v1787
        %1859 = vmatmul.bf16.gmra.mxu0 %v1772
        %v1860 = vpop.f32.mrf.mxu0
        %v1861 = vadd.f32 0.0, %v1860
        %v1862 = vpop.f32.mrf.mxu0
        %v1863 = vadd.f32 0.0, %v1862
        %1864 = vdwg.mxu0
        %1865 = vmatpush.bf16.msra.mxu0 0
        %1866 = vmatpush.bf16.msra.mxu0 0
        %1867 = vmatpush.bf16.msra.mxu0 0
        %1868 = vmatpush.bf16.msra.mxu0 0
        %1869 = vmatpush.bf16.msra.mxu0 0
        %1870 = vmatpush.bf16.msra.mxu0 0
        %1871 = vmatpush.bf16.msra.mxu0 0
        %1872 = vmatpush.bf16.msra.mxu0 %v1790
        %1873 = vmatmul.bf16.gmra.mxu0 %v1772
        %v1874 = vpop.f32.mrf.mxu0
        %v1875 = vadd.f32 0.0, %v1874
        %v1876 = vpop.f32.mrf.mxu0
        %v1877 = vadd.f32 0.0, %v1876
        %1878 = vdwg.mxu0
        %1879 = vmatpush.bf16.msra.mxu0 0
        %1880 = vmatpush.bf16.msra.mxu0 0
        %1881 = vmatpush.bf16.msra.mxu0 0
        %1882 = vmatpush.bf16.msra.mxu0 0
        %1883 = vmatpush.bf16.msra.mxu0 0
        %1884 = vmatpush.bf16.msra.mxu0 0
        %1885 = vmatpush.bf16.msra.mxu0 0
        %1886 = vmatpush.bf16.msra.mxu0 %v1793
        %1887 = vmatmul.bf16.gmra.mxu0 %v1772
        %v1888 = vpop.f32.mrf.mxu0
        %v1889 = vadd.f32 0.0, %v1888
        %v1890 = vpop.f32.mrf.mxu0
        %v1891 = vadd.f32 0.0, %v1890
        %1892 = vdwg.mxu0
        %v1893 = vadd.f32 %v1654, %v1805
        %v1894 = vadd.f32 %v1668, %v1819
        %v1895 = vadd.f32 %v1682, %v1833
        %v1896 = vadd.f32 %v1696, %v1847
        %v1897 = vadd.f32 %v1710, %v1861
        %v1898 = vadd.f32 %v1724, %v1875
        %v1899 = vadd.f32 %v1738, %v1889
        %v1900 = vadd.f32 %v1656, %v1807
        %v1901 = vadd.f32 %v1670, %v1821
        %v1902 = vadd.f32 %v1684, %v1835
        %v1903 = vadd.f32 %v1698, %v1849
        %v1904 = vadd.f32 %v1712, %v1863
        %v1905 = vadd.f32 %v1726, %v1877
        %v1906 = vadd.f32 %v1740, %v1891
        %s1907 = scalar_lea.vmem %s3, 24
        %v1908 = vld [vmem:[%s1907] sm:$0xf]
        %v1909 = vld [vmem:[%s1907 + $0x4] sm:$0xf]
        %v1912 = vunpack.c.l.b16 %v1908
        %v1913 = vunpack.c.l.b16 %v1909
        %v1914 = vpack.c.b16 %v1913, %v1912
        %1915 = vrot.lane.b32.xlu0 %v1446, 100
        %v1916 = vpop.permute.xlu0 %1915
        %1917 = vrot.lane.b32.xlu0 %v1447, 100
        %v1918 = vpop.permute.xlu0 %1917
        %1919 = vrot.lane.b32.xlu0 %v1448, 100
        %v1920 = vpop.permute.xlu0 %1919
        %1921 = vrot.lane.b32.xlu0 %v1449, 100
        %v1922 = vpop.permute.xlu0 %1921
        %1923 = vrot.lane.b32.xlu0 %v1450, 100
        %v1924 = vpop.permute.xlu0 %1923
        %1925 = vrot.lane.b32.xlu0 %v1451, 100
        %v1926 = vpop.permute.xlu0 %1925
        %1927 = vrot.lane.b32.xlu0 %v1452, 100
        %v1928 = vpop.permute.xlu0 %1927
        %vm1929 = vcmask 818176
        %v1930 = vsel %vm1929, %v1916, %v1918
        %v1931 = vsel %vm1929, %v1918, %v1920
        %v1932 = vsel %vm1929, %v1920, %v1922
        %v1933 = vsel %vm1929, %v1922, %v1924
        %v1934 = vsel %vm1929, %v1924, %v1926
        %v1935 = vsel %vm1929, %v1926, %v1928
        %v1937 = vsel %vm1491, %v1914, 0
        %v1940 = vsel %vm1495, %v1930, 0
        %v1943 = vsel %vm1495, %v1931, 0
        %v1946 = vsel %vm1495, %v1932, 0
        %v1949 = vsel %vm1495, %v1933, 0
        %v1952 = vsel %vm1495, %v1934, 0
        %v1955 = vsel %vm1495, %v1935, 0
        %v1958 = vsel %vm1495, %v1928, 0
        %1960 = vmatpush.bf16.msra.mxu0 0
        %1961 = vmatpush.bf16.msra.mxu0 0
        %1962 = vmatpush.bf16.msra.mxu0 0
        %1963 = vmatpush.bf16.msra.mxu0 0
        %1964 = vmatpush.bf16.msra.mxu0 0
        %1965 = vmatpush.bf16.msra.mxu0 0
        %1966 = vmatpush.bf16.msra.mxu0 0
        %1967 = vmatpush.bf16.msra.mxu0 %v1940
        %1968 = vmatmul.bf16.gmra.mxu0 %v1937
        %v1969 = vpop.f32.mrf.mxu0
        %v1970 = vadd.f32 0.0, %v1969
        %v1971 = vpop.f32.mrf.mxu0
        %v1972 = vadd.f32 0.0, %v1971
        %1973 = vdwg.mxu0
        %1974 = vmatpush.bf16.msra.mxu0 0
        %1975 = vmatpush.bf16.msra.mxu0 0
        %1976 = vmatpush.bf16.msra.mxu0 0
        %1977 = vmatpush.bf16.msra.mxu0 0
        %1978 = vmatpush.bf16.msra.mxu0 0
        %1979 = vmatpush.bf16.msra.mxu0 0
        %1980 = vmatpush.bf16.msra.mxu0 0
        %1981 = vmatpush.bf16.msra.mxu0 %v1943
        %1982 = vmatmul.bf16.gmra.mxu0 %v1937
        %v1983 = vpop.f32.mrf.mxu0
        %v1984 = vadd.f32 0.0, %v1983
        %v1985 = vpop.f32.mrf.mxu0
        %v1986 = vadd.f32 0.0, %v1985
        %1987 = vdwg.mxu0
        %1988 = vmatpush.bf16.msra.mxu0 0
        %1989 = vmatpush.bf16.msra.mxu0 0
        %1990 = vmatpush.bf16.msra.mxu0 0
        %1991 = vmatpush.bf16.msra.mxu0 0
        %1992 = vmatpush.bf16.msra.mxu0 0
        %1993 = vmatpush.bf16.msra.mxu0 0
        %1994 = vmatpush.bf16.msra.mxu0 0
        %1995 = vmatpush.bf16.msra.mxu0 %v1946
        %1996 = vmatmul.bf16.gmra.mxu0 %v1937
        %v1997 = vpop.f32.mrf.mxu0
        %v1998 = vadd.f32 0.0, %v1997
        %v1999 = vpop.f32.mrf.mxu0
        %v2000 = vadd.f32 0.0, %v1999
        %2001 = vdwg.mxu0
        %2002 = vmatpush.bf16.msra.mxu0 0
        %2003 = vmatpush.bf16.msra.mxu0 0
        %2004 = vmatpush.bf16.msra.mxu0 0
        %2005 = vmatpush.bf16.msra.mxu0 0
        %2006 = vmatpush.bf16.msra.mxu0 0
        %2007 = vmatpush.bf16.msra.mxu0 0
        %2008 = vmatpush.bf16.msra.mxu0 0
        %2009 = vmatpush.bf16.msra.mxu0 %v1949
        %2010 = vmatmul.bf16.gmra.mxu0 %v1937
        %v2011 = vpop.f32.mrf.mxu0
        %v2012 = vadd.f32 0.0, %v2011
        %v2013 = vpop.f32.mrf.mxu0
        %v2014 = vadd.f32 0.0, %v2013
        %2015 = vdwg.mxu0
        %2016 = vmatpush.bf16.msra.mxu0 0
        %2017 = vmatpush.bf16.msra.mxu0 0
        %2018 = vmatpush.bf16.msra.mxu0 0
        %2019 = vmatpush.bf16.msra.mxu0 0
        %2020 = vmatpush.bf16.msra.mxu0 0
        %2021 = vmatpush.bf16.msra.mxu0 0
        %2022 = vmatpush.bf16.msra.mxu0 0
        %2023 = vmatpush.bf16.msra.mxu0 %v1952
        %2024 = vmatmul.bf16.gmra.mxu0 %v1937
        %v2025 = vpop.f32.mrf.mxu0
        %v2026 = vadd.f32 0.0, %v2025
        %v2027 = vpop.f32.mrf.mxu0
        %v2028 = vadd.f32 0.0, %v2027
        %2029 = vdwg.mxu0
        %2030 = vmatpush.bf16.msra.mxu0 0
        %2031 = vmatpush.bf16.msra.mxu0 0
        %2032 = vmatpush.bf16.msra.mxu0 0
        %2033 = vmatpush.bf16.msra.mxu0 0
        %2034 = vmatpush.bf16.msra.mxu0 0
        %2035 = vmatpush.bf16.msra.mxu0 0
        %2036 = vmatpush.bf16.msra.mxu0 0
        %2037 = vmatpush.bf16.msra.mxu0 %v1955
        %2038 = vmatmul.bf16.gmra.mxu0 %v1937
        %v2039 = vpop.f32.mrf.mxu0
        %v2040 = vadd.f32 0.0, %v2039
        %v2041 = vpop.f32.mrf.mxu0
        %v2042 = vadd.f32 0.0, %v2041
        %2043 = vdwg.mxu0
        %2044 = vmatpush.bf16.msra.mxu0 0
        %2045 = vmatpush.bf16.msra.mxu0 0
        %2046 = vmatpush.bf16.msra.mxu0 0
        %2047 = vmatpush.bf16.msra.mxu0 0
        %2048 = vmatpush.bf16.msra.mxu0 0
        %2049 = vmatpush.bf16.msra.mxu0 0
        %2050 = vmatpush.bf16.msra.mxu0 0
        %2051 = vmatpush.bf16.msra.mxu0 %v1958
        %2052 = vmatmul.bf16.gmra.mxu0 %v1937
        %v2053 = vpop.f32.mrf.mxu0
        %v2054 = vadd.f32 0.0, %v2053
        %v2055 = vpop.f32.mrf.mxu0
        %v2056 = vadd.f32 0.0, %v2055
        %2057 = vdwg.mxu0
        %v2058 = vadd.f32 %v1893, %v1970
        %v2059 = vadd.f32 %v1894, %v1984
        %v2060 = vadd.f32 %v1895, %v1998
        %v2061 = vadd.f32 %v1896, %v2012
        %v2062 = vadd.f32 %v1897, %v2026
        %v2063 = vadd.f32 %v1898, %v2040
        %v2064 = vadd.f32 %v1899, %v2054
        %v2065 = vadd.f32 %v1900, %v1972
        %v2066 = vadd.f32 %v1901, %v1986
        %v2067 = vadd.f32 %v1902, %v2000
        %v2068 = vadd.f32 %v1903, %v2014
        %v2069 = vadd.f32 %v1904, %v2028
        %v2070 = vadd.f32 %v1905, %v2042
        %v2071 = vadd.f32 %v1906, %v2056
        %s2072 = scalar_lea.vmem %s3, 32
        %v2073 = vld [vmem:[%s2072] sm:$0xf]
        %v2074 = vld [vmem:[%s2072 + $0x4] sm:$0xf]
        %v2077 = vunpack.c.l.b16 %v2073
        %v2078 = vunpack.c.l.b16 %v2074
        %v2079 = vpack.c.b16 %v2078, %v2077
        %2080 = vrot.lane.b32.xlu0 %v1446, 99
        %v2081 = vpop.permute.xlu0 %2080
        %2082 = vrot.lane.b32.xlu0 %v1447, 99
        %v2083 = vpop.permute.xlu0 %2082
        %2084 = vrot.lane.b32.xlu0 %v1448, 99
        %v2085 = vpop.permute.xlu0 %2084
        %2086 = vrot.lane.b32.xlu0 %v1449, 99
        %v2087 = vpop.permute.xlu0 %2086
        %2088 = vrot.lane.b32.xlu0 %v1450, 99
        %v2089 = vpop.permute.xlu0 %2088
        %2090 = vrot.lane.b32.xlu0 %v1451, 99
        %v2091 = vpop.permute.xlu0 %2090
        %2092 = vrot.lane.b32.xlu0 %v1452, 99
        %v2093 = vpop.permute.xlu0 %2092
        %vm2094 = vcmask 809984
        %v2095 = vsel %vm2094, %v2081, %v2083
        %v2096 = vsel %vm2094, %v2083, %v2085
        %v2097 = vsel %vm2094, %v2085, %v2087
        %v2098 = vsel %vm2094, %v2087, %v2089
        %v2099 = vsel %vm2094, %v2089, %v2091
        %v2100 = vsel %vm2094, %v2091, %v2093
        %v2102 = vsel %vm1491, %v2079, 0
        %v2105 = vsel %vm1495, %v2095, 0
        %v2108 = vsel %vm1495, %v2096, 0
        %v2111 = vsel %vm1495, %v2097, 0
        %v2114 = vsel %vm1495, %v2098, 0
        %v2117 = vsel %vm1495, %v2099, 0
        %v2120 = vsel %vm1495, %v2100, 0
        %v2123 = vsel %vm1495, %v2093, 0
        %2125 = vmatpush.bf16.msra.mxu0 0
        %2126 = vmatpush.bf16.msra.mxu0 0
        %2127 = vmatpush.bf16.msra.mxu0 0
        %2128 = vmatpush.bf16.msra.mxu0 0
        %2129 = vmatpush.bf16.msra.mxu0 0
        %2130 = vmatpush.bf16.msra.mxu0 0
        %2131 = vmatpush.bf16.msra.mxu0 0
        %2132 = vmatpush.bf16.msra.mxu0 %v2105
        %2133 = vmatmul.bf16.gmra.mxu0 %v2102
        %v2134 = vpop.f32.mrf.mxu0
        %v2135 = vadd.f32 0.0, %v2134
        %v2136 = vpop.f32.mrf.mxu0
        %v2137 = vadd.f32 0.0, %v2136
        %2138 = vdwg.mxu0
        %2139 = vmatpush.bf16.msra.mxu0 0
        %2140 = vmatpush.bf16.msra.mxu0 0
        %2141 = vmatpush.bf16.msra.mxu0 0
        %2142 = vmatpush.bf16.msra.mxu0 0
        %2143 = vmatpush.bf16.msra.mxu0 0
        %2144 = vmatpush.bf16.msra.mxu0 0
        %2145 = vmatpush.bf16.msra.mxu0 0
        %2146 = vmatpush.bf16.msra.mxu0 %v2108
        %2147 = vmatmul.bf16.gmra.mxu0 %v2102
        %v2148 = vpop.f32.mrf.mxu0
        %v2149 = vadd.f32 0.0, %v2148
        %v2150 = vpop.f32.mrf.mxu0
        %v2151 = vadd.f32 0.0, %v2150
        %2152 = vdwg.mxu0
        %2153 = vmatpush.bf16.msra.mxu0 0
        %2154 = vmatpush.bf16.msra.mxu0 0
        %2155 = vmatpush.bf16.msra.mxu0 0
        %2156 = vmatpush.bf16.msra.mxu0 0
        %2157 = vmatpush.bf16.msra.mxu0 0
        %2158 = vmatpush.bf16.msra.mxu0 0
        %2159 = vmatpush.bf16.msra.mxu0 0
        %2160 = vmatpush.bf16.msra.mxu0 %v2111
        %2161 = vmatmul.bf16.gmra.mxu0 %v2102
        %v2162 = vpop.f32.mrf.mxu0
        %v2163 = vadd.f32 0.0, %v2162
        %v2164 = vpop.f32.mrf.mxu0
        %v2165 = vadd.f32 0.0, %v2164
        %2166 = vdwg.mxu0
        %2167 = vmatpush.bf16.msra.mxu0 0
        %2168 = vmatpush.bf16.msra.mxu0 0
        %2169 = vmatpush.bf16.msra.mxu0 0
        %2170 = vmatpush.bf16.msra.mxu0 0
        %2171 = vmatpush.bf16.msra.mxu0 0
        %2172 = vmatpush.bf16.msra.mxu0 0
        %2173 = vmatpush.bf16.msra.mxu0 0
        %2174 = vmatpush.bf16.msra.mxu0 %v2114
        %2175 = vmatmul.bf16.gmra.mxu0 %v2102
        %v2176 = vpop.f32.mrf.mxu0
        %v2177 = vadd.f32 0.0, %v2176
        %v2178 = vpop.f32.mrf.mxu0
        %v2179 = vadd.f32 0.0, %v2178
        %2180 = vdwg.mxu0
        %2181 = vmatpush.bf16.msra.mxu0 0
        %2182 = vmatpush.bf16.msra.mxu0 0
        %2183 = vmatpush.bf16.msra.mxu0 0
        %2184 = vmatpush.bf16.msra.mxu0 0
        %2185 = vmatpush.bf16.msra.mxu0 0
        %2186 = vmatpush.bf16.msra.mxu0 0
        %2187 = vmatpush.bf16.msra.mxu0 0
        %2188 = vmatpush.bf16.msra.mxu0 %v2117
        %2189 = vmatmul.bf16.gmra.mxu0 %v2102
        %v2190 = vpop.f32.mrf.mxu0
        %v2191 = vadd.f32 0.0, %v2190
        %v2192 = vpop.f32.mrf.mxu0
        %v2193 = vadd.f32 0.0, %v2192
        %2194 = vdwg.mxu0
        %2195 = vmatpush.bf16.msra.mxu0 0
        %2196 = vmatpush.bf16.msra.mxu0 0
        %2197 = vmatpush.bf16.msra.mxu0 0
        %2198 = vmatpush.bf16.msra.mxu0 0
        %2199 = vmatpush.bf16.msra.mxu0 0
        %2200 = vmatpush.bf16.msra.mxu0 0
        %2201 = vmatpush.bf16.msra.mxu0 0
        %2202 = vmatpush.bf16.msra.mxu0 %v2120
        %2203 = vmatmul.bf16.gmra.mxu0 %v2102
        %v2204 = vpop.f32.mrf.mxu0
        %v2205 = vadd.f32 0.0, %v2204
        %v2206 = vpop.f32.mrf.mxu0
        %v2207 = vadd.f32 0.0, %v2206
        %2208 = vdwg.mxu0
        %2209 = vmatpush.bf16.msra.mxu0 0
        %2210 = vmatpush.bf16.msra.mxu0 0
        %2211 = vmatpush.bf16.msra.mxu0 0
        %2212 = vmatpush.bf16.msra.mxu0 0
        %2213 = vmatpush.bf16.msra.mxu0 0
        %2214 = vmatpush.bf16.msra.mxu0 0
        %2215 = vmatpush.bf16.msra.mxu0 0
        %2216 = vmatpush.bf16.msra.mxu0 %v2123
        %2217 = vmatmul.bf16.gmra.mxu0 %v2102
        %v2218 = vpop.f32.mrf.mxu0
        %v2219 = vadd.f32 0.0, %v2218
        %v2220 = vpop.f32.mrf.mxu0
        %v2221 = vadd.f32 0.0, %v2220
        %2222 = vdwg.mxu0
        %v2223 = vadd.f32 %v2058, %v2135
        %v2224 = vadd.f32 %v2059, %v2149
        %v2225 = vadd.f32 %v2060, %v2163
        %v2226 = vadd.f32 %v2061, %v2177
        %v2227 = vadd.f32 %v2062, %v2191
        %v2228 = vadd.f32 %v2063, %v2205
        %v2229 = vadd.f32 %v2064, %v2219
        %v2230 = vadd.f32 %v2065, %v2137
        %v2231 = vadd.f32 %v2066, %v2151
        %v2232 = vadd.f32 %v2067, %v2165
        %v2233 = vadd.f32 %v2068, %v2179
        %v2234 = vadd.f32 %v2069, %v2193
        %v2235 = vadd.f32 %v2070, %v2207
        %v2236 = vadd.f32 %v2071, %v2221
        %s2237 = scalar_lea.vmem %s3, 40
        %v2238 = vld [vmem:[%s2237] sm:$0xf]
        %v2239 = vld [vmem:[%s2237 + $0x4] sm:$0xf]
        %v2242 = vunpack.c.l.b16 %v2238
        %v2243 = vunpack.c.l.b16 %v2239
        %v2244 = vpack.c.b16 %v2243, %v2242
        %2245 = vrot.lane.b32.xlu0 %v1446, 98
        %v2246 = vpop.permute.xlu0 %2245
        %2247 = vrot.lane.b32.xlu0 %v1447, 98
        %v2248 = vpop.permute.xlu0 %2247
        %2249 = vrot.lane.b32.xlu0 %v1448, 98
        %v2250 = vpop.permute.xlu0 %2249
        %2251 = vrot.lane.b32.xlu0 %v1449, 98
        %v2252 = vpop.permute.xlu0 %2251
        %2253 = vrot.lane.b32.xlu0 %v1450, 98
        %v2254 = vpop.permute.xlu0 %2253
        %2255 = vrot.lane.b32.xlu0 %v1451, 98
        %v2256 = vpop.permute.xlu0 %2255
        %2257 = vrot.lane.b32.xlu0 %v1452, 98
        %v2258 = vpop.permute.xlu0 %2257
        %vm2259 = vcmask 801792
        %v2260 = vsel %vm2259, %v2246, %v2248
        %v2261 = vsel %vm2259, %v2248, %v2250
        %v2262 = vsel %vm2259, %v2250, %v2252
        %v2263 = vsel %vm2259, %v2252, %v2254
        %v2264 = vsel %vm2259, %v2254, %v2256
        %v2265 = vsel %vm2259, %v2256, %v2258
        %v2267 = vsel %vm1491, %v2244, 0
        %v2270 = vsel %vm1495, %v2260, 0
        %v2273 = vsel %vm1495, %v2261, 0
        %v2276 = vsel %vm1495, %v2262, 0
        %v2279 = vsel %vm1495, %v2263, 0
        %v2282 = vsel %vm1495, %v2264, 0
        %v2285 = vsel %vm1495, %v2265, 0
        %v2288 = vsel %vm1495, %v2258, 0
        %2290 = vmatpush.bf16.msra.mxu0 0
        %2291 = vmatpush.bf16.msra.mxu0 0
        %2292 = vmatpush.bf16.msra.mxu0 0
        %2293 = vmatpush.bf16.msra.mxu0 0
        %2294 = vmatpush.bf16.msra.mxu0 0
        %2295 = vmatpush.bf16.msra.mxu0 0
        %2296 = vmatpush.bf16.msra.mxu0 0
        %2297 = vmatpush.bf16.msra.mxu0 %v2270
        %2298 = vmatmul.bf16.gmra.mxu0 %v2267
        %v2299 = vpop.f32.mrf.mxu0
        %v2300 = vadd.f32 0.0, %v2299
        %v2301 = vpop.f32.mrf.mxu0
        %v2302 = vadd.f32 0.0, %v2301
        %2303 = vdwg.mxu0
        %2304 = vmatpush.bf16.msra.mxu0 0
        %2305 = vmatpush.bf16.msra.mxu0 0
        %2306 = vmatpush.bf16.msra.mxu0 0
        %2307 = vmatpush.bf16.msra.mxu0 0
        %2308 = vmatpush.bf16.msra.mxu0 0
        %2309 = vmatpush.bf16.msra.mxu0 0
        %2310 = vmatpush.bf16.msra.mxu0 0
        %2311 = vmatpush.bf16.msra.mxu0 %v2273
        %2312 = vmatmul.bf16.gmra.mxu0 %v2267
        %v2313 = vpop.f32.mrf.mxu0
        %v2314 = vadd.f32 0.0, %v2313
        %v2315 = vpop.f32.mrf.mxu0
        %v2316 = vadd.f32 0.0, %v2315
        %2317 = vdwg.mxu0
        %2318 = vmatpush.bf16.msra.mxu0 0
        %2319 = vmatpush.bf16.msra.mxu0 0
        %2320 = vmatpush.bf16.msra.mxu0 0
        %2321 = vmatpush.bf16.msra.mxu0 0
        %2322 = vmatpush.bf16.msra.mxu0 0
        %2323 = vmatpush.bf16.msra.mxu0 0
        %2324 = vmatpush.bf16.msra.mxu0 0
        %2325 = vmatpush.bf16.msra.mxu0 %v2276
        %2326 = vmatmul.bf16.gmra.mxu0 %v2267
        %v2327 = vpop.f32.mrf.mxu0
        %v2328 = vadd.f32 0.0, %v2327
        %v2329 = vpop.f32.mrf.mxu0
        %v2330 = vadd.f32 0.0, %v2329
        %2331 = vdwg.mxu0
        %2332 = vmatpush.bf16.msra.mxu0 0
        %2333 = vmatpush.bf16.msra.mxu0 0
        %2334 = vmatpush.bf16.msra.mxu0 0
        %2335 = vmatpush.bf16.msra.mxu0 0
        %2336 = vmatpush.bf16.msra.mxu0 0
        %2337 = vmatpush.bf16.msra.mxu0 0
        %2338 = vmatpush.bf16.msra.mxu0 0
        %2339 = vmatpush.bf16.msra.mxu0 %v2279
        %2340 = vmatmul.bf16.gmra.mxu0 %v2267
        %v2341 = vpop.f32.mrf.mxu0
        %v2342 = vadd.f32 0.0, %v2341
        %v2343 = vpop.f32.mrf.mxu0
        %v2344 = vadd.f32 0.0, %v2343
        %2345 = vdwg.mxu0
        %2346 = vmatpush.bf16.msra.mxu0 0
        %2347 = vmatpush.bf16.msra.mxu0 0
        %2348 = vmatpush.bf16.msra.mxu0 0
        %2349 = vmatpush.bf16.msra.mxu0 0
        %2350 = vmatpush.bf16.msra.mxu0 0
        %2351 = vmatpush.bf16.msra.mxu0 0
        %2352 = vmatpush.bf16.msra.mxu0 0
        %2353 = vmatpush.bf16.msra.mxu0 %v2282
        %2354 = vmatmul.bf16.gmra.mxu0 %v2267
        %v2355 = vpop.f32.mrf.mxu0
        %v2356 = vadd.f32 0.0, %v2355
        %v2357 = vpop.f32.mrf.mxu0
        %v2358 = vadd.f32 0.0, %v2357
        %2359 = vdwg.mxu0
        %2360 = vmatpush.bf16.msra.mxu0 0
        %2361 = vmatpush.bf16.msra.mxu0 0
        %2362 = vmatpush.bf16.msra.mxu0 0
        %2363 = vmatpush.bf16.msra.mxu0 0
        %2364 = vmatpush.bf16.msra.mxu0 0
        %2365 = vmatpush.bf16.msra.mxu0 0
        %2366 = vmatpush.bf16.msra.mxu0 0
        %2367 = vmatpush.bf16.msra.mxu0 %v2285
        %2368 = vmatmul.bf16.gmra.mxu0 %v2267
        %v2369 = vpop.f32.mrf.mxu0
        %v2370 = vadd.f32 0.0, %v2369
        %v2371 = vpop.f32.mrf.mxu0
        %v2372 = vadd.f32 0.0, %v2371
        %2373 = vdwg.mxu0
        %2374 = vmatpush.bf16.msra.mxu0 0
        %2375 = vmatpush.bf16.msra.mxu0 0
        %2376 = vmatpush.bf16.msra.mxu0 0
        %2377 = vmatpush.bf16.msra.mxu0 0
        %2378 = vmatpush.bf16.msra.mxu0 0
        %2379 = vmatpush.bf16.msra.mxu0 0
        %2380 = vmatpush.bf16.msra.mxu0 0
        %2381 = vmatpush.bf16.msra.mxu0 %v2288
        %2382 = vmatmul.bf16.gmra.mxu0 %v2267
        %v2383 = vpop.f32.mrf.mxu0
        %v2384 = vadd.f32 0.0, %v2383
        %v2385 = vpop.f32.mrf.mxu0
        %v2386 = vadd.f32 0.0, %v2385
        %2387 = vdwg.mxu0
        %v2388 = vadd.f32 %v2223, %v2300
        %v2389 = vadd.f32 %v2224, %v2314
        %v2390 = vadd.f32 %v2225, %v2328
        %v2391 = vadd.f32 %v2226, %v2342
        %v2392 = vadd.f32 %v2227, %v2356
        %v2393 = vadd.f32 %v2228, %v2370
        %v2394 = vadd.f32 %v2229, %v2384
        %v2395 = vadd.f32 %v2230, %v2302
        %v2396 = vadd.f32 %v2231, %v2316
        %v2397 = vadd.f32 %v2232, %v2330
        %v2398 = vadd.f32 %v2233, %v2344
        %v2399 = vadd.f32 %v2234, %v2358
        %v2400 = vadd.f32 %v2235, %v2372
        %v2401 = vadd.f32 %v2236, %v2386
        %s2402 = scalar_lea.vmem %s3, 48
        %v2403 = vld [vmem:[%s2402] sm:$0xf]
        %v2404 = vld [vmem:[%s2402 + $0x4] sm:$0xf]
        %v2407 = vunpack.c.l.b16 %v2403
        %v2408 = vunpack.c.l.b16 %v2404
        %v2409 = vpack.c.b16 %v2408, %v2407
        %2410 = vrot.lane.b32.xlu0 %v1446, 72
        %v2411 = vpop.permute.xlu0 %2410
        %2412 = vrot.lane.b32.xlu0 %v1447, 72
        %v2413 = vpop.permute.xlu0 %2412
        %2414 = vrot.lane.b32.xlu0 %v1448, 72
        %v2415 = vpop.permute.xlu0 %2414
        %2416 = vrot.lane.b32.xlu0 %v1449, 72
        %v2417 = vpop.permute.xlu0 %2416
        %2418 = vrot.lane.b32.xlu0 %v1450, 72
        %v2419 = vpop.permute.xlu0 %2418
        %2420 = vrot.lane.b32.xlu0 %v1451, 72
        %v2421 = vpop.permute.xlu0 %2420
        %2422 = vrot.lane.b32.xlu0 %v1452, 72
        %v2423 = vpop.permute.xlu0 %2422
        %vm2424 = vcmask 588800
        %v2425 = vsel %vm2424, %v2411, %v2413
        %v2426 = vsel %vm2424, %v2413, %v2415
        %v2427 = vsel %vm2424, %v2415, %v2417
        %v2428 = vsel %vm2424, %v2417, %v2419
        %v2429 = vsel %vm2424, %v2419, %v2421
        %v2430 = vsel %vm2424, %v2421, %v2423
        %v2432 = vsel %vm1491, %v2409, 0
        %v2435 = vsel %vm1495, %v2425, 0
        %v2438 = vsel %vm1495, %v2426, 0
        %v2441 = vsel %vm1495, %v2427, 0
        %v2444 = vsel %vm1495, %v2428, 0
        %v2447 = vsel %vm1495, %v2429, 0
        %v2450 = vsel %vm1495, %v2430, 0
        %v2453 = vsel %vm1495, %v2423, 0
        %2455 = vmatpush.bf16.msra.mxu0 0
        %2456 = vmatpush.bf16.msra.mxu0 0
        %2457 = vmatpush.bf16.msra.mxu0 0
        %2458 = vmatpush.bf16.msra.mxu0 0
        %2459 = vmatpush.bf16.msra.mxu0 0
        %2460 = vmatpush.bf16.msra.mxu0 0
        %2461 = vmatpush.bf16.msra.mxu0 0
        %2462 = vmatpush.bf16.msra.mxu0 %v2435
        %2463 = vmatmul.bf16.gmra.mxu0 %v2432
        %v2464 = vpop.f32.mrf.mxu0
        %v2465 = vadd.f32 0.0, %v2464
        %v2466 = vpop.f32.mrf.mxu0
        %v2467 = vadd.f32 0.0, %v2466
        %2468 = vdwg.mxu0
        %2469 = vmatpush.bf16.msra.mxu0 0
        %2470 = vmatpush.bf16.msra.mxu0 0
        %2471 = vmatpush.bf16.msra.mxu0 0
        %2472 = vmatpush.bf16.msra.mxu0 0
        %2473 = vmatpush.bf16.msra.mxu0 0
        %2474 = vmatpush.bf16.msra.mxu0 0
        %2475 = vmatpush.bf16.msra.mxu0 0
        %2476 = vmatpush.bf16.msra.mxu0 %v2438
        %2477 = vmatmul.bf16.gmra.mxu0 %v2432
        %v2478 = vpop.f32.mrf.mxu0
        %v2479 = vadd.f32 0.0, %v2478
        %v2480 = vpop.f32.mrf.mxu0
        %v2481 = vadd.f32 0.0, %v2480
        %2482 = vdwg.mxu0
        %2483 = vmatpush.bf16.msra.mxu0 0
        %2484 = vmatpush.bf16.msra.mxu0 0
        %2485 = vmatpush.bf16.msra.mxu0 0
        %2486 = vmatpush.bf16.msra.mxu0 0
        %2487 = vmatpush.bf16.msra.mxu0 0
        %2488 = vmatpush.bf16.msra.mxu0 0
        %2489 = vmatpush.bf16.msra.mxu0 0
        %2490 = vmatpush.bf16.msra.mxu0 %v2441
        %2491 = vmatmul.bf16.gmra.mxu0 %v2432
        %v2492 = vpop.f32.mrf.mxu0
        %v2493 = vadd.f32 0.0, %v2492
        %v2494 = vpop.f32.mrf.mxu0
        %v2495 = vadd.f32 0.0, %v2494
        %2496 = vdwg.mxu0
        %2497 = vmatpush.bf16.msra.mxu0 0
        %2498 = vmatpush.bf16.msra.mxu0 0
        %2499 = vmatpush.bf16.msra.mxu0 0
        %2500 = vmatpush.bf16.msra.mxu0 0
        %2501 = vmatpush.bf16.msra.mxu0 0
        %2502 = vmatpush.bf16.msra.mxu0 0
        %2503 = vmatpush.bf16.msra.mxu0 0
        %2504 = vmatpush.bf16.msra.mxu0 %v2444
        %2505 = vmatmul.bf16.gmra.mxu0 %v2432
        %v2506 = vpop.f32.mrf.mxu0
        %v2507 = vadd.f32 0.0, %v2506
        %v2508 = vpop.f32.mrf.mxu0
        %v2509 = vadd.f32 0.0, %v2508
        %2510 = vdwg.mxu0
        %2511 = vmatpush.bf16.msra.mxu0 0
        %2512 = vmatpush.bf16.msra.mxu0 0
        %2513 = vmatpush.bf16.msra.mxu0 0
        %2514 = vmatpush.bf16.msra.mxu0 0
        %2515 = vmatpush.bf16.msra.mxu0 0
        %2516 = vmatpush.bf16.msra.mxu0 0
        %2517 = vmatpush.bf16.msra.mxu0 0
        %2518 = vmatpush.bf16.msra.mxu0 %v2447
        %2519 = vmatmul.bf16.gmra.mxu0 %v2432
        %v2520 = vpop.f32.mrf.mxu0
        %v2521 = vadd.f32 0.0, %v2520
        %v2522 = vpop.f32.mrf.mxu0
        %v2523 = vadd.f32 0.0, %v2522
        %2524 = vdwg.mxu0
        %2525 = vmatpush.bf16.msra.mxu0 0
        %2526 = vmatpush.bf16.msra.mxu0 0
        %2527 = vmatpush.bf16.msra.mxu0 0
        %2528 = vmatpush.bf16.msra.mxu0 0
        %2529 = vmatpush.bf16.msra.mxu0 0
        %2530 = vmatpush.bf16.msra.mxu0 0
        %2531 = vmatpush.bf16.msra.mxu0 0
        %2532 = vmatpush.bf16.msra.mxu0 %v2450
        %2533 = vmatmul.bf16.gmra.mxu0 %v2432
        %v2534 = vpop.f32.mrf.mxu0
        %v2535 = vadd.f32 0.0, %v2534
        %v2536 = vpop.f32.mrf.mxu0
        %v2537 = vadd.f32 0.0, %v2536
        %2538 = vdwg.mxu0
        %2539 = vmatpush.bf16.msra.mxu0 0
        %2540 = vmatpush.bf16.msra.mxu0 0
        %2541 = vmatpush.bf16.msra.mxu0 0
        %2542 = vmatpush.bf16.msra.mxu0 0
        %2543 = vmatpush.bf16.msra.mxu0 0
        %2544 = vmatpush.bf16.msra.mxu0 0
        %2545 = vmatpush.bf16.msra.mxu0 0
        %2546 = vmatpush.bf16.msra.mxu0 %v2453
        %2547 = vmatmul.bf16.gmra.mxu0 %v2432
        %v2548 = vpop.f32.mrf.mxu0
        %v2549 = vadd.f32 0.0, %v2548
        %v2550 = vpop.f32.mrf.mxu0
        %v2551 = vadd.f32 0.0, %v2550
        %2552 = vdwg.mxu0
        %v2553 = vadd.f32 %v2388, %v2465
        %v2554 = vadd.f32 %v2389, %v2479
        %v2555 = vadd.f32 %v2390, %v2493
        %v2556 = vadd.f32 %v2391, %v2507
        %v2557 = vadd.f32 %v2392, %v2521
        %v2558 = vadd.f32 %v2393, %v2535
        %v2559 = vadd.f32 %v2394, %v2549
        %v2560 = vadd.f32 %v2395, %v2467
        %v2561 = vadd.f32 %v2396, %v2481
        %v2562 = vadd.f32 %v2397, %v2495
        %v2563 = vadd.f32 %v2398, %v2509
        %v2564 = vadd.f32 %v2399, %v2523
        %v2565 = vadd.f32 %v2400, %v2537
        %v2566 = vadd.f32 %v2401, %v2551
        %s2567 = scalar_lea.vmem %s3, 56
        %v2568 = vld [vmem:[%s2567] sm:$0xf]
        %v2569 = vld [vmem:[%s2567 + $0x4] sm:$0xf]
        %v2572 = vunpack.c.l.b16 %v2568
        %v2573 = vunpack.c.l.b16 %v2569
        %v2574 = vpack.c.b16 %v2573, %v2572
        %2575 = vrot.lane.b32.xlu0 %v1446, 71
        %v2576 = vpop.permute.xlu0 %2575
        %2577 = vrot.lane.b32.xlu0 %v1447, 71
        %v2578 = vpop.permute.xlu0 %2577
        %2579 = vrot.lane.b32.xlu0 %v1448, 71
        %v2580 = vpop.permute.xlu0 %2579
        %2581 = vrot.lane.b32.xlu0 %v1449, 71
        %v2582 = vpop.permute.xlu0 %2581
        %2583 = vrot.lane.b32.xlu0 %v1450, 71
        %v2584 = vpop.permute.xlu0 %2583
        %2585 = vrot.lane.b32.xlu0 %v1451, 71
        %v2586 = vpop.permute.xlu0 %2585
        %2587 = vrot.lane.b32.xlu0 %v1452, 71
        %v2588 = vpop.permute.xlu0 %2587
        %vm2589 = vcmask 580608
        %v2590 = vsel %vm2589, %v2576, %v2578
        %v2591 = vsel %vm2589, %v2578, %v2580
        %v2592 = vsel %vm2589, %v2580, %v2582
        %v2593 = vsel %vm2589, %v2582, %v2584
        %v2594 = vsel %vm2589, %v2584, %v2586
        %v2595 = vsel %vm2589, %v2586, %v2588
        %v2597 = vsel %vm1491, %v2574, 0
        %v2600 = vsel %vm1495, %v2590, 0
        %v2603 = vsel %vm1495, %v2591, 0
        %v2606 = vsel %vm1495, %v2592, 0
        %v2609 = vsel %vm1495, %v2593, 0
        %v2612 = vsel %vm1495, %v2594, 0
        %v2615 = vsel %vm1495, %v2595, 0
        %v2618 = vsel %vm1495, %v2588, 0
        %2620 = vmatpush.bf16.msra.mxu0 0
        %2621 = vmatpush.bf16.msra.mxu0 0
        %2622 = vmatpush.bf16.msra.mxu0 0
        %2623 = vmatpush.bf16.msra.mxu0 0
        %2624 = vmatpush.bf16.msra.mxu0 0
        %2625 = vmatpush.bf16.msra.mxu0 0
        %2626 = vmatpush.bf16.msra.mxu0 0
        %2627 = vmatpush.bf16.msra.mxu0 %v2600
        %2628 = vmatmul.bf16.gmra.mxu0 %v2597
        %v2629 = vpop.f32.mrf.mxu0
        %v2630 = vadd.f32 0.0, %v2629
        %v2631 = vpop.f32.mrf.mxu0
        %v2632 = vadd.f32 0.0, %v2631
        %2633 = vdwg.mxu0
        %2634 = vmatpush.bf16.msra.mxu0 0
        %2635 = vmatpush.bf16.msra.mxu0 0
        %2636 = vmatpush.bf16.msra.mxu0 0
        %2637 = vmatpush.bf16.msra.mxu0 0
        %2638 = vmatpush.bf16.msra.mxu0 0
        %2639 = vmatpush.bf16.msra.mxu0 0
        %2640 = vmatpush.bf16.msra.mxu0 0
        %2641 = vmatpush.bf16.msra.mxu0 %v2603
        %2642 = vmatmul.bf16.gmra.mxu0 %v2597
        %v2643 = vpop.f32.mrf.mxu0
        %v2644 = vadd.f32 0.0, %v2643
        %v2645 = vpop.f32.mrf.mxu0
        %v2646 = vadd.f32 0.0, %v2645
        %2647 = vdwg.mxu0
        %2648 = vmatpush.bf16.msra.mxu0 0
        %2649 = vmatpush.bf16.msra.mxu0 0
        %2650 = vmatpush.bf16.msra.mxu0 0
        %2651 = vmatpush.bf16.msra.mxu0 0
        %2652 = vmatpush.bf16.msra.mxu0 0
        %2653 = vmatpush.bf16.msra.mxu0 0
        %2654 = vmatpush.bf16.msra.mxu0 0
        %2655 = vmatpush.bf16.msra.mxu0 %v2606
        %2656 = vmatmul.bf16.gmra.mxu0 %v2597
        %v2657 = vpop.f32.mrf.mxu0
        %v2658 = vadd.f32 0.0, %v2657
        %v2659 = vpop.f32.mrf.mxu0
        %v2660 = vadd.f32 0.0, %v2659
        %2661 = vdwg.mxu0
        %2662 = vmatpush.bf16.msra.mxu0 0
        %2663 = vmatpush.bf16.msra.mxu0 0
        %2664 = vmatpush.bf16.msra.mxu0 0
        %2665 = vmatpush.bf16.msra.mxu0 0
        %2666 = vmatpush.bf16.msra.mxu0 0
        %2667 = vmatpush.bf16.msra.mxu0 0
        %2668 = vmatpush.bf16.msra.mxu0 0
        %2669 = vmatpush.bf16.msra.mxu0 %v2609
        %2670 = vmatmul.bf16.gmra.mxu0 %v2597
        %v2671 = vpop.f32.mrf.mxu0
        %v2672 = vadd.f32 0.0, %v2671
        %v2673 = vpop.f32.mrf.mxu0
        %v2674 = vadd.f32 0.0, %v2673
        %2675 = vdwg.mxu0
        %2676 = vmatpush.bf16.msra.mxu0 0
        %2677 = vmatpush.bf16.msra.mxu0 0
        %2678 = vmatpush.bf16.msra.mxu0 0
        %2679 = vmatpush.bf16.msra.mxu0 0
        %2680 = vmatpush.bf16.msra.mxu0 0
        %2681 = vmatpush.bf16.msra.mxu0 0
        %2682 = vmatpush.bf16.msra.mxu0 0
        %2683 = vmatpush.bf16.msra.mxu0 %v2612
        %2684 = vmatmul.bf16.gmra.mxu0 %v2597
        %v2685 = vpop.f32.mrf.mxu0
        %v2686 = vadd.f32 0.0, %v2685
        %v2687 = vpop.f32.mrf.mxu0
        %v2688 = vadd.f32 0.0, %v2687
        %2689 = vdwg.mxu0
        %2690 = vmatpush.bf16.msra.mxu0 0
        %2691 = vmatpush.bf16.msra.mxu0 0
        %2692 = vmatpush.bf16.msra.mxu0 0
        %2693 = vmatpush.bf16.msra.mxu0 0
        %2694 = vmatpush.bf16.msra.mxu0 0
        %2695 = vmatpush.bf16.msra.mxu0 0
        %2696 = vmatpush.bf16.msra.mxu0 0
        %2697 = vmatpush.bf16.msra.mxu0 %v2615
        %2698 = vmatmul.bf16.gmra.mxu0 %v2597
        %v2699 = vpop.f32.mrf.mxu0
        %v2700 = vadd.f32 0.0, %v2699
        %v2701 = vpop.f32.mrf.mxu0
        %v2702 = vadd.f32 0.0, %v2701
        %2703 = vdwg.mxu0
        %2704 = vmatpush.bf16.msra.mxu0 0
        %2705 = vmatpush.bf16.msra.mxu0 0
        %2706 = vmatpush.bf16.msra.mxu0 0
        %2707 = vmatpush.bf16.msra.mxu0 0
        %2708 = vmatpush.bf16.msra.mxu0 0
        %2709 = vmatpush.bf16.msra.mxu0 0
        %2710 = vmatpush.bf16.msra.mxu0 0
        %2711 = vmatpush.bf16.msra.mxu0 %v2618
        %2712 = vmatmul.bf16.gmra.mxu0 %v2597
        %v2713 = vpop.f32.mrf.mxu0
        %v2714 = vadd.f32 0.0, %v2713
        %v2715 = vpop.f32.mrf.mxu0
        %v2716 = vadd.f32 0.0, %v2715
        %2717 = vdwg.mxu0
        %v2718 = vadd.f32 %v2553, %v2630
        %v2719 = vadd.f32 %v2554, %v2644
        %v2720 = vadd.f32 %v2555, %v2658
        %v2721 = vadd.f32 %v2556, %v2672
        %v2722 = vadd.f32 %v2557, %v2686
        %v2723 = vadd.f32 %v2558, %v2700
        %v2724 = vadd.f32 %v2559, %v2714
        %v2725 = vadd.f32 %v2560, %v2632
        %v2726 = vadd.f32 %v2561, %v2646
        %v2727 = vadd.f32 %v2562, %v2660
        %v2728 = vadd.f32 %v2563, %v2674
        %v2729 = vadd.f32 %v2564, %v2688
        %v2730 = vadd.f32 %v2565, %v2702
        %v2731 = vadd.f32 %v2566, %v2716
        %s2732 = scalar_lea.vmem %s3, 64
        %v2733 = vld [vmem:[%s2732] sm:$0xf]
        %v2734 = vld [vmem:[%s2732 + $0x4] sm:$0xf]
        %v2737 = vunpack.c.l.b16 %v2733
        %v2738 = vunpack.c.l.b16 %v2734
        %v2739 = vpack.c.b16 %v2738, %v2737
        %2740 = vrot.lane.b32.xlu0 %v1446, 70
        %v2741 = vpop.permute.xlu0 %2740
        %2742 = vrot.lane.b32.xlu0 %v1447, 70
        %v2743 = vpop.permute.xlu0 %2742
        %2744 = vrot.lane.b32.xlu0 %v1448, 70
        %v2745 = vpop.permute.xlu0 %2744
        %2746 = vrot.lane.b32.xlu0 %v1449, 70
        %v2747 = vpop.permute.xlu0 %2746
        %2748 = vrot.lane.b32.xlu0 %v1450, 70
        %v2749 = vpop.permute.xlu0 %2748
        %2750 = vrot.lane.b32.xlu0 %v1451, 70
        %v2751 = vpop.permute.xlu0 %2750
        %2752 = vrot.lane.b32.xlu0 %v1452, 70
        %v2753 = vpop.permute.xlu0 %2752
        %vm2754 = vcmask 572416
        %v2755 = vsel %vm2754, %v2741, %v2743
        %v2756 = vsel %vm2754, %v2743, %v2745
        %v2757 = vsel %vm2754, %v2745, %v2747
        %v2758 = vsel %vm2754, %v2747, %v2749
        %v2759 = vsel %vm2754, %v2749, %v2751
        %v2760 = vsel %vm2754, %v2751, %v2753
        %v2762 = vsel %vm1491, %v2739, 0
        %v2765 = vsel %vm1495, %v2755, 0
        %v2768 = vsel %vm1495, %v2756, 0
        %v2771 = vsel %vm1495, %v2757, 0
        %v2774 = vsel %vm1495, %v2758, 0
        %v2777 = vsel %vm1495, %v2759, 0
        %v2780 = vsel %vm1495, %v2760, 0
        %v2783 = vsel %vm1495, %v2753, 0
        %2785 = vmatpush.bf16.msra.mxu0 0
        %2786 = vmatpush.bf16.msra.mxu0 0
        %2787 = vmatpush.bf16.msra.mxu0 0
        %2788 = vmatpush.bf16.msra.mxu0 0
        %2789 = vmatpush.bf16.msra.mxu0 0
        %2790 = vmatpush.bf16.msra.mxu0 0
        %2791 = vmatpush.bf16.msra.mxu0 0
        %2792 = vmatpush.bf16.msra.mxu0 %v2765
        %2793 = vmatmul.bf16.gmra.mxu0 %v2762
        %v2794 = vpop.f32.mrf.mxu0
        %v2795 = vadd.f32 0.0, %v2794
        %v2796 = vpop.f32.mrf.mxu0
        %v2797 = vadd.f32 0.0, %v2796
        %2798 = vdwg.mxu0
        %2799 = vmatpush.bf16.msra.mxu0 0
        %2800 = vmatpush.bf16.msra.mxu0 0
        %2801 = vmatpush.bf16.msra.mxu0 0
        %2802 = vmatpush.bf16.msra.mxu0 0
        %2803 = vmatpush.bf16.msra.mxu0 0
        %2804 = vmatpush.bf16.msra.mxu0 0
        %2805 = vmatpush.bf16.msra.mxu0 0
        %2806 = vmatpush.bf16.msra.mxu0 %v2768
        %2807 = vmatmul.bf16.gmra.mxu0 %v2762
        %v2808 = vpop.f32.mrf.mxu0
        %v2809 = vadd.f32 0.0, %v2808
        %v2810 = vpop.f32.mrf.mxu0
        %v2811 = vadd.f32 0.0, %v2810
        %2812 = vdwg.mxu0
        %2813 = vmatpush.bf16.msra.mxu0 0
        %2814 = vmatpush.bf16.msra.mxu0 0
        %2815 = vmatpush.bf16.msra.mxu0 0
        %2816 = vmatpush.bf16.msra.mxu0 0
        %2817 = vmatpush.bf16.msra.mxu0 0
        %2818 = vmatpush.bf16.msra.mxu0 0
        %2819 = vmatpush.bf16.msra.mxu0 0
        %2820 = vmatpush.bf16.msra.mxu0 %v2771
        %2821 = vmatmul.bf16.gmra.mxu0 %v2762
        %v2822 = vpop.f32.mrf.mxu0
        %v2823 = vadd.f32 0.0, %v2822
        %v2824 = vpop.f32.mrf.mxu0
        %v2825 = vadd.f32 0.0, %v2824
        %2826 = vdwg.mxu0
        %2827 = vmatpush.bf16.msra.mxu0 0
        %2828 = vmatpush.bf16.msra.mxu0 0
        %2829 = vmatpush.bf16.msra.mxu0 0
        %2830 = vmatpush.bf16.msra.mxu0 0
        %2831 = vmatpush.bf16.msra.mxu0 0
        %2832 = vmatpush.bf16.msra.mxu0 0
        %2833 = vmatpush.bf16.msra.mxu0 0
        %2834 = vmatpush.bf16.msra.mxu0 %v2774
        %2835 = vmatmul.bf16.gmra.mxu0 %v2762
        %v2836 = vpop.f32.mrf.mxu0
        %v2837 = vadd.f32 0.0, %v2836
        %v2838 = vpop.f32.mrf.mxu0
        %v2839 = vadd.f32 0.0, %v2838
        %2840 = vdwg.mxu0
        %2841 = vmatpush.bf16.msra.mxu0 0
        %2842 = vmatpush.bf16.msra.mxu0 0
        %2843 = vmatpush.bf16.msra.mxu0 0
        %2844 = vmatpush.bf16.msra.mxu0 0
        %2845 = vmatpush.bf16.msra.mxu0 0
        %2846 = vmatpush.bf16.msra.mxu0 0
        %2847 = vmatpush.bf16.msra.mxu0 0
        %2848 = vmatpush.bf16.msra.mxu0 %v2777
        %2849 = vmatmul.bf16.gmra.mxu0 %v2762
        %v2850 = vpop.f32.mrf.mxu0
        %v2851 = vadd.f32 0.0, %v2850
        %v2852 = vpop.f32.mrf.mxu0
        %v2853 = vadd.f32 0.0, %v2852
        %2854 = vdwg.mxu0
        %2855 = vmatpush.bf16.msra.mxu0 0
        %2856 = vmatpush.bf16.msra.mxu0 0
        %2857 = vmatpush.bf16.msra.mxu0 0
        %2858 = vmatpush.bf16.msra.mxu0 0
        %2859 = vmatpush.bf16.msra.mxu0 0
        %2860 = vmatpush.bf16.msra.mxu0 0
        %2861 = vmatpush.bf16.msra.mxu0 0
        %2862 = vmatpush.bf16.msra.mxu0 %v2780
        %2863 = vmatmul.bf16.gmra.mxu0 %v2762
        %v2864 = vpop.f32.mrf.mxu0
        %v2865 = vadd.f32 0.0, %v2864
        %v2866 = vpop.f32.mrf.mxu0
        %v2867 = vadd.f32 0.0, %v2866
        %2868 = vdwg.mxu0
        %2869 = vmatpush.bf16.msra.mxu0 0
        %2870 = vmatpush.bf16.msra.mxu0 0
        %2871 = vmatpush.bf16.msra.mxu0 0
        %2872 = vmatpush.bf16.msra.mxu0 0
        %2873 = vmatpush.bf16.msra.mxu0 0
        %2874 = vmatpush.bf16.msra.mxu0 0
        %2875 = vmatpush.bf16.msra.mxu0 0
        %2876 = vmatpush.bf16.msra.mxu0 %v2783
        %2877 = vmatmul.bf16.gmra.mxu0 %v2762
        %v2878 = vpop.f32.mrf.mxu0
        %v2879 = vadd.f32 0.0, %v2878
        %v2880 = vpop.f32.mrf.mxu0
        %v2881 = vadd.f32 0.0, %v2880
        %2882 = vdwg.mxu0
        %v2883 = vadd.f32 %v2718, %v2795
        %v2884 = vadd.f32 %v2719, %v2809
        %v2885 = vadd.f32 %v2720, %v2823
        %v2886 = vadd.f32 %v2721, %v2837
        %v2887 = vadd.f32 %v2722, %v2851
        %v2888 = vadd.f32 %v2723, %v2865
        %v2889 = vadd.f32 %v2724, %v2879
        %v2890 = vadd.f32 %v2725, %v2797
        %v2891 = vadd.f32 %v2726, %v2811
        %v2892 = vadd.f32 %v2727, %v2825
        %v2893 = vadd.f32 %v2728, %v2839
        %v2894 = vadd.f32 %v2729, %v2853
        %v2895 = vadd.f32 %v2730, %v2867
        %v2896 = vadd.f32 %v2731, %v2881
        %v2897 = vld [vmem:[%s4] sm:$0xff]
        %v2898 = vld [vmem:[%s4 + $0x8] sm:$0xff]
        %2900 = vset.pattern.permute.xlu0 0
        %2901 = vperm.xlu0 %2900, %v2897
        %v2902 = vpop.permute.xlu0 %2901
        %2905 = vset.pattern.permute.xlu0 0
        %2906 = vperm.xlu0 %2905, %v2898
        %v2907 = vpop.permute.xlu0 %2906
        %v2909 = vadd.f32 %v2883, %v2902
        %v2910 = vadd.f32 %v2884, %v2902
        %v2911 = vadd.f32 %v2885, %v2902
        %v2912 = vadd.f32 %v2886, %v2902
        %v2913 = vadd.f32 %v2887, %v2902
        %v2914 = vadd.f32 %v2888, %v2902
        %v2915 = vadd.f32 %v2889, %v2902
        %v2916 = vadd.f32 %v2890, %v2907
        %v2917 = vadd.f32 %v2891, %v2907
        %v2918 = vadd.f32 %v2892, %v2907
        %v2919 = vadd.f32 %v2893, %v2907
        %v2920 = vadd.f32 %v2894, %v2907
        %v2921 = vadd.f32 %v2895, %v2907
        %v2922 = vadd.f32 %v2896, %v2907
        %v2923 = vmax.f32 %v2909, 0.0
        %v2924 = vmax.f32 %v2910, 0.0
        %v2925 = vmax.f32 %v2911, 0.0
        %v2926 = vmax.f32 %v2912, 0.0
        %v2927 = vmax.f32 %v2913, 0.0
        %v2928 = vmax.f32 %v2914, 0.0
        %v2929 = vmax.f32 %v2915, 0.0
        %v2930 = vmax.f32 %v2916, 0.0
        %v2931 = vmax.f32 %v2917, 0.0
        %v2932 = vmax.f32 %v2918, 0.0
        %v2933 = vmax.f32 %v2919, 0.0
        %v2934 = vmax.f32 %v2920, 0.0
        %v2935 = vmax.f32 %v2921, 0.0
        %v2936 = vmax.f32 %v2922, 0.0
        %2951 = vrot.lane.b32.xlu0 %v2923, 100
        %v2952 = vpop.permute.xlu0 %2951
        %2953 = vrot.lane.b32.xlu0 %v2924, 100
        %v2954 = vpop.permute.xlu0 %2953
        %2955 = vrot.lane.b32.xlu0 %v2925, 100
        %v2956 = vpop.permute.xlu0 %2955
        %2957 = vrot.lane.b32.xlu0 %v2926, 100
        %v2958 = vpop.permute.xlu0 %2957
        %2959 = vrot.lane.b32.xlu0 %v2927, 100
        %v2960 = vpop.permute.xlu0 %2959
        %2961 = vrot.lane.b32.xlu0 %v2928, 100
        %v2962 = vpop.permute.xlu0 %2961
        %2963 = vrot.lane.b32.xlu0 %v2929, 100
        %v2964 = vpop.permute.xlu0 %2963
        %2965 = vrot.lane.b32.xlu0 %v2930, 100
        %v2966 = vpop.permute.xlu0 %2965
        %2967 = vrot.lane.b32.xlu0 %v2931, 100
        %v2968 = vpop.permute.xlu0 %2967
        %2969 = vrot.lane.b32.xlu0 %v2932, 100
        %v2970 = vpop.permute.xlu0 %2969
        %2971 = vrot.lane.b32.xlu0 %v2933, 100
        %v2972 = vpop.permute.xlu0 %2971
        %2973 = vrot.lane.b32.xlu0 %v2934, 100
        %v2974 = vpop.permute.xlu0 %2973
        %2975 = vrot.lane.b32.xlu0 %v2935, 100
        %v2976 = vpop.permute.xlu0 %2975
        %2977 = vrot.lane.b32.xlu0 %v2936, 100
        %v2978 = vpop.permute.xlu0 %2977
        %v2979 = vsel %vm781, %v2952, %v2954
        %v2980 = vsel %vm781, %v2954, %v2956
        %v2981 = vsel %vm781, %v2956, %v2958
        %v2982 = vsel %vm781, %v2958, %v2960
        %v2983 = vsel %vm781, %v2960, %v2962
        %v2984 = vsel %vm781, %v2962, %v2964
        %v2985 = vsel %vm781, %v2966, %v2968
        %v2986 = vsel %vm781, %v2968, %v2970
        %v2987 = vsel %vm781, %v2970, %v2972
        %v2988 = vsel %vm781, %v2972, %v2974
        %v2989 = vsel %vm781, %v2974, %v2976
        %v2990 = vsel %vm781, %v2976, %v2978
        %v3005 = vmax.f32 %v2923, %v2979
        %v3006 = vmax.f32 %v2924, %v2980
        %v3007 = vmax.f32 %v2925, %v2981
        %v3008 = vmax.f32 %v2926, %v2982
        %v3009 = vmax.f32 %v2927, %v2983
        %v3010 = vmax.f32 %v2928, %v2984
        %v3011 = vmax.f32 %v2929, %v2964
        %v3012 = vmax.f32 %v2930, %v2985
        %v3013 = vmax.f32 %v2931, %v2986
        %v3014 = vmax.f32 %v2932, %v2987
        %v3015 = vmax.f32 %v2933, %v2988
        %v3016 = vmax.f32 %v2934, %v2989
        %v3017 = vmax.f32 %v2935, %v2990
        %v3018 = vmax.f32 %v2936, %v2978
        %3033 = vrot.lane.b32.xlu0 %v3005, 127
        %v3034 = vpop.permute.xlu0 %3033
        %3035 = vrot.lane.b32.xlu0 %v3006, 127
        %v3036 = vpop.permute.xlu0 %3035
        %3037 = vrot.lane.b32.xlu0 %v3007, 127
        %v3038 = vpop.permute.xlu0 %3037
        %3039 = vrot.lane.b32.xlu0 %v3008, 127
        %v3040 = vpop.permute.xlu0 %3039
        %3041 = vrot.lane.b32.xlu0 %v3009, 127
        %v3042 = vpop.permute.xlu0 %3041
        %3043 = vrot.lane.b32.xlu0 %v3010, 127
        %v3044 = vpop.permute.xlu0 %3043
        %3045 = vrot.lane.b32.xlu0 %v3011, 127
        %v3046 = vpop.permute.xlu0 %3045
        %3047 = vrot.lane.b32.xlu0 %v3012, 127
        %v3048 = vpop.permute.xlu0 %3047
        %3049 = vrot.lane.b32.xlu0 %v3013, 127
        %v3050 = vpop.permute.xlu0 %3049
        %3051 = vrot.lane.b32.xlu0 %v3014, 127
        %v3052 = vpop.permute.xlu0 %3051
        %3053 = vrot.lane.b32.xlu0 %v3015, 127
        %v3054 = vpop.permute.xlu0 %3053
        %3055 = vrot.lane.b32.xlu0 %v3016, 127
        %v3056 = vpop.permute.xlu0 %3055
        %3057 = vrot.lane.b32.xlu0 %v3017, 127
        %v3058 = vpop.permute.xlu0 %3057
        %3059 = vrot.lane.b32.xlu0 %v3018, 127
        %v3060 = vpop.permute.xlu0 %3059
        %v3061 = vsel %vm561, %v3034, %v3036
        %v3062 = vsel %vm561, %v3036, %v3038
        %v3063 = vsel %vm561, %v3038, %v3040
        %v3064 = vsel %vm561, %v3040, %v3042
        %v3065 = vsel %vm561, %v3042, %v3044
        %v3066 = vsel %vm561, %v3044, %v3046
        %v3067 = vsel %vm561, %v3048, %v3050
        %v3068 = vsel %vm561, %v3050, %v3052
        %v3069 = vsel %vm561, %v3052, %v3054
        %v3070 = vsel %vm561, %v3054, %v3056
        %v3071 = vsel %vm561, %v3056, %v3058
        %v3072 = vsel %vm561, %v3058, %v3060
        %v3087 = vmax.f32 %v3005, %v3061
        %v3088 = vmax.f32 %v3006, %v3062
        %v3089 = vmax.f32 %v3007, %v3063
        %v3090 = vmax.f32 %v3008, %v3064
        %v3091 = vmax.f32 %v3009, %v3065
        %v3092 = vmax.f32 %v3010, %v3066
        %v3093 = vmax.f32 %v3011, %v3046
        %v3094 = vmax.f32 %v3012, %v3067
        %v3095 = vmax.f32 %v3013, %v3068
        %v3096 = vmax.f32 %v3014, %v3069
        %v3097 = vmax.f32 %v3015, %v3070
        %v3098 = vmax.f32 %v3016, %v3071
        %v3099 = vmax.f32 %v3017, %v3072
        %v3100 = vmax.f32 %v3018, %v3060
        %v3101 = vpack.c.bf16 %v3094, %v3087
        %v3102 = vpack.c.bf16 %v3095, %v3088
        %v3103 = vpack.c.bf16 %v3096, %v3089
        %v3104 = vpack.c.bf16 %v3097, %v3090
        %v3105 = vpack.c.bf16 %v3098, %v3091
        %v3106 = vpack.c.bf16 %v3099, %v3092
        %v3107 = vpack.c.bf16 %v3100, %v3093
        %v3108 = vld [vmem:[%s7] sm:$0xff]
        %v3109 = vld [vmem:[%s7 + $0x8] sm:$0xff]
        %v3110 = vld [vmem:[%s7 + $0x10] sm:$0xff]
        %v3111 = vld [vmem:[%s7 + $0x18] sm:$0xff]
        %v3112 = vld [vmem:[%s7 + $0x20] sm:$0xff]
        %v3113 = vld [vmem:[%s7 + $0x28] sm:$0xff]
        %v3114 = vld [vmem:[%s7 + $0x30] sm:$0xff]
        %v3115 = vld [vmem:[%s7 + $0x38] sm:$0xff]
        %v3116 = vld [vmem:[%s7 + $0x40] sm:$0xff]
        %v3117 = vld [vmem:[%s7 + $0x48] sm:$0xff]
        %v3118 = vld [vmem:[%s7 + $0x50] sm:$0xff]
        %v3119 = vld [vmem:[%s7 + $0x58] sm:$0xff]
        %v3120 = vld [vmem:[%s7 + $0x60] sm:$0xff]
        %v3121 = vld [vmem:[%s7 + $0x68] sm:$0xff]
        %v3122 = vld [vmem:[%s7 + $0x70] sm:$0xff]
        %v3123 = vld [vmem:[%s7 + $0x78] sm:$0xff]
        %v3124 = vld [vmem:[%s7 + $0x80] sm:$0xff]
        %v3125 = vld [vmem:[%s7 + $0x88] sm:$0xff]
        %v3126 = vld [vmem:[%s7 + $0x90] sm:$0xff]
        %v3127 = vld [vmem:[%s7 + $0x98] sm:$0xff]
        %v3128 = vld [vmem:[%s7 + $0xa0] sm:$0xff]
        %v3129 = vld [vmem:[%s7 + $0xa8] sm:$0xff]
        %v3130 = vld [vmem:[%s7 + $0xb0] sm:$0xff]
        %v3131 = vld [vmem:[%s7 + $0xb8] sm:$0xff]
        %v3132 = vld [vmem:[%s7 + $0xc0] sm:$0xff]
        %v3133 = vld [vmem:[%s7 + $0xc8] sm:$0xff]
        %v3134 = vld [vmem:[%s7 + $0xd0] sm:$0xff]
        %v3135 = vld [vmem:[%s7 + $0xd8] sm:$0xff]
        %v3136 = vld [vmem:[%s7 + $0xe0] sm:$0xff]
        %v3137 = vld [vmem:[%s7 + $0xe8] sm:$0xff]
        %v3138 = vld [vmem:[%s7 + $0xf0] sm:$0xff]
        %v3139 = vld [vmem:[%s7 + $0xf8] sm:$0xff]
        %v3140 = vld [vmem:[%s7 + $0x100] sm:$0xff]
        %v3141 = vld [vmem:[%s7 + $0x108] sm:$0xff]
        %v3142 = vld [vmem:[%s7 + $0x110] sm:$0xff]
        %v3143 = vld [vmem:[%s7 + $0x118] sm:$0xff]
        %v3144 = vld [vmem:[%s7 + $0x120] sm:$0xff]
        %v3145 = vld [vmem:[%s7 + $0x128] sm:$0xff]
        %v3146 = vld [vmem:[%s7 + $0x130] sm:$0xff]
        %v3147 = vld [vmem:[%s7 + $0x138] sm:$0xff]
        %v3148 = vld [vmem:[%s7 + $0x140] sm:$0xff]
        %v3149 = vld [vmem:[%s7 + $0x148] sm:$0xff]
        %v3150 = vld [vmem:[%s7 + $0x150] sm:$0xff]
        %v3151 = vld [vmem:[%s7 + $0x158] sm:$0xff]
        %v3152 = vld [vmem:[%s7 + $0x160] sm:$0xff]
        %v3153 = vld [vmem:[%s7 + $0x168] sm:$0xff]
        %v3154 = vld [vmem:[%s7 + $0x170] sm:$0xff]
        %v3155 = vld [vmem:[%s7 + $0x178] sm:$0xff]
        %v3156 = vld [vmem:[%s7 + $0x180] sm:$0xff]
        %v3157 = vld [vmem:[%s7 + $0x188] sm:$0xff]
        %v3158 = vld [vmem:[%s7 + $0x190] sm:$0xff]
        %v3159 = vld [vmem:[%s7 + $0x198] sm:$0xff]
        %v3160 = vld [vmem:[%s7 + $0x1a0] sm:$0xff]
        %v3161 = vld [vmem:[%s7 + $0x1a8] sm:$0xff]
        %v3162 = vld [vmem:[%s7 + $0x1b0] sm:$0xff]
        %v3163 = vld [vmem:[%s7 + $0x1b8] sm:$0xff]
        %v3164 = vld [vmem:[%s7 + $0x1c0] sm:$0xff]
        %v3165 = vld [vmem:[%s7 + $0x1c8] sm:$0xff]
        %v3166 = vld [vmem:[%s7 + $0x1d0] sm:$0xff]
        %v3167 = vld [vmem:[%s7 + $0x1d8] sm:$0xff]
        %v3168 = vld [vmem:[%s7 + $0x1e0] sm:$0xff]
        %v3169 = vld [vmem:[%s7 + $0x1e8] sm:$0xff]
        %v3170 = vld [vmem:[%s7 + $0x1f0] sm:$0xff]
        %v3171 = vld [vmem:[%s7 + $0x1f8] sm:$0xff]
        %v3172 = vld [vmem:[%s7 + $0x200] sm:$0xff]
        %v3173 = vld [vmem:[%s7 + $0x208] sm:$0xff]
        %v3174 = vld [vmem:[%s7 + $0x210] sm:$0xff]
        %v3175 = vld [vmem:[%s7 + $0x218] sm:$0xff]
        %v3176 = vld [vmem:[%s7 + $0x220] sm:$0xff]
        %v3177 = vld [vmem:[%s7 + $0x228] sm:$0xff]
        %v3178 = vld [vmem:[%s7 + $0x230] sm:$0xff]
        %v3179 = vld [vmem:[%s7 + $0x238] sm:$0xff]
        %v3180 = vld [vmem:[%s7 + $0x240] sm:$0xff]
        %v3181 = vld [vmem:[%s7 + $0x248] sm:$0xff]
        %v3182 = vld [vmem:[%s7 + $0x250] sm:$0xff]
        %v3183 = vld [vmem:[%s7 + $0x258] sm:$0xff]
        %v3184 = vld [vmem:[%s7 + $0x260] sm:$0xff]
        %v3185 = vld [vmem:[%s7 + $0x268] sm:$0xff]
        %v3186 = vld [vmem:[%s7 + $0x270] sm:$0xff]
        %v3187 = vld [vmem:[%s7 + $0x278] sm:$0xff]
        %v3188 = vld [vmem:[%s7 + $0x280] sm:$0xff]
        %v3189 = vld [vmem:[%s7 + $0x288] sm:$0xff]
        %v3190 = vld [vmem:[%s7 + $0x290] sm:$0xff]
        %v3191 = vld [vmem:[%s7 + $0x298] sm:$0xff]
        %v3192 = vld [vmem:[%s7 + $0x2a0] sm:$0xff]
        %v3193 = vld [vmem:[%s7 + $0x2a8] sm:$0xff]
        %v3194 = vld [vmem:[%s7 + $0x2b0] sm:$0xff]
        %v3195 = vld [vmem:[%s7 + $0x2b8] sm:$0xff]
        %v3196 = vld [vmem:[%s7 + $0x2c0] sm:$0xff]
        %v3197 = vld [vmem:[%s7 + $0x2c8] sm:$0xff]
        %v3198 = vld [vmem:[%s7 + $0x2d0] sm:$0xff]
        %v3199 = vld [vmem:[%s7 + $0x2d8] sm:$0xff]
        %v3200 = vld [vmem:[%s7 + $0x2e0] sm:$0xff]
        %v3201 = vld [vmem:[%s7 + $0x2e8] sm:$0xff]
        %v3202 = vld [vmem:[%s7 + $0x2f0] sm:$0xff]
        %v3203 = vld [vmem:[%s7 + $0x2f8] sm:$0xff]
        %v3204 = vld [vmem:[%s7 + $0x300] sm:$0xff]
        %v3205 = vld [vmem:[%s7 + $0x308] sm:$0xff]
        %v3304 = vunpack.c.l.b16 %v3108
        %v3305 = vunpack.c.h.b16 %v3108
        %v3306 = vunpack.c.l.b16 %v3109
        %v3307 = vunpack.c.h.b16 %v3109
        %v3308 = vunpack.c.l.b16 %v3110
        %v3309 = vunpack.c.h.b16 %v3110
        %v3310 = vunpack.c.l.b16 %v3111
        %v3311 = vunpack.c.h.b16 %v3111
        %v3312 = vunpack.c.l.b16 %v3112
        %v3313 = vunpack.c.h.b16 %v3112
        %v3314 = vunpack.c.l.b16 %v3113
        %v3315 = vunpack.c.h.b16 %v3113
        %v3316 = vunpack.c.l.b16 %v3114
        %v3317 = vunpack.c.h.b16 %v3114
        %v3318 = vunpack.c.l.b16 %v3115
        %v3319 = vunpack.c.h.b16 %v3115
        %v3320 = vunpack.c.l.b16 %v3116
        %v3321 = vunpack.c.h.b16 %v3116
        %v3322 = vunpack.c.l.b16 %v3117
        %v3323 = vunpack.c.h.b16 %v3117
        %v3324 = vunpack.c.l.b16 %v3118
        %v3325 = vunpack.c.h.b16 %v3118
        %v3326 = vunpack.c.l.b16 %v3119
        %v3327 = vunpack.c.h.b16 %v3119
        %v3328 = vunpack.c.l.b16 %v3120
        %v3329 = vunpack.c.h.b16 %v3120
        %v3330 = vunpack.c.l.b16 %v3121
        %v3331 = vunpack.c.h.b16 %v3121
        %v3332 = vunpack.c.l.b16 %v3122
        %v3333 = vunpack.c.h.b16 %v3122
        %v3334 = vunpack.c.l.b16 %v3123
        %v3335 = vunpack.c.h.b16 %v3123
        %v3336 = vunpack.c.l.b16 %v3124
        %v3337 = vunpack.c.h.b16 %v3124
        %v3338 = vunpack.c.l.b16 %v3125
        %v3339 = vunpack.c.h.b16 %v3125
        %v3340 = vunpack.c.l.b16 %v3126
        %v3341 = vunpack.c.h.b16 %v3126
        %v3342 = vunpack.c.l.b16 %v3127
        %v3343 = vunpack.c.h.b16 %v3127
        %v3344 = vunpack.c.l.b16 %v3128
        %v3345 = vunpack.c.h.b16 %v3128
        %v3346 = vunpack.c.l.b16 %v3129
        %v3347 = vunpack.c.h.b16 %v3129
        %v3348 = vunpack.c.l.b16 %v3130
        %v3349 = vunpack.c.h.b16 %v3130
        %v3350 = vunpack.c.l.b16 %v3131
        %v3351 = vunpack.c.h.b16 %v3131
        %v3352 = vunpack.c.l.b16 %v3132
        %v3353 = vunpack.c.h.b16 %v3132
        %v3354 = vunpack.c.l.b16 %v3133
        %v3355 = vunpack.c.h.b16 %v3133
        %v3356 = vunpack.c.l.b16 %v3134
        %v3357 = vunpack.c.h.b16 %v3134
        %v3358 = vunpack.c.l.b16 %v3135
        %v3359 = vunpack.c.h.b16 %v3135
        %v3360 = vunpack.c.l.b16 %v3136
        %v3361 = vunpack.c.h.b16 %v3136
        %v3362 = vunpack.c.l.b16 %v3137
        %v3363 = vunpack.c.h.b16 %v3137
        %v3364 = vunpack.c.l.b16 %v3138
        %v3365 = vunpack.c.h.b16 %v3138
        %v3366 = vunpack.c.l.b16 %v3139
        %v3367 = vunpack.c.h.b16 %v3139
        %v3368 = vunpack.c.l.b16 %v3140
        %v3369 = vunpack.c.h.b16 %v3140
        %v3370 = vunpack.c.l.b16 %v3141
        %v3371 = vunpack.c.h.b16 %v3141
        %v3372 = vunpack.c.l.b16 %v3142
        %v3373 = vunpack.c.h.b16 %v3142
        %v3374 = vunpack.c.l.b16 %v3143
        %v3375 = vunpack.c.h.b16 %v3143
        %v3376 = vunpack.c.l.b16 %v3144
        %v3377 = vunpack.c.h.b16 %v3144
        %v3378 = vunpack.c.l.b16 %v3145
        %v3379 = vunpack.c.h.b16 %v3145
        %v3380 = vunpack.c.l.b16 %v3146
        %v3381 = vunpack.c.h.b16 %v3146
        %v3382 = vunpack.c.l.b16 %v3147
        %v3383 = vunpack.c.h.b16 %v3147
        %v3384 = vunpack.c.l.b16 %v3148
        %v3385 = vunpack.c.h.b16 %v3148
        %v3386 = vunpack.c.l.b16 %v3149
        %v3387 = vunpack.c.h.b16 %v3149
        %v3388 = vunpack.c.l.b16 %v3150
        %v3389 = vunpack.c.h.b16 %v3150
        %v3390 = vunpack.c.l.b16 %v3151
        %v3391 = vunpack.c.h.b16 %v3151
        %v3392 = vunpack.c.l.b16 %v3152
        %v3393 = vunpack.c.h.b16 %v3152
        %v3394 = vunpack.c.l.b16 %v3153
        %v3395 = vunpack.c.h.b16 %v3153
        %v3396 = vunpack.c.l.b16 %v3154
        %v3397 = vunpack.c.h.b16 %v3154
        %v3398 = vunpack.c.l.b16 %v3155
        %v3399 = vunpack.c.h.b16 %v3155
        %v3400 = vunpack.c.l.b16 %v3156
        %v3401 = vunpack.c.h.b16 %v3156
        %v3402 = vunpack.c.l.b16 %v3157
        %v3403 = vunpack.c.h.b16 %v3157
        %v3404 = vunpack.c.l.b16 %v3158
        %v3405 = vunpack.c.h.b16 %v3158
        %v3406 = vunpack.c.l.b16 %v3159
        %v3407 = vunpack.c.h.b16 %v3159
        %v3408 = vunpack.c.l.b16 %v3160
        %v3409 = vunpack.c.h.b16 %v3160
        %v3410 = vunpack.c.l.b16 %v3161
        %v3411 = vunpack.c.h.b16 %v3161
        %v3412 = vunpack.c.l.b16 %v3162
        %v3413 = vunpack.c.h.b16 %v3162
        %v3414 = vunpack.c.l.b16 %v3163
        %v3415 = vunpack.c.h.b16 %v3163
        %v3416 = vunpack.c.l.b16 %v3164
        %v3417 = vunpack.c.h.b16 %v3164
        %v3418 = vunpack.c.l.b16 %v3165
        %v3419 = vunpack.c.h.b16 %v3165
        %v3420 = vunpack.c.l.b16 %v3166
        %v3421 = vunpack.c.h.b16 %v3166
        %v3422 = vunpack.c.l.b16 %v3167
        %v3423 = vunpack.c.h.b16 %v3167
        %v3424 = vunpack.c.l.b16 %v3168
        %v3425 = vunpack.c.h.b16 %v3168
        %v3426 = vunpack.c.l.b16 %v3169
        %v3427 = vunpack.c.h.b16 %v3169
        %v3428 = vunpack.c.l.b16 %v3170
        %v3429 = vunpack.c.h.b16 %v3170
        %v3430 = vunpack.c.l.b16 %v3171
        %v3431 = vunpack.c.h.b16 %v3171
        %v3432 = vunpack.c.l.b16 %v3172
        %v3433 = vunpack.c.h.b16 %v3172
        %v3434 = vunpack.c.l.b16 %v3173
        %v3435 = vunpack.c.h.b16 %v3173
        %v3436 = vunpack.c.l.b16 %v3174
        %v3437 = vunpack.c.h.b16 %v3174
        %v3438 = vunpack.c.l.b16 %v3175
        %v3439 = vunpack.c.h.b16 %v3175
        %v3440 = vunpack.c.l.b16 %v3176
        %v3441 = vunpack.c.h.b16 %v3176
        %v3442 = vunpack.c.l.b16 %v3177
        %v3443 = vunpack.c.h.b16 %v3177
        %v3444 = vunpack.c.l.b16 %v3178
        %v3445 = vunpack.c.h.b16 %v3178
        %v3446 = vunpack.c.l.b16 %v3179
        %v3447 = vunpack.c.h.b16 %v3179
        %v3448 = vunpack.c.l.b16 %v3180
        %v3449 = vunpack.c.h.b16 %v3180
        %v3450 = vunpack.c.l.b16 %v3181
        %v3451 = vunpack.c.h.b16 %v3181
        %v3452 = vunpack.c.l.b16 %v3182
        %v3453 = vunpack.c.h.b16 %v3182
        %v3454 = vunpack.c.l.b16 %v3183
        %v3455 = vunpack.c.h.b16 %v3183
        %v3456 = vunpack.c.l.b16 %v3184
        %v3457 = vunpack.c.h.b16 %v3184
        %v3458 = vunpack.c.l.b16 %v3185
        %v3459 = vunpack.c.h.b16 %v3185
        %v3460 = vunpack.c.l.b16 %v3186
        %v3461 = vunpack.c.h.b16 %v3186
        %v3462 = vunpack.c.l.b16 %v3187
        %v3463 = vunpack.c.h.b16 %v3187
        %v3464 = vunpack.c.l.b16 %v3188
        %v3465 = vunpack.c.h.b16 %v3188
        %v3466 = vunpack.c.l.b16 %v3189
        %v3467 = vunpack.c.h.b16 %v3189
        %v3468 = vunpack.c.l.b16 %v3190
        %v3469 = vunpack.c.h.b16 %v3190
        %v3470 = vunpack.c.l.b16 %v3191
        %v3471 = vunpack.c.h.b16 %v3191
        %v3472 = vunpack.c.l.b16 %v3192
        %v3473 = vunpack.c.h.b16 %v3192
        %v3474 = vunpack.c.l.b16 %v3193
        %v3475 = vunpack.c.h.b16 %v3193
        %v3476 = vunpack.c.l.b16 %v3194
        %v3477 = vunpack.c.h.b16 %v3194
        %v3478 = vunpack.c.l.b16 %v3195
        %v3479 = vunpack.c.h.b16 %v3195
        %v3480 = vunpack.c.l.b16 %v3196
        %v3481 = vunpack.c.h.b16 %v3196
        %v3482 = vunpack.c.l.b16 %v3197
        %v3483 = vunpack.c.h.b16 %v3197
        %v3484 = vunpack.c.l.b16 %v3198
        %v3485 = vunpack.c.h.b16 %v3198
        %v3486 = vunpack.c.l.b16 %v3199
        %v3487 = vunpack.c.h.b16 %v3199
        %v3488 = vunpack.c.l.b16 %v3200
        %v3489 = vunpack.c.h.b16 %v3200
        %v3490 = vunpack.c.l.b16 %v3201
        %v3491 = vunpack.c.h.b16 %v3201
        %v3492 = vunpack.c.l.b16 %v3202
        %v3493 = vunpack.c.h.b16 %v3202
        %v3494 = vunpack.c.l.b16 %v3203
        %v3495 = vunpack.c.h.b16 %v3203
        %v3496 = vunpack.c.l.b16 %v3204
        %v3497 = vunpack.c.h.b16 %v3204
        %v3498 = vunpack.c.l.b16 %v3205
        %v3499 = vunpack.c.h.b16 %v3205
        %v3500 = vpack.c.b16 %v3306, %v3304
        %v3501 = vpack.c.b16 %v3307, %v3305
        %v3502 = vpack.c.b16 %v3310, %v3308
        %v3503 = vpack.c.b16 %v3311, %v3309
        %v3504 = vpack.c.b16 %v3314, %v3312
        %v3505 = vpack.c.b16 %v3315, %v3313
        %v3506 = vpack.c.b16 %v3318, %v3316
        %v3507 = vpack.c.b16 %v3319, %v3317
        %v3508 = vpack.c.b16 %v3322, %v3320
        %v3509 = vpack.c.b16 %v3323, %v3321
        %v3510 = vpack.c.b16 %v3326, %v3324
        %v3511 = vpack.c.b16 %v3327, %v3325
        %v3512 = vpack.c.b16 %v3330, %v3328
        %v3513 = vpack.c.b16 %v3331, %v3329
        %v3514 = vpack.c.b16 %v3334, %v3332
        %v3515 = vpack.c.b16 %v3335, %v3333
        %v3516 = vpack.c.b16 %v3338, %v3336
        %v3517 = vpack.c.b16 %v3339, %v3337
        %v3518 = vpack.c.b16 %v3342, %v3340
        %v3519 = vpack.c.b16 %v3343, %v3341
        %v3520 = vpack.c.b16 %v3346, %v3344
        %v3521 = vpack.c.b16 %v3347, %v3345
        %v3522 = vpack.c.b16 %v3350, %v3348
        %v3523 = vpack.c.b16 %v3351, %v3349
        %v3524 = vpack.c.b16 %v3354, %v3352
        %v3525 = vpack.c.b16 %v3355, %v3353
        %v3526 = vpack.c.b16 %v3358, %v3356
        %v3527 = vpack.c.b16 %v3359, %v3357
        %v3528 = vpack.c.b16 %v3362, %v3360
        %v3529 = vpack.c.b16 %v3363, %v3361
        %v3530 = vpack.c.b16 %v3366, %v3364
        %v3531 = vpack.c.b16 %v3367, %v3365
        %v3532 = vpack.c.b16 %v3370, %v3368
        %v3533 = vpack.c.b16 %v3371, %v3369
        %v3534 = vpack.c.b16 %v3374, %v3372
        %v3535 = vpack.c.b16 %v3375, %v3373
        %v3536 = vpack.c.b16 %v3378, %v3376
        %v3537 = vpack.c.b16 %v3379, %v3377
        %v3538 = vpack.c.b16 %v3382, %v3380
        %v3539 = vpack.c.b16 %v3383, %v3381
        %v3540 = vpack.c.b16 %v3386, %v3384
        %v3541 = vpack.c.b16 %v3387, %v3385
        %v3542 = vpack.c.b16 %v3390, %v3388
        %v3543 = vpack.c.b16 %v3391, %v3389
        %v3544 = vpack.c.b16 %v3394, %v3392
        %v3545 = vpack.c.b16 %v3395, %v3393
        %v3546 = vpack.c.b16 %v3398, %v3396
        %v3547 = vpack.c.b16 %v3399, %v3397
        %v3548 = vpack.c.b16 %v3402, %v3400
        %v3549 = vpack.c.b16 %v3403, %v3401
        %v3550 = vpack.c.b16 %v3406, %v3404
        %v3551 = vpack.c.b16 %v3407, %v3405
        %v3552 = vpack.c.b16 %v3410, %v3408
        %v3553 = vpack.c.b16 %v3411, %v3409
        %v3554 = vpack.c.b16 %v3414, %v3412
        %v3555 = vpack.c.b16 %v3415, %v3413
        %v3556 = vpack.c.b16 %v3418, %v3416
        %v3557 = vpack.c.b16 %v3419, %v3417
        %v3558 = vpack.c.b16 %v3422, %v3420
        %v3559 = vpack.c.b16 %v3423, %v3421
        %v3560 = vpack.c.b16 %v3426, %v3424
        %v3561 = vpack.c.b16 %v3427, %v3425
        %v3562 = vpack.c.b16 %v3430, %v3428
        %v3563 = vpack.c.b16 %v3431, %v3429
        %v3564 = vpack.c.b16 %v3434, %v3432
        %v3565 = vpack.c.b16 %v3435, %v3433
        %v3566 = vpack.c.b16 %v3438, %v3436
        %v3567 = vpack.c.b16 %v3439, %v3437
        %v3568 = vpack.c.b16 %v3442, %v3440
        %v3569 = vpack.c.b16 %v3443, %v3441
        %v3570 = vpack.c.b16 %v3446, %v3444
        %v3571 = vpack.c.b16 %v3447, %v3445
        %v3572 = vpack.c.b16 %v3450, %v3448
        %v3573 = vpack.c.b16 %v3451, %v3449
        %v3574 = vpack.c.b16 %v3454, %v3452
        %v3575 = vpack.c.b16 %v3455, %v3453
        %v3576 = vpack.c.b16 %v3458, %v3456
        %v3577 = vpack.c.b16 %v3459, %v3457
        %v3578 = vpack.c.b16 %v3462, %v3460
        %v3579 = vpack.c.b16 %v3463, %v3461
        %v3580 = vpack.c.b16 %v3466, %v3464
        %v3581 = vpack.c.b16 %v3467, %v3465
        %v3582 = vpack.c.b16 %v3470, %v3468
        %v3583 = vpack.c.b16 %v3471, %v3469
        %v3584 = vpack.c.b16 %v3474, %v3472
        %v3585 = vpack.c.b16 %v3475, %v3473
        %v3586 = vpack.c.b16 %v3478, %v3476
        %v3587 = vpack.c.b16 %v3479, %v3477
        %v3588 = vpack.c.b16 %v3482, %v3480
        %v3589 = vpack.c.b16 %v3483, %v3481
        %v3590 = vpack.c.b16 %v3486, %v3484
        %v3591 = vpack.c.b16 %v3487, %v3485
        %v3592 = vpack.c.b16 %v3490, %v3488
        %v3593 = vpack.c.b16 %v3491, %v3489
        %v3594 = vpack.c.b16 %v3494, %v3492
        %v3595 = vpack.c.b16 %v3495, %v3493
        %v3596 = vpack.c.b16 %v3498, %v3496
        %v3597 = vpack.c.b16 %v3499, %v3497
        %vm3694 = vcmask 121856
        %v3696 = vsel %vm3694, %v3107, 0
        %vm3698 = vcmask 1046528
        %vm3699 = vcmask 1047552
        %v3700 = vsel %vm3698, 4294967295, 65535
        %v3701 = vsel %vm3699, %v3700, 0
        %v3703 = vand.u32 %v3596, %v3701
        %v3706 = vand.u32 %v3597, %v3701
        %3708 = vmatpush.bf16.msra.mxu0 %v3514
        %3709 = vmatpush.bf16.msra.mxu0 %v3512
        %3710 = vmatpush.bf16.msra.mxu0 %v3510
        %3711 = vmatpush.bf16.msra.mxu0 %v3508
        %3712 = vmatpush.bf16.msra.mxu0 %v3506
        %3713 = vmatpush.bf16.msra.mxu0 %v3504
        %3714 = vmatpush.bf16.msra.mxu0 %v3502
        %3715 = vmatpush.bf16.msra.mxu0 %v3500
        %3716 = vmatmul.bf16.gmra.mxu0 %v3101
        %v3717 = vpop.f32.mrf.mxu0
        %v3718 = vadd.f32 0.0, %v3717
        %v3719 = vpop.f32.mrf.mxu0
        %v3720 = vadd.f32 0.0, %v3719
        %3721 = vdwg.mxu0
        %3722 = vmatpush.bf16.msra.mxu0 %v3530
        %3723 = vmatpush.bf16.msra.mxu0 %v3528
        %3724 = vmatpush.bf16.msra.mxu0 %v3526
        %3725 = vmatpush.bf16.msra.mxu0 %v3524
        %3726 = vmatpush.bf16.msra.mxu0 %v3522
        %3727 = vmatpush.bf16.msra.mxu0 %v3520
        %3728 = vmatpush.bf16.msra.mxu0 %v3518
        %3729 = vmatpush.bf16.msra.mxu0 %v3516
        %3730 = vmatmul.bf16.gmra.mxu0 %v3102
        %v3731 = vpop.f32.mrf.mxu0
        %v3732 = vadd.f32 %v3718, %v3731
        %v3733 = vpop.f32.mrf.mxu0
        %v3734 = vadd.f32 %v3720, %v3733
        %3735 = vdwg.mxu0
        %3736 = vmatpush.bf16.msra.mxu0 %v3546
        %3737 = vmatpush.bf16.msra.mxu0 %v3544
        %3738 = vmatpush.bf16.msra.mxu0 %v3542
        %3739 = vmatpush.bf16.msra.mxu0 %v3540
        %3740 = vmatpush.bf16.msra.mxu0 %v3538
        %3741 = vmatpush.bf16.msra.mxu0 %v3536
        %3742 = vmatpush.bf16.msra.mxu0 %v3534
        %3743 = vmatpush.bf16.msra.mxu0 %v3532
        %3744 = vmatmul.bf16.gmra.mxu0 %v3103
        %v3745 = vpop.f32.mrf.mxu0
        %v3746 = vadd.f32 %v3732, %v3745
        %v3747 = vpop.f32.mrf.mxu0
        %v3748 = vadd.f32 %v3734, %v3747
        %3749 = vdwg.mxu0
        %3750 = vmatpush.bf16.msra.mxu0 %v3562
        %3751 = vmatpush.bf16.msra.mxu0 %v3560
        %3752 = vmatpush.bf16.msra.mxu0 %v3558
        %3753 = vmatpush.bf16.msra.mxu0 %v3556
        %3754 = vmatpush.bf16.msra.mxu0 %v3554
        %3755 = vmatpush.bf16.msra.mxu0 %v3552
        %3756 = vmatpush.bf16.msra.mxu0 %v3550
        %3757 = vmatpush.bf16.msra.mxu0 %v3548
        %3758 = vmatmul.bf16.gmra.mxu0 %v3104
        %v3759 = vpop.f32.mrf.mxu0
        %v3760 = vadd.f32 %v3746, %v3759
        %v3761 = vpop.f32.mrf.mxu0
        %v3762 = vadd.f32 %v3748, %v3761
        %3763 = vdwg.mxu0
        %3764 = vmatpush.bf16.msra.mxu0 %v3578
        %3765 = vmatpush.bf16.msra.mxu0 %v3576
        %3766 = vmatpush.bf16.msra.mxu0 %v3574
        %3767 = vmatpush.bf16.msra.mxu0 %v3572
        %3768 = vmatpush.bf16.msra.mxu0 %v3570
        %3769 = vmatpush.bf16.msra.mxu0 %v3568
        %3770 = vmatpush.bf16.msra.mxu0 %v3566
        %3771 = vmatpush.bf16.msra.mxu0 %v3564
        %3772 = vmatmul.bf16.gmra.mxu0 %v3105
        %v3773 = vpop.f32.mrf.mxu0
        %v3774 = vadd.f32 %v3760, %v3773
        %v3775 = vpop.f32.mrf.mxu0
        %v3776 = vadd.f32 %v3762, %v3775
        %3777 = vdwg.mxu0
        %3778 = vmatpush.bf16.msra.mxu0 %v3594
        %3779 = vmatpush.bf16.msra.mxu0 %v3592
        %3780 = vmatpush.bf16.msra.mxu0 %v3590
        %3781 = vmatpush.bf16.msra.mxu0 %v3588
        %3782 = vmatpush.bf16.msra.mxu0 %v3586
        %3783 = vmatpush.bf16.msra.mxu0 %v3584
        %3784 = vmatpush.bf16.msra.mxu0 %v3582
        %3785 = vmatpush.bf16.msra.mxu0 %v3580
        %3786 = vmatmul.bf16.gmra.mxu0 %v3106
        %v3787 = vpop.f32.mrf.mxu0
        %v3788 = vadd.f32 %v3774, %v3787
        %v3789 = vpop.f32.mrf.mxu0
        %v3790 = vadd.f32 %v3776, %v3789
        %3791 = vdwg.mxu0
        %3792 = vmatpush.bf16.msra.mxu0 0
        %3793 = vmatpush.bf16.msra.mxu0 0
        %3794 = vmatpush.bf16.msra.mxu0 0
        %3795 = vmatpush.bf16.msra.mxu0 0
        %3796 = vmatpush.bf16.msra.mxu0 0
        %3797 = vmatpush.bf16.msra.mxu0 0
        %3798 = vmatpush.bf16.msra.mxu0 0
        %3799 = vmatpush.bf16.msra.mxu0 %v3703
        %3800 = vmatmul.bf16.gmra.mxu0 %v3696
        %v3801 = vpop.f32.mrf.mxu0
        %v3802 = vadd.f32 %v3788, %v3801
        %v3803 = vpop.f32.mrf.mxu0
        %v3804 = vadd.f32 %v3790, %v3803
        %3805 = vdwg.mxu0
        %3806 = vmatpush.bf16.msra.mxu0 %v3515
        %3807 = vmatpush.bf16.msra.mxu0 %v3513
        %3808 = vmatpush.bf16.msra.mxu0 %v3511
        %3809 = vmatpush.bf16.msra.mxu0 %v3509
        %3810 = vmatpush.bf16.msra.mxu0 %v3507
        %3811 = vmatpush.bf16.msra.mxu0 %v3505
        %3812 = vmatpush.bf16.msra.mxu0 %v3503
        %3813 = vmatpush.bf16.msra.mxu0 %v3501
        %3814 = vmatmul.bf16.gmra.mxu0 %v3101
        %v3815 = vpop.f32.mrf.mxu0
        %v3816 = vadd.f32 0.0, %v3815
        %v3817 = vpop.f32.mrf.mxu0
        %v3818 = vadd.f32 0.0, %v3817
        %3819 = vdwg.mxu0
        %3820 = vmatpush.bf16.msra.mxu0 %v3531
        %3821 = vmatpush.bf16.msra.mxu0 %v3529
        %3822 = vmatpush.bf16.msra.mxu0 %v3527
        %3823 = vmatpush.bf16.msra.mxu0 %v3525
        %3824 = vmatpush.bf16.msra.mxu0 %v3523
        %3825 = vmatpush.bf16.msra.mxu0 %v3521
        %3826 = vmatpush.bf16.msra.mxu0 %v3519
        %3827 = vmatpush.bf16.msra.mxu0 %v3517
        %3828 = vmatmul.bf16.gmra.mxu0 %v3102
        %v3829 = vpop.f32.mrf.mxu0
        %v3830 = vadd.f32 %v3816, %v3829
        %v3831 = vpop.f32.mrf.mxu0
        %v3832 = vadd.f32 %v3818, %v3831
        %3833 = vdwg.mxu0
        %3834 = vmatpush.bf16.msra.mxu0 %v3547
        %3835 = vmatpush.bf16.msra.mxu0 %v3545
        %3836 = vmatpush.bf16.msra.mxu0 %v3543
        %3837 = vmatpush.bf16.msra.mxu0 %v3541
        %3838 = vmatpush.bf16.msra.mxu0 %v3539
        %3839 = vmatpush.bf16.msra.mxu0 %v3537
        %3840 = vmatpush.bf16.msra.mxu0 %v3535
        %3841 = vmatpush.bf16.msra.mxu0 %v3533
        %3842 = vmatmul.bf16.gmra.mxu0 %v3103
        %v3843 = vpop.f32.mrf.mxu0
        %v3844 = vadd.f32 %v3830, %v3843
        %v3845 = vpop.f32.mrf.mxu0
        %v3846 = vadd.f32 %v3832, %v3845
        %3847 = vdwg.mxu0
        %3848 = vmatpush.bf16.msra.mxu0 %v3563
        %3849 = vmatpush.bf16.msra.mxu0 %v3561
        %3850 = vmatpush.bf16.msra.mxu0 %v3559
        %3851 = vmatpush.bf16.msra.mxu0 %v3557
        %3852 = vmatpush.bf16.msra.mxu0 %v3555
        %3853 = vmatpush.bf16.msra.mxu0 %v3553
        %3854 = vmatpush.bf16.msra.mxu0 %v3551
        %3855 = vmatpush.bf16.msra.mxu0 %v3549
        %3856 = vmatmul.bf16.gmra.mxu0 %v3104
        %v3857 = vpop.f32.mrf.mxu0
        %v3858 = vadd.f32 %v3844, %v3857
        %v3859 = vpop.f32.mrf.mxu0
        %v3860 = vadd.f32 %v3846, %v3859
        %3861 = vdwg.mxu0
        %3862 = vmatpush.bf16.msra.mxu0 %v3579
        %3863 = vmatpush.bf16.msra.mxu0 %v3577
        %3864 = vmatpush.bf16.msra.mxu0 %v3575
        %3865 = vmatpush.bf16.msra.mxu0 %v3573
        %3866 = vmatpush.bf16.msra.mxu0 %v3571
        %3867 = vmatpush.bf16.msra.mxu0 %v3569
        %3868 = vmatpush.bf16.msra.mxu0 %v3567
        %3869 = vmatpush.bf16.msra.mxu0 %v3565
        %3870 = vmatmul.bf16.gmra.mxu0 %v3105
        %v3871 = vpop.f32.mrf.mxu0
        %v3872 = vadd.f32 %v3858, %v3871
        %v3873 = vpop.f32.mrf.mxu0
        %v3874 = vadd.f32 %v3860, %v3873
        %3875 = vdwg.mxu0
        %3876 = vmatpush.bf16.msra.mxu0 %v3595
        %3877 = vmatpush.bf16.msra.mxu0 %v3593
        %3878 = vmatpush.bf16.msra.mxu0 %v3591
        %3879 = vmatpush.bf16.msra.mxu0 %v3589
        %3880 = vmatpush.bf16.msra.mxu0 %v3587
        %3881 = vmatpush.bf16.msra.mxu0 %v3585
        %3882 = vmatpush.bf16.msra.mxu0 %v3583
        %3883 = vmatpush.bf16.msra.mxu0 %v3581
        %3884 = vmatmul.bf16.gmra.mxu0 %v3106
        %v3885 = vpop.f32.mrf.mxu0
        %v3886 = vadd.f32 %v3872, %v3885
        %v3887 = vpop.f32.mrf.mxu0
        %v3888 = vadd.f32 %v3874, %v3887
        %3889 = vdwg.mxu0
        %3890 = vmatpush.bf16.msra.mxu0 0
        %3891 = vmatpush.bf16.msra.mxu0 0
        %3892 = vmatpush.bf16.msra.mxu0 0
        %3893 = vmatpush.bf16.msra.mxu0 0
        %3894 = vmatpush.bf16.msra.mxu0 0
        %3895 = vmatpush.bf16.msra.mxu0 0
        %3896 = vmatpush.bf16.msra.mxu0 0
        %3897 = vmatpush.bf16.msra.mxu0 %v3706
        %3898 = vmatmul.bf16.gmra.mxu0 %v3696
        %v3899 = vpop.f32.mrf.mxu0
        %v3900 = vadd.f32 %v3886, %v3899
        %v3901 = vpop.f32.mrf.mxu0
        %v3902 = vadd.f32 %v3888, %v3901
        %3903 = vdwg.mxu0
        %v3904 = vpack.c.bf16 %v3900, %v3802
        %v3905 = vpack.c.bf16 %v3902, %v3804
        %v3906 = vld [vmem:[%s5] sm:$0xf]
        %v3907 = vld [vmem:[%s5 + $0x4] sm:$0xf]
        %v3908 = vld [vmem:[%s5 + $0x8] sm:$0xf]
        %v3909 = vld [vmem:[%s5 + $0xc] sm:$0xf]
        %s3910 = scalar_lea.vmem %s5, 16
        %v3911 = vld [vmem:[%s3910] sm:$0xf]
        %v3912 = vld [vmem:[%s3910 + $0x4] sm:$0xf]
        %v3913 = vld [vmem:[%s3910 + $0x8] sm:$0xf]
        %v3914 = vld [vmem:[%s3910 + $0xc] sm:$0xf]
        %v3919 = vunpack.c.l.b16 %v3911
        %v3920 = vunpack.c.l.b16 %v3912
        %v3921 = vunpack.c.l.b16 %v3913
        %v3922 = vunpack.c.l.b16 %v3914
        %v3923 = vpack.c.b16 %v3920, %v3919
        %v3924 = vpack.c.b16 %v3922, %v3921
        %v3927 = vunpack.c.l.b16 %v3904
        %v3928 = vunpack.c.h.b16 %v3904
        %v3929 = vunpack.c.l.b16 %v3905
        %v3930 = vunpack.c.h.b16 %v3905
        %v3931 = vpack.c.b16 %v3929, %v3927
        %v3932 = vpack.c.b16 %v3930, %v3928
        %3933 = vrot.lane.b32.xlu0 %v3931, 127
        %v3934 = vpop.permute.xlu0 %3933
        %3935 = vrot.lane.b32.xlu0 %v3932, 127
        %v3936 = vpop.permute.xlu0 %3935
        %v3937 = vsel %vm1484, %v3934, %v3936
        %v3941 = vsel %vm1418, %v3923, 0
        %v3944 = vsel %vm1418, %v3924, 0
        %3946 = vmatpush.bf16.msra.mxu0 0
        %3947 = vmatpush.bf16.msra.mxu0 0
        %3948 = vmatpush.bf16.msra.mxu0 0
        %3949 = vmatpush.bf16.msra.mxu0 0
        %3950 = vmatpush.bf16.msra.mxu0 0
        %3951 = vmatpush.bf16.msra.mxu0 0
        %3952 = vmatpush.bf16.msra.mxu0 0
        %3953 = vmatpush.bf16.msra.mxu0 %v3937
        %3954 = vmatmul.bf16.gmra.mxu0 %v3941
        %v3955 = vpop.f32.mrf.mxu0
        %v3956 = vadd.f32 0.0, %v3955
        %v3957 = vpop.f32.mrf.mxu0
        %v3958 = vadd.f32 0.0, %v3957
        %3959 = vmatmul.bf16.gmra.mxu0 %v3944
        %v3960 = vpop.f32.mrf.mxu0
        %v3961 = vadd.f32 0.0, %v3960
        %v3962 = vpop.f32.mrf.mxu0
        %v3963 = vadd.f32 0.0, %v3962
        %3964 = vdwg.mxu0
        %3965 = vmatpush.bf16.msra.mxu0 0
        %3966 = vmatpush.bf16.msra.mxu0 0
        %3967 = vmatpush.bf16.msra.mxu0 0
        %3968 = vmatpush.bf16.msra.mxu0 0
        %3969 = vmatpush.bf16.msra.mxu0 0
        %3970 = vmatpush.bf16.msra.mxu0 0
        %3971 = vmatpush.bf16.msra.mxu0 0
        %3972 = vmatpush.bf16.msra.mxu0 %v3936
        %3973 = vmatmul.bf16.gmra.mxu0 %v3941
        %v3974 = vpop.f32.mrf.mxu0
        %v3975 = vadd.f32 0.0, %v3974
        %v3976 = vpop.f32.mrf.mxu0
        %v3977 = vadd.f32 0.0, %v3976
        %3978 = vmatmul.bf16.gmra.mxu0 %v3944
        %v3979 = vpop.f32.mrf.mxu0
        %v3980 = vadd.f32 0.0, %v3979
        %v3981 = vpop.f32.mrf.mxu0
        %v3982 = vadd.f32 0.0, %v3981
        %3983 = vdwg.mxu0
        %v3988 = vunpack.c.l.b16 %v3906
        %v3989 = vunpack.c.l.b16 %v3907
        %v3990 = vunpack.c.l.b16 %v3908
        %v3991 = vunpack.c.l.b16 %v3909
        %v3992 = vpack.c.b16 %v3989, %v3988
        %v3993 = vpack.c.b16 %v3991, %v3990
        %v3997 = vsel %vm1418, %v3992, 0
        %v4000 = vsel %vm1418, %v3993, 0
        %4002 = vmatpush.bf16.msra.mxu0 0
        %4003 = vmatpush.bf16.msra.mxu0 0
        %4004 = vmatpush.bf16.msra.mxu0 0
        %4005 = vmatpush.bf16.msra.mxu0 0
        %4006 = vmatpush.bf16.msra.mxu0 0
        %4007 = vmatpush.bf16.msra.mxu0 0
        %4008 = vmatpush.bf16.msra.mxu0 0
        %4009 = vmatpush.bf16.msra.mxu0 %v3931
        %4010 = vmatmul.bf16.gmra.mxu0 %v3997
        %v4011 = vpop.f32.mrf.mxu0
        %v4012 = vadd.f32 %v3956, %v4011
        %v4013 = vpop.f32.mrf.mxu0
        %v4014 = vadd.f32 %v3958, %v4013
        %4015 = vmatmul.bf16.gmra.mxu0 %v4000
        %v4016 = vpop.f32.mrf.mxu0
        %v4017 = vadd.f32 %v3961, %v4016
        %v4018 = vpop.f32.mrf.mxu0
        %v4019 = vadd.f32 %v3963, %v4018
        %4020 = vdwg.mxu0
        %4021 = vmatpush.bf16.msra.mxu0 0
        %4022 = vmatpush.bf16.msra.mxu0 0
        %4023 = vmatpush.bf16.msra.mxu0 0
        %4024 = vmatpush.bf16.msra.mxu0 0
        %4025 = vmatpush.bf16.msra.mxu0 0
        %4026 = vmatpush.bf16.msra.mxu0 0
        %4027 = vmatpush.bf16.msra.mxu0 0
        %4028 = vmatpush.bf16.msra.mxu0 %v3932
        %4029 = vmatmul.bf16.gmra.mxu0 %v3997
        %v4030 = vpop.f32.mrf.mxu0
        %v4031 = vadd.f32 %v3975, %v4030
        %v4032 = vpop.f32.mrf.mxu0
        %v4033 = vadd.f32 %v3977, %v4032
        %4034 = vmatmul.bf16.gmra.mxu0 %v4000
        %v4035 = vpop.f32.mrf.mxu0
        %v4036 = vadd.f32 %v3980, %v4035
        %v4037 = vpop.f32.mrf.mxu0
        %v4038 = vadd.f32 %v3982, %v4037
        %4039 = vdwg.mxu0
        %s4040 = scalar_lea.vmem %s5, 32
        %v4041 = vld [vmem:[%s4040] sm:$0xf]
        %v4042 = vld [vmem:[%s4040 + $0x4] sm:$0xf]
        %v4043 = vld [vmem:[%s4040 + $0x8] sm:$0xf]
        %v4044 = vld [vmem:[%s4040 + $0xc] sm:$0xf]
        %v4049 = vunpack.c.l.b16 %v4041
        %v4050 = vunpack.c.l.b16 %v4042
        %v4051 = vunpack.c.l.b16 %v4043
        %v4052 = vunpack.c.l.b16 %v4044
        %v4053 = vpack.c.b16 %v4050, %v4049
        %v4054 = vpack.c.b16 %v4052, %v4051
        %4055 = vrot.lane.b32.xlu0 %v3931, 126
        %v4056 = vpop.permute.xlu0 %4055
        %4057 = vrot.lane.b32.xlu0 %v3932, 126
        %v4058 = vpop.permute.xlu0 %4057
        %v4059 = vsel %vm1764, %v4056, %v4058
        %v4063 = vsel %vm1418, %v4053, 0
        %v4066 = vsel %vm1418, %v4054, 0
        %4068 = vmatpush.bf16.msra.mxu0 0
        %4069 = vmatpush.bf16.msra.mxu0 0
        %4070 = vmatpush.bf16.msra.mxu0 0
        %4071 = vmatpush.bf16.msra.mxu0 0
        %4072 = vmatpush.bf16.msra.mxu0 0
        %4073 = vmatpush.bf16.msra.mxu0 0
        %4074 = vmatpush.bf16.msra.mxu0 0
        %4075 = vmatpush.bf16.msra.mxu0 %v4059
        %4076 = vmatmul.bf16.gmra.mxu0 %v4063
        %v4077 = vpop.f32.mrf.mxu0
        %v4078 = vadd.f32 0.0, %v4077
        %v4079 = vpop.f32.mrf.mxu0
        %v4080 = vadd.f32 0.0, %v4079
        %4081 = vmatmul.bf16.gmra.mxu0 %v4066
        %v4082 = vpop.f32.mrf.mxu0
        %v4083 = vadd.f32 0.0, %v4082
        %v4084 = vpop.f32.mrf.mxu0
        %v4085 = vadd.f32 0.0, %v4084
        %4086 = vdwg.mxu0
        %4087 = vmatpush.bf16.msra.mxu0 0
        %4088 = vmatpush.bf16.msra.mxu0 0
        %4089 = vmatpush.bf16.msra.mxu0 0
        %4090 = vmatpush.bf16.msra.mxu0 0
        %4091 = vmatpush.bf16.msra.mxu0 0
        %4092 = vmatpush.bf16.msra.mxu0 0
        %4093 = vmatpush.bf16.msra.mxu0 0
        %4094 = vmatpush.bf16.msra.mxu0 %v4058
        %4095 = vmatmul.bf16.gmra.mxu0 %v4063
        %v4096 = vpop.f32.mrf.mxu0
        %v4097 = vadd.f32 0.0, %v4096
        %v4098 = vpop.f32.mrf.mxu0
        %v4099 = vadd.f32 0.0, %v4098
        %4100 = vmatmul.bf16.gmra.mxu0 %v4066
        %v4101 = vpop.f32.mrf.mxu0
        %v4102 = vadd.f32 0.0, %v4101
        %v4103 = vpop.f32.mrf.mxu0
        %v4104 = vadd.f32 0.0, %v4103
        %4105 = vdwg.mxu0
        %v4106 = vadd.f32 %v4012, %v4078
        %v4107 = vadd.f32 %v4031, %v4097
        %v4108 = vadd.f32 %v4014, %v4080
        %v4109 = vadd.f32 %v4033, %v4099
        %v4110 = vadd.f32 %v4017, %v4083
        %v4111 = vadd.f32 %v4036, %v4102
        %v4112 = vadd.f32 %v4019, %v4085
        %v4113 = vadd.f32 %v4038, %v4104
        %s4114 = scalar_lea.vmem %s5, 48
        %v4115 = vld [vmem:[%s4114] sm:$0xf]
        %v4116 = vld [vmem:[%s4114 + $0x4] sm:$0xf]
        %v4117 = vld [vmem:[%s4114 + $0x8] sm:$0xf]
        %v4118 = vld [vmem:[%s4114 + $0xc] sm:$0xf]
        %v4123 = vunpack.c.l.b16 %v4115
        %v4124 = vunpack.c.l.b16 %v4116
        %v4125 = vunpack.c.l.b16 %v4117
        %v4126 = vunpack.c.l.b16 %v4118
        %v4127 = vpack.c.b16 %v4124, %v4123
        %v4128 = vpack.c.b16 %v4126, %v4125
        %4129 = vrot.lane.b32.xlu0 %v3931, 114
        %v4130 = vpop.permute.xlu0 %4129
        %4131 = vrot.lane.b32.xlu0 %v3932, 114
        %v4132 = vpop.permute.xlu0 %4131
        %vm4133 = vcmask 932864
        %v4134 = vsel %vm4133, %v4130, %v4132
        %v4138 = vsel %vm1418, %v4127, 0
        %v4141 = vsel %vm1418, %v4128, 0
        %4143 = vmatpush.bf16.msra.mxu0 0
        %4144 = vmatpush.bf16.msra.mxu0 0
        %4145 = vmatpush.bf16.msra.mxu0 0
        %4146 = vmatpush.bf16.msra.mxu0 0
        %4147 = vmatpush.bf16.msra.mxu0 0
        %4148 = vmatpush.bf16.msra.mxu0 0
        %4149 = vmatpush.bf16.msra.mxu0 0
        %4150 = vmatpush.bf16.msra.mxu0 %v4134
        %4151 = vmatmul.bf16.gmra.mxu0 %v4138
        %v4152 = vpop.f32.mrf.mxu0
        %v4153 = vadd.f32 0.0, %v4152
        %v4154 = vpop.f32.mrf.mxu0
        %v4155 = vadd.f32 0.0, %v4154
        %4156 = vmatmul.bf16.gmra.mxu0 %v4141
        %v4157 = vpop.f32.mrf.mxu0
        %v4158 = vadd.f32 0.0, %v4157
        %v4159 = vpop.f32.mrf.mxu0
        %v4160 = vadd.f32 0.0, %v4159
        %4161 = vdwg.mxu0
        %4162 = vmatpush.bf16.msra.mxu0 0
        %4163 = vmatpush.bf16.msra.mxu0 0
        %4164 = vmatpush.bf16.msra.mxu0 0
        %4165 = vmatpush.bf16.msra.mxu0 0
        %4166 = vmatpush.bf16.msra.mxu0 0
        %4167 = vmatpush.bf16.msra.mxu0 0
        %4168 = vmatpush.bf16.msra.mxu0 0
        %4169 = vmatpush.bf16.msra.mxu0 %v4132
        %4170 = vmatmul.bf16.gmra.mxu0 %v4138
        %v4171 = vpop.f32.mrf.mxu0
        %v4172 = vadd.f32 0.0, %v4171
        %v4173 = vpop.f32.mrf.mxu0
        %v4174 = vadd.f32 0.0, %v4173
        %4175 = vmatmul.bf16.gmra.mxu0 %v4141
        %v4176 = vpop.f32.mrf.mxu0
        %v4177 = vadd.f32 0.0, %v4176
        %v4178 = vpop.f32.mrf.mxu0
        %v4179 = vadd.f32 0.0, %v4178
        %4180 = vdwg.mxu0
        %v4181 = vadd.f32 %v4106, %v4153
        %v4182 = vadd.f32 %v4107, %v4172
        %v4183 = vadd.f32 %v4108, %v4155
        %v4184 = vadd.f32 %v4109, %v4174
        %v4185 = vadd.f32 %v4110, %v4158
        %v4186 = vadd.f32 %v4111, %v4177
        %v4187 = vadd.f32 %v4112, %v4160
        %v4188 = vadd.f32 %v4113, %v4179
        %s4189 = scalar_lea.vmem %s5, 64
        %v4190 = vld [vmem:[%s4189] sm:$0xf]
        %v4191 = vld [vmem:[%s4189 + $0x4] sm:$0xf]
        %v4192 = vld [vmem:[%s4189 + $0x8] sm:$0xf]
        %v4193 = vld [vmem:[%s4189 + $0xc] sm:$0xf]
        %v4198 = vunpack.c.l.b16 %v4190
        %v4199 = vunpack.c.l.b16 %v4191
        %v4200 = vunpack.c.l.b16 %v4192
        %v4201 = vunpack.c.l.b16 %v4193
        %v4202 = vpack.c.b16 %v4199, %v4198
        %v4203 = vpack.c.b16 %v4201, %v4200
        %4204 = vrot.lane.b32.xlu0 %v3931, 113
        %v4205 = vpop.permute.xlu0 %4204
        %4206 = vrot.lane.b32.xlu0 %v3932, 113
        %v4207 = vpop.permute.xlu0 %4206
        %vm4208 = vcmask 924672
        %v4209 = vsel %vm4208, %v4205, %v4207
        %v4213 = vsel %vm1418, %v4202, 0
        %v4216 = vsel %vm1418, %v4203, 0
        %4218 = vmatpush.bf16.msra.mxu0 0
        %4219 = vmatpush.bf16.msra.mxu0 0
        %4220 = vmatpush.bf16.msra.mxu0 0
        %4221 = vmatpush.bf16.msra.mxu0 0
        %4222 = vmatpush.bf16.msra.mxu0 0
        %4223 = vmatpush.bf16.msra.mxu0 0
        %4224 = vmatpush.bf16.msra.mxu0 0
        %4225 = vmatpush.bf16.msra.mxu0 %v4209
        %4226 = vmatmul.bf16.gmra.mxu0 %v4213
        %v4227 = vpop.f32.mrf.mxu0
        %v4228 = vadd.f32 0.0, %v4227
        %v4229 = vpop.f32.mrf.mxu0
        %v4230 = vadd.f32 0.0, %v4229
        %4231 = vmatmul.bf16.gmra.mxu0 %v4216
        %v4232 = vpop.f32.mrf.mxu0
        %v4233 = vadd.f32 0.0, %v4232
        %v4234 = vpop.f32.mrf.mxu0
        %v4235 = vadd.f32 0.0, %v4234
        %4236 = vdwg.mxu0
        %4237 = vmatpush.bf16.msra.mxu0 0
        %4238 = vmatpush.bf16.msra.mxu0 0
        %4239 = vmatpush.bf16.msra.mxu0 0
        %4240 = vmatpush.bf16.msra.mxu0 0
        %4241 = vmatpush.bf16.msra.mxu0 0
        %4242 = vmatpush.bf16.msra.mxu0 0
        %4243 = vmatpush.bf16.msra.mxu0 0
        %4244 = vmatpush.bf16.msra.mxu0 %v4207
        %4245 = vmatmul.bf16.gmra.mxu0 %v4213
        %v4246 = vpop.f32.mrf.mxu0
        %v4247 = vadd.f32 0.0, %v4246
        %v4248 = vpop.f32.mrf.mxu0
        %v4249 = vadd.f32 0.0, %v4248
        %4250 = vmatmul.bf16.gmra.mxu0 %v4216
        %v4251 = vpop.f32.mrf.mxu0
        %v4252 = vadd.f32 0.0, %v4251
        %v4253 = vpop.f32.mrf.mxu0
        %v4254 = vadd.f32 0.0, %v4253
        %4255 = vdwg.mxu0
        %v4256 = vadd.f32 %v4181, %v4228
        %v4257 = vadd.f32 %v4182, %v4247
        %v4258 = vadd.f32 %v4183, %v4230
        %v4259 = vadd.f32 %v4184, %v4249
        %v4260 = vadd.f32 %v4185, %v4233
        %v4261 = vadd.f32 %v4186, %v4252
        %v4262 = vadd.f32 %v4187, %v4235
        %v4263 = vadd.f32 %v4188, %v4254
        %s4264 = scalar_lea.vmem %s5, 80
        %v4265 = vld [vmem:[%s4264] sm:$0xf]
        %v4266 = vld [vmem:[%s4264 + $0x4] sm:$0xf]
        %v4267 = vld [vmem:[%s4264 + $0x8] sm:$0xf]
        %v4268 = vld [vmem:[%s4264 + $0xc] sm:$0xf]
        %v4273 = vunpack.c.l.b16 %v4265
        %v4274 = vunpack.c.l.b16 %v4266
        %v4275 = vunpack.c.l.b16 %v4267
        %v4276 = vunpack.c.l.b16 %v4268
        %v4277 = vpack.c.b16 %v4274, %v4273
        %v4278 = vpack.c.b16 %v4276, %v4275
        %4279 = vrot.lane.b32.xlu0 %v3931, 112
        %v4280 = vpop.permute.xlu0 %4279
        %4281 = vrot.lane.b32.xlu0 %v3932, 112
        %v4282 = vpop.permute.xlu0 %4281
        %vm4283 = vcmask 916480
        %v4284 = vsel %vm4283, %v4280, %v4282
        %v4288 = vsel %vm1418, %v4277, 0
        %v4291 = vsel %vm1418, %v4278, 0
        %4293 = vmatpush.bf16.msra.mxu0 0
        %4294 = vmatpush.bf16.msra.mxu0 0
        %4295 = vmatpush.bf16.msra.mxu0 0
        %4296 = vmatpush.bf16.msra.mxu0 0
        %4297 = vmatpush.bf16.msra.mxu0 0
        %4298 = vmatpush.bf16.msra.mxu0 0
        %4299 = vmatpush.bf16.msra.mxu0 0
        %4300 = vmatpush.bf16.msra.mxu0 %v4284
        %4301 = vmatmul.bf16.gmra.mxu0 %v4288
        %v4302 = vpop.f32.mrf.mxu0
        %v4303 = vadd.f32 0.0, %v4302
        %v4304 = vpop.f32.mrf.mxu0
        %v4305 = vadd.f32 0.0, %v4304
        %4306 = vmatmul.bf16.gmra.mxu0 %v4291
        %v4307 = vpop.f32.mrf.mxu0
        %v4308 = vadd.f32 0.0, %v4307
        %v4309 = vpop.f32.mrf.mxu0
        %v4310 = vadd.f32 0.0, %v4309
        %4311 = vdwg.mxu0
        %4312 = vmatpush.bf16.msra.mxu0 0
        %4313 = vmatpush.bf16.msra.mxu0 0
        %4314 = vmatpush.bf16.msra.mxu0 0
        %4315 = vmatpush.bf16.msra.mxu0 0
        %4316 = vmatpush.bf16.msra.mxu0 0
        %4317 = vmatpush.bf16.msra.mxu0 0
        %4318 = vmatpush.bf16.msra.mxu0 0
        %4319 = vmatpush.bf16.msra.mxu0 %v4282
        %4320 = vmatmul.bf16.gmra.mxu0 %v4288
        %v4321 = vpop.f32.mrf.mxu0
        %v4322 = vadd.f32 0.0, %v4321
        %v4323 = vpop.f32.mrf.mxu0
        %v4324 = vadd.f32 0.0, %v4323
        %4325 = vmatmul.bf16.gmra.mxu0 %v4291
        %v4326 = vpop.f32.mrf.mxu0
        %v4327 = vadd.f32 0.0, %v4326
        %v4328 = vpop.f32.mrf.mxu0
        %v4329 = vadd.f32 0.0, %v4328
        %4330 = vdwg.mxu0
        %v4331 = vadd.f32 %v4256, %v4303
        %v4332 = vadd.f32 %v4257, %v4322
        %v4333 = vadd.f32 %v4258, %v4305
        %v4334 = vadd.f32 %v4259, %v4324
        %v4335 = vadd.f32 %v4260, %v4308
        %v4336 = vadd.f32 %v4261, %v4327
        %v4337 = vadd.f32 %v4262, %v4310
        %v4338 = vadd.f32 %v4263, %v4329
        %s4339 = scalar_lea.vmem %s5, 96
        %v4340 = vld [vmem:[%s4339] sm:$0xf]
        %v4341 = vld [vmem:[%s4339 + $0x4] sm:$0xf]
        %v4342 = vld [vmem:[%s4339 + $0x8] sm:$0xf]
        %v4343 = vld [vmem:[%s4339 + $0xc] sm:$0xf]
        %v4348 = vunpack.c.l.b16 %v4340
        %v4349 = vunpack.c.l.b16 %v4341
        %v4350 = vunpack.c.l.b16 %v4342
        %v4351 = vunpack.c.l.b16 %v4343
        %v4352 = vpack.c.b16 %v4349, %v4348
        %v4353 = vpack.c.b16 %v4351, %v4350
        %4354 = vrot.lane.b32.xlu0 %v3931, 100
        %v4355 = vpop.permute.xlu0 %4354
        %4356 = vrot.lane.b32.xlu0 %v3932, 100
        %v4357 = vpop.permute.xlu0 %4356
        %v4358 = vsel %vm1929, %v4355, %v4357
        %v4362 = vsel %vm1418, %v4352, 0
        %v4365 = vsel %vm1418, %v4353, 0
        %4367 = vmatpush.bf16.msra.mxu0 0
        %4368 = vmatpush.bf16.msra.mxu0 0
        %4369 = vmatpush.bf16.msra.mxu0 0
        %4370 = vmatpush.bf16.msra.mxu0 0
        %4371 = vmatpush.bf16.msra.mxu0 0
        %4372 = vmatpush.bf16.msra.mxu0 0
        %4373 = vmatpush.bf16.msra.mxu0 0
        %4374 = vmatpush.bf16.msra.mxu0 %v4358
        %4375 = vmatmul.bf16.gmra.mxu0 %v4362
        %v4376 = vpop.f32.mrf.mxu0
        %v4377 = vadd.f32 0.0, %v4376
        %v4378 = vpop.f32.mrf.mxu0
        %v4379 = vadd.f32 0.0, %v4378
        %4380 = vmatmul.bf16.gmra.mxu0 %v4365
        %v4381 = vpop.f32.mrf.mxu0
        %v4382 = vadd.f32 0.0, %v4381
        %v4383 = vpop.f32.mrf.mxu0
        %v4384 = vadd.f32 0.0, %v4383
        %4385 = vdwg.mxu0
        %4386 = vmatpush.bf16.msra.mxu0 0
        %4387 = vmatpush.bf16.msra.mxu0 0
        %4388 = vmatpush.bf16.msra.mxu0 0
        %4389 = vmatpush.bf16.msra.mxu0 0
        %4390 = vmatpush.bf16.msra.mxu0 0
        %4391 = vmatpush.bf16.msra.mxu0 0
        %4392 = vmatpush.bf16.msra.mxu0 0
        %4393 = vmatpush.bf16.msra.mxu0 %v4357
        %4394 = vmatmul.bf16.gmra.mxu0 %v4362
        %v4395 = vpop.f32.mrf.mxu0
        %v4396 = vadd.f32 0.0, %v4395
        %v4397 = vpop.f32.mrf.mxu0
        %v4398 = vadd.f32 0.0, %v4397
        %4399 = vmatmul.bf16.gmra.mxu0 %v4365
        %v4400 = vpop.f32.mrf.mxu0
        %v4401 = vadd.f32 0.0, %v4400
        %v4402 = vpop.f32.mrf.mxu0
        %v4403 = vadd.f32 0.0, %v4402
        %4404 = vdwg.mxu0
        %v4405 = vadd.f32 %v4331, %v4377
        %v4406 = vadd.f32 %v4332, %v4396
        %v4407 = vadd.f32 %v4333, %v4379
        %v4408 = vadd.f32 %v4334, %v4398
        %v4409 = vadd.f32 %v4335, %v4382
        %v4410 = vadd.f32 %v4336, %v4401
        %v4411 = vadd.f32 %v4337, %v4384
        %v4412 = vadd.f32 %v4338, %v4403
        %s4413 = scalar_lea.vmem %s5, 112
        %v4414 = vld [vmem:[%s4413] sm:$0xf]
        %v4415 = vld [vmem:[%s4413 + $0x4] sm:$0xf]
        %v4416 = vld [vmem:[%s4413 + $0x8] sm:$0xf]
        %v4417 = vld [vmem:[%s4413 + $0xc] sm:$0xf]
        %v4422 = vunpack.c.l.b16 %v4414
        %v4423 = vunpack.c.l.b16 %v4415
        %v4424 = vunpack.c.l.b16 %v4416
        %v4425 = vunpack.c.l.b16 %v4417
        %v4426 = vpack.c.b16 %v4423, %v4422
        %v4427 = vpack.c.b16 %v4425, %v4424
        %4428 = vrot.lane.b32.xlu0 %v3931, 99
        %v4429 = vpop.permute.xlu0 %4428
        %4430 = vrot.lane.b32.xlu0 %v3932, 99
        %v4431 = vpop.permute.xlu0 %4430
        %v4432 = vsel %vm2094, %v4429, %v4431
        %v4436 = vsel %vm1418, %v4426, 0
        %v4439 = vsel %vm1418, %v4427, 0
        %4441 = vmatpush.bf16.msra.mxu0 0
        %4442 = vmatpush.bf16.msra.mxu0 0
        %4443 = vmatpush.bf16.msra.mxu0 0
        %4444 = vmatpush.bf16.msra.mxu0 0
        %4445 = vmatpush.bf16.msra.mxu0 0
        %4446 = vmatpush.bf16.msra.mxu0 0
        %4447 = vmatpush.bf16.msra.mxu0 0
        %4448 = vmatpush.bf16.msra.mxu0 %v4432
        %4449 = vmatmul.bf16.gmra.mxu0 %v4436
        %v4450 = vpop.f32.mrf.mxu0
        %v4451 = vadd.f32 0.0, %v4450
        %v4452 = vpop.f32.mrf.mxu0
        %v4453 = vadd.f32 0.0, %v4452
        %4454 = vmatmul.bf16.gmra.mxu0 %v4439
        %v4455 = vpop.f32.mrf.mxu0
        %v4456 = vadd.f32 0.0, %v4455
        %v4457 = vpop.f32.mrf.mxu0
        %v4458 = vadd.f32 0.0, %v4457
        %4459 = vdwg.mxu0
        %4460 = vmatpush.bf16.msra.mxu0 0
        %4461 = vmatpush.bf16.msra.mxu0 0
        %4462 = vmatpush.bf16.msra.mxu0 0
        %4463 = vmatpush.bf16.msra.mxu0 0
        %4464 = vmatpush.bf16.msra.mxu0 0
        %4465 = vmatpush.bf16.msra.mxu0 0
        %4466 = vmatpush.bf16.msra.mxu0 0
        %4467 = vmatpush.bf16.msra.mxu0 %v4431
        %4468 = vmatmul.bf16.gmra.mxu0 %v4436
        %v4469 = vpop.f32.mrf.mxu0
        %v4470 = vadd.f32 0.0, %v4469
        %v4471 = vpop.f32.mrf.mxu0
        %v4472 = vadd.f32 0.0, %v4471
        %4473 = vmatmul.bf16.gmra.mxu0 %v4439
        %v4474 = vpop.f32.mrf.mxu0
        %v4475 = vadd.f32 0.0, %v4474
        %v4476 = vpop.f32.mrf.mxu0
        %v4477 = vadd.f32 0.0, %v4476
        %4478 = vdwg.mxu0
        %v4479 = vadd.f32 %v4405, %v4451
        %v4480 = vadd.f32 %v4406, %v4470
        %v4481 = vadd.f32 %v4407, %v4453
        %v4482 = vadd.f32 %v4408, %v4472
        %v4483 = vadd.f32 %v4409, %v4456
        %v4484 = vadd.f32 %v4410, %v4475
        %v4485 = vadd.f32 %v4411, %v4458
        %v4486 = vadd.f32 %v4412, %v4477
        %s4487 = scalar_lea.vmem %s5, 128
        %v4488 = vld [vmem:[%s4487] sm:$0xf]
        %v4489 = vld [vmem:[%s4487 + $0x4] sm:$0xf]
        %v4490 = vld [vmem:[%s4487 + $0x8] sm:$0xf]
        %v4491 = vld [vmem:[%s4487 + $0xc] sm:$0xf]
        %v4496 = vunpack.c.l.b16 %v4488
        %v4497 = vunpack.c.l.b16 %v4489
        %v4498 = vunpack.c.l.b16 %v4490
        %v4499 = vunpack.c.l.b16 %v4491
        %v4500 = vpack.c.b16 %v4497, %v4496
        %v4501 = vpack.c.b16 %v4499, %v4498
        %4502 = vrot.lane.b32.xlu0 %v3931, 98
        %v4503 = vpop.permute.xlu0 %4502
        %4504 = vrot.lane.b32.xlu0 %v3932, 98
        %v4505 = vpop.permute.xlu0 %4504
        %v4506 = vsel %vm2259, %v4503, %v4505
        %v4510 = vsel %vm1418, %v4500, 0
        %v4513 = vsel %vm1418, %v4501, 0
        %4515 = vmatpush.bf16.msra.mxu0 0
        %4516 = vmatpush.bf16.msra.mxu0 0
        %4517 = vmatpush.bf16.msra.mxu0 0
        %4518 = vmatpush.bf16.msra.mxu0 0
        %4519 = vmatpush.bf16.msra.mxu0 0
        %4520 = vmatpush.bf16.msra.mxu0 0
        %4521 = vmatpush.bf16.msra.mxu0 0
        %4522 = vmatpush.bf16.msra.mxu0 %v4506
        %4523 = vmatmul.bf16.gmra.mxu0 %v4510
        %v4524 = vpop.f32.mrf.mxu0
        %v4525 = vadd.f32 0.0, %v4524
        %v4526 = vpop.f32.mrf.mxu0
        %v4527 = vadd.f32 0.0, %v4526
        %4528 = vmatmul.bf16.gmra.mxu0 %v4513
        %v4529 = vpop.f32.mrf.mxu0
        %v4530 = vadd.f32 0.0, %v4529
        %v4531 = vpop.f32.mrf.mxu0
        %v4532 = vadd.f32 0.0, %v4531
        %4533 = vdwg.mxu0
        %4534 = vmatpush.bf16.msra.mxu0 0
        %4535 = vmatpush.bf16.msra.mxu0 0
        %4536 = vmatpush.bf16.msra.mxu0 0
        %4537 = vmatpush.bf16.msra.mxu0 0
        %4538 = vmatpush.bf16.msra.mxu0 0
        %4539 = vmatpush.bf16.msra.mxu0 0
        %4540 = vmatpush.bf16.msra.mxu0 0
        %4541 = vmatpush.bf16.msra.mxu0 %v4505
        %4542 = vmatmul.bf16.gmra.mxu0 %v4510
        %v4543 = vpop.f32.mrf.mxu0
        %v4544 = vadd.f32 0.0, %v4543
        %v4545 = vpop.f32.mrf.mxu0
        %v4546 = vadd.f32 0.0, %v4545
        %4547 = vmatmul.bf16.gmra.mxu0 %v4513
        %v4548 = vpop.f32.mrf.mxu0
        %v4549 = vadd.f32 0.0, %v4548
        %v4550 = vpop.f32.mrf.mxu0
        %v4551 = vadd.f32 0.0, %v4550
        %4552 = vdwg.mxu0
        %v4553 = vadd.f32 %v4479, %v4525
        %v4554 = vadd.f32 %v4480, %v4544
        %v4555 = vadd.f32 %v4481, %v4527
        %v4556 = vadd.f32 %v4482, %v4546
        %v4557 = vadd.f32 %v4483, %v4530
        %v4558 = vadd.f32 %v4484, %v4549
        %v4559 = vadd.f32 %v4485, %v4532
        %v4560 = vadd.f32 %v4486, %v4551
        %v4561 = vld [vmem:[%s6] sm:$0xff]
        %v4562 = vld [vmem:[%s6 + $0x8] sm:$0xff]
        %v4563 = vld [vmem:[%s6 + $0x10] sm:$0xff]
        %v4564 = vld [vmem:[%s6 + $0x18] sm:$0xff]
        %4566 = vset.pattern.permute.xlu0 0
        %4567 = vperm.xlu0 %4566, %v4561
        %v4568 = vpop.permute.xlu0 %4567
        %4571 = vset.pattern.permute.xlu0 0
        %4572 = vperm.xlu0 %4571, %v4562
        %v4573 = vpop.permute.xlu0 %4572
        %4576 = vset.pattern.permute.xlu0 0
        %4577 = vperm.xlu0 %4576, %v4563
        %v4578 = vpop.permute.xlu0 %4577
        %4581 = vset.pattern.permute.xlu0 0
        %4582 = vperm.xlu0 %4581, %v4564
        %v4583 = vpop.permute.xlu0 %4582
        %v4585 = vadd.f32 %v4553, %v4568
        %v4586 = vadd.f32 %v4554, %v4568
        %v4587 = vadd.f32 %v4555, %v4573
        %v4588 = vadd.f32 %v4556, %v4573
        %v4589 = vadd.f32 %v4557, %v4578
        %v4590 = vadd.f32 %v4558, %v4578
        %v4591 = vadd.f32 %v4559, %v4583
        %v4592 = vadd.f32 %v4560, %v4583
        %v4593 = vmax.f32 %v4585, 0.0
        %v4594 = vmax.f32 %v4586, 0.0
        %v4595 = vmax.f32 %v4587, 0.0
        %v4596 = vmax.f32 %v4588, 0.0
        %v4597 = vmax.f32 %v4589, 0.0
        %v4598 = vmax.f32 %v4590, 0.0
        %v4599 = vmax.f32 %v4591, 0.0
        %v4600 = vmax.f32 %v4592, 0.0
        %4609 = vrot.lane.b32.xlu0 %v4593, 114
        %v4610 = vpop.permute.xlu0 %4609
        %4611 = vrot.lane.b32.xlu0 %v4594, 114
        %v4612 = vpop.permute.xlu0 %4611
        %4613 = vrot.lane.b32.xlu0 %v4595, 114
        %v4614 = vpop.permute.xlu0 %4613
        %4615 = vrot.lane.b32.xlu0 %v4596, 114
        %v4616 = vpop.permute.xlu0 %4615
        %4617 = vrot.lane.b32.xlu0 %v4597, 114
        %v4618 = vpop.permute.xlu0 %4617
        %4619 = vrot.lane.b32.xlu0 %v4598, 114
        %v4620 = vpop.permute.xlu0 %4619
        %4621 = vrot.lane.b32.xlu0 %v4599, 114
        %v4622 = vpop.permute.xlu0 %4621
        %4623 = vrot.lane.b32.xlu0 %v4600, 114
        %v4624 = vpop.permute.xlu0 %4623
        %vm4625 = vcmask 932864
        %v4626 = vsel %vm4625, %v4610, %v4612
        %v4627 = vsel %vm4625, %v4614, %v4616
        %v4628 = vsel %vm4625, %v4618, %v4620
        %v4629 = vsel %vm4625, %v4622, %v4624
        %v4638 = vmax.f32 %v4593, %v4626
        %v4639 = vmax.f32 %v4594, %v4612
        %v4640 = vmax.f32 %v4595, %v4627
        %v4641 = vmax.f32 %v4596, %v4616
        %v4642 = vmax.f32 %v4597, %v4628
        %v4643 = vmax.f32 %v4598, %v4620
        %v4644 = vmax.f32 %v4599, %v4629
        %v4645 = vmax.f32 %v4600, %v4624
        %4654 = vrot.lane.b32.xlu0 %v4638, 127
        %v4655 = vpop.permute.xlu0 %4654
        %4656 = vrot.lane.b32.xlu0 %v4639, 127
        %v4657 = vpop.permute.xlu0 %4656
        %4658 = vrot.lane.b32.xlu0 %v4640, 127
        %v4659 = vpop.permute.xlu0 %4658
        %4660 = vrot.lane.b32.xlu0 %v4641, 127
        %v4661 = vpop.permute.xlu0 %4660
        %4662 = vrot.lane.b32.xlu0 %v4642, 127
        %v4663 = vpop.permute.xlu0 %4662
        %4664 = vrot.lane.b32.xlu0 %v4643, 127
        %v4665 = vpop.permute.xlu0 %4664
        %4666 = vrot.lane.b32.xlu0 %v4644, 127
        %v4667 = vpop.permute.xlu0 %4666
        %4668 = vrot.lane.b32.xlu0 %v4645, 127
        %v4669 = vpop.permute.xlu0 %4668
        %v4670 = vsel %vm561, %v4655, %v4657
        %v4671 = vsel %vm561, %v4659, %v4661
        %v4672 = vsel %vm561, %v4663, %v4665
        %v4673 = vsel %vm561, %v4667, %v4669
        %v4682 = vmax.f32 %v4638, %v4670
        %v4683 = vmax.f32 %v4639, %v4657
        %v4684 = vmax.f32 %v4640, %v4671
        %v4685 = vmax.f32 %v4641, %v4661
        %v4686 = vmax.f32 %v4642, %v4672
        %v4687 = vmax.f32 %v4643, %v4665
        %v4688 = vmax.f32 %v4644, %v4673
        %v4689 = vmax.f32 %v4645, %v4669
        %v4690 = vpack.c.bf16 %v4684, %v4682
        %v4691 = vpack.c.bf16 %v4685, %v4683
        %v4692 = vpack.c.bf16 %v4688, %v4686
        %v4693 = vpack.c.bf16 %v4689, %v4687
        %v4694 = vld [vmem:[%s8] sm:$0xf]
        %v4695 = vld [vmem:[%s8 + $0x4] sm:$0xf]
        %v4696 = vld [vmem:[%s8 + $0x8] sm:$0xf]
        %v4697 = vld [vmem:[%s8 + $0xc] sm:$0xf]
        %v4698 = vld [vmem:[%s8 + $0x10] sm:$0xf]
        %v4699 = vld [vmem:[%s8 + $0x14] sm:$0xf]
        %v4700 = vld [vmem:[%s8 + $0x18] sm:$0xf]
        %v4701 = vld [vmem:[%s8 + $0x1c] sm:$0xf]
        %v4702 = vld [vmem:[%s8 + $0x20] sm:$0xf]
        %v4703 = vld [vmem:[%s8 + $0x24] sm:$0xf]
        %v4704 = vld [vmem:[%s8 + $0x28] sm:$0xf]
        %v4705 = vld [vmem:[%s8 + $0x2c] sm:$0xf]
        %v4706 = vld [vmem:[%s8 + $0x30] sm:$0xf]
        %v4707 = vld [vmem:[%s8 + $0x34] sm:$0xf]
        %v4708 = vld [vmem:[%s8 + $0x38] sm:$0xf]
        %v4709 = vld [vmem:[%s8 + $0x3c] sm:$0xf]
        %v4710 = vld [vmem:[%s8 + $0x40] sm:$0xf]
        %v4711 = vld [vmem:[%s8 + $0x44] sm:$0xf]
        %v4712 = vld [vmem:[%s8 + $0x48] sm:$0xf]
        %v4732 = vunpack.c.l.b16 %v4694
        %v4733 = vunpack.c.l.b16 %v4695
        %v4734 = vunpack.c.l.b16 %v4696
        %v4735 = vunpack.c.l.b16 %v4697
        %v4736 = vunpack.c.l.b16 %v4698
        %v4737 = vunpack.c.l.b16 %v4699
        %v4738 = vunpack.c.l.b16 %v4700
        %v4739 = vunpack.c.l.b16 %v4701
        %v4740 = vunpack.c.l.b16 %v4702
        %v4741 = vunpack.c.l.b16 %v4703
        %v4742 = vunpack.c.l.b16 %v4704
        %v4743 = vunpack.c.l.b16 %v4705
        %v4744 = vunpack.c.l.b16 %v4706
        %v4745 = vunpack.c.l.b16 %v4707
        %v4746 = vunpack.c.l.b16 %v4708
        %v4747 = vunpack.c.l.b16 %v4709
        %v4748 = vunpack.c.l.b16 %v4710
        %v4749 = vunpack.c.l.b16 %v4711
        %v4750 = vunpack.c.l.b16 %v4712
        %v4751 = vpack.c.b16 %v4733, %v4732
        %v4752 = vpack.c.b16 %v4735, %v4734
        %v4753 = vpack.c.b16 %v4737, %v4736
        %v4754 = vpack.c.b16 %v4739, %v4738
        %v4755 = vpack.c.b16 %v4741, %v4740
        %v4756 = vpack.c.b16 %v4743, %v4742
        %v4757 = vpack.c.b16 %v4745, %v4744
        %v4758 = vpack.c.b16 %v4747, %v4746
        %v4759 = vpack.c.b16 %v4749, %v4748
        %v4760 = vpack.c.b16 %v4750, %v4750
        %vm4770 = vcmask 187392
        %v4772 = vsel %vm4770, %v4691, 0
        %v4775 = vsel %vm4770, %v4693, 0
        %vm4777 = vcmask 1042432
        %vm4778 = vcmask 1043456
        %v4779 = vsel %vm4777, 4294967295, 65535
        %v4780 = vsel %vm4778, %v4779, 0
        %v4782 = vand.u32 %v4760, %v4780
        %4784 = vmatpush.bf16.msra.mxu0 %v4758
        %4785 = vmatpush.bf16.msra.mxu0 %v4757
        %4786 = vmatpush.bf16.msra.mxu0 %v4756
        %4787 = vmatpush.bf16.msra.mxu0 %v4755
        %4788 = vmatpush.bf16.msra.mxu0 %v4754
        %4789 = vmatpush.bf16.msra.mxu0 %v4753
        %4790 = vmatpush.bf16.msra.mxu0 %v4752
        %4791 = vmatpush.bf16.msra.mxu0 %v4751
        %4792 = vmatmul.bf16.gmra.mxu0 %v4690
        %v4793 = vpop.f32.mrf.mxu0
        %v4794 = vadd.f32 0.0, %v4793
        %v4795 = vpop.f32.mrf.mxu0
        %v4796 = vadd.f32 0.0, %v4795
        %4797 = vmatmul.bf16.gmra.mxu0 %v4692
        %v4798 = vpop.f32.mrf.mxu0
        %v4799 = vadd.f32 0.0, %v4798
        %v4800 = vpop.f32.mrf.mxu0
        %v4801 = vadd.f32 0.0, %v4800
        %4802 = vdwg.mxu0
        %4803 = vmatpush.bf16.msra.mxu0 0
        %4804 = vmatpush.bf16.msra.mxu0 0
        %4805 = vmatpush.bf16.msra.mxu0 0
        %4806 = vmatpush.bf16.msra.mxu0 0
        %4807 = vmatpush.bf16.msra.mxu0 0
        %4808 = vmatpush.bf16.msra.mxu0 0
        %4809 = vmatpush.bf16.msra.mxu0 %v4782
        %4810 = vmatpush.bf16.msra.mxu0 %v4759
        %4811 = vmatmul.bf16.gmra.mxu0 %v4772
        %v4812 = vpop.f32.mrf.mxu0
        %v4813 = vadd.f32 %v4794, %v4812
        %v4814 = vpop.f32.mrf.mxu0
        %v4815 = vadd.f32 %v4796, %v4814
        %4816 = vmatmul.bf16.gmra.mxu0 %v4775
        %v4817 = vpop.f32.mrf.mxu0
        %v4818 = vadd.f32 %v4799, %v4817
        %v4819 = vpop.f32.mrf.mxu0
        %v4820 = vadd.f32 %v4801, %v4819
        %4821 = vdwg.mxu0
        %vm4822 = vcmask 293888
        %4823 = vst.msk [vmem:[#allocation3] sm:$0xff] %vm4822, %v4813
        %4824 = vst.msk [vmem:[#allocation3 + $0x8] sm:$0xff] %vm4822, %v4815
        %4825 = vst.msk [vmem:[#allocation3 + $0x10] sm:$0xff] %vm4822, %v4818
        %4826 = vst.msk [vmem:[#allocation3 + $0x18] sm:$0xff] %vm4822, %v4820
        %v4827 = vld [vmem:[#allocation3] sm:$0x1]
        %v4828 = vlaneseq
        %vm4829 = vcmp.ge.s32.totalorder %v4828, 0
        %vm4830 = vcmp.lt.s32.totalorder %v4828, 36
        %vm4831 = vmand %vm4829, %vm4830
        %4832 = vst.msk [vmem:[#allocation4] sm:$0x1] %vm4831, %v4827
        %v4833 = vld [vmem:[#allocation3 + $0x1] sm:$0x1]
        %4835 = vrot.lane.b32.xlu0 %v4833, 36
        %v4836 = vpop.permute.xlu0 %4835
        %vm4838 = vcmp.ge.s32.totalorder %v4828, 36
        %vm4839 = vcmp.lt.s32.totalorder %v4828, 72
        %vm4840 = vmand %vm4838, %vm4839
        %4841 = vst.msk [vmem:[#allocation4] sm:$0x1] %vm4840, %v4836
        %v4842 = vld [vmem:[#allocation3 + $0x2] sm:$0x1]
        %4844 = vrot.lane.b32.xlu0 %v4842, 72
        %v4845 = vpop.permute.xlu0 %4844
        %vm4847 = vcmp.ge.s32.totalorder %v4828, 72
        %vm4848 = vcmp.lt.s32.totalorder %v4828, 108
        %vm4849 = vmand %vm4847, %vm4848
        %4850 = vst.msk [vmem:[#allocation4] sm:$0x1] %vm4849, %v4845
        %v4851 = vld [vmem:[#allocation3 + $0x3] sm:$0x1]
        %4853 = vrot.lane.b32.xlu0 %v4851, 108
        %v4854 = vpop.permute.xlu0 %4853
        %v4855 = vrot.slane %v4854, 7
        %vm4856 = vcmask 883712
        %v4857 = vsel %vm4856, %v4855, %v4854
        %vm4859 = vcmp.ge.s32.totalorder %v4828, 108
        %vm4860 = vcmp.lt.s32.totalorder %v4828, 144
        %vm4861 = vmand %vm4859, %vm4860
        %4862 = vst.msk [vmem:[#allocation4] sm:$0x3] %vm4861, %v4857
        %v4863 = vld [vmem:[#allocation3 + $0x4] sm:$0x1]
        %4865 = vrot.lane.b32.xlu0 %v4863, 16
        %v4866 = vpop.permute.xlu0 %4865
        %vm4868 = vcmp.ge.s32.totalorder %v4828, 16
        %vm4869 = vcmp.lt.s32.totalorder %v4828, 52
        %vm4870 = vmand %vm4868, %vm4869
        %4871 = vst.msk [vmem:[#allocation4 + $0x1] sm:$0x1] %vm4870, %v4866
        %v4872 = vld [vmem:[#allocation3 + $0x5] sm:$0x1]
        %4874 = vrot.lane.b32.xlu0 %v4872, 52
        %v4875 = vpop.permute.xlu0 %4874
        %vm4877 = vcmp.ge.s32.totalorder %v4828, 52
        %vm4878 = vcmp.lt.s32.totalorder %v4828, 88
        %vm4879 = vmand %vm4877, %vm4878
        %4880 = vst.msk [vmem:[#allocation4 + $0x1] sm:$0x1] %vm4879, %v4875
        %v4881 = vld [vmem:[#allocation3 + $0x6] sm:$0x1]
        %4883 = vrot.lane.b32.xlu0 %v4881, 88
        %v4884 = vpop.permute.xlu0 %4883
        %vm4886 = vcmp.ge.s32.totalorder %v4828, 88
        %vm4887 = vcmp.lt.s32.totalorder %v4828, 124
        %vm4888 = vmand %vm4886, %vm4887
        %4889 = vst.msk [vmem:[#allocation4 + $0x1] sm:$0x1] %vm4888, %v4884
        %v4890 = vld [vmem:[#allocation3 + $0x7] sm:$0x1]
        %4892 = vrot.lane.b32.xlu0 %v4890, 124
        %v4893 = vpop.permute.xlu0 %4892
        %v4894 = vrot.slane %v4893, 7
        %vm4895 = vcmask 1014784
        %v4896 = vsel %vm4895, %v4894, %v4893
        %vm4898 = vcmp.ge.s32.totalorder %v4828, 124
        %vm4899 = vcmp.lt.s32.totalorder %v4828, 160
        %vm4900 = vmand %vm4898, %vm4899
        %4901 = vst.msk [vmem:[#allocation4 + $0x1] sm:$0x3] %vm4900, %v4896
        %v4902 = vld [vmem:[#allocation3 + $0x8] sm:$0x1]
        %4904 = vrot.lane.b32.xlu0 %v4902, 32
        %v4905 = vpop.permute.xlu0 %4904
        %vm4907 = vcmp.ge.s32.totalorder %v4828, 32
        %vm4908 = vcmp.lt.s32.totalorder %v4828, 68
        %vm4909 = vmand %vm4907, %vm4908
        %4910 = vst.msk [vmem:[#allocation4 + $0x2] sm:$0x1] %vm4909, %v4905
        %v4911 = vld [vmem:[#allocation3 + $0x9] sm:$0x1]
        %4913 = vrot.lane.b32.xlu0 %v4911, 68
        %v4914 = vpop.permute.xlu0 %4913
        %vm4916 = vcmp.ge.s32.totalorder %v4828, 68
        %vm4917 = vcmp.lt.s32.totalorder %v4828, 104
        %vm4918 = vmand %vm4916, %vm4917
        %4919 = vst.msk [vmem:[#allocation4 + $0x2] sm:$0x1] %vm4918, %v4914
        %v4920 = vld [vmem:[#allocation3 + $0xa] sm:$0x1]
        %4922 = vrot.lane.b32.xlu0 %v4920, 104
        %v4923 = vpop.permute.xlu0 %4922
        %v4924 = vrot.slane %v4923, 7
        %vm4925 = vcmask 850944
        %v4926 = vsel %vm4925, %v4924, %v4923
        %vm4928 = vcmp.ge.s32.totalorder %v4828, 104
        %vm4929 = vcmp.lt.s32.totalorder %v4828, 140
        %vm4930 = vmand %vm4928, %vm4929
        %4931 = vst.msk [vmem:[#allocation4 + $0x2] sm:$0x3] %vm4930, %v4926
        %v4932 = vld [vmem:[#allocation3 + $0xb] sm:$0x1]
        %4934 = vrot.lane.b32.xlu0 %v4932, 12
        %v4935 = vpop.permute.xlu0 %4934
        %vm4937 = vcmp.ge.s32.totalorder %v4828, 12
        %vm4938 = vcmp.lt.s32.totalorder %v4828, 48
        %vm4939 = vmand %vm4937, %vm4938
        %4940 = vst.msk [vmem:[#allocation4 + $0x3] sm:$0x1] %vm4939, %v4935
        %v4941 = vld [vmem:[#allocation3 + $0xc] sm:$0x1]
        %4943 = vrot.lane.b32.xlu0 %v4941, 48
        %v4944 = vpop.permute.xlu0 %4943
        %vm4946 = vcmp.ge.s32.totalorder %v4828, 48
        %vm4947 = vcmp.lt.s32.totalorder %v4828, 84
        %vm4948 = vmand %vm4946, %vm4947
        %4949 = vst.msk [vmem:[#allocation4 + $0x3] sm:$0x1] %vm4948, %v4944
        %v4950 = vld [vmem:[#allocation3 + $0xd] sm:$0x1]
        %4952 = vrot.lane.b32.xlu0 %v4950, 84
        %v4953 = vpop.permute.xlu0 %4952
        %vm4955 = vcmp.ge.s32.totalorder %v4828, 84
        %vm4956 = vcmp.lt.s32.totalorder %v4828, 120
        %vm4957 = vmand %vm4955, %vm4956
        %4958 = vst.msk [vmem:[#allocation4 + $0x3] sm:$0x1] %vm4957, %v4953
        %v4959 = vld [vmem:[#allocation3 + $0xe] sm:$0x1]
        %4961 = vrot.lane.b32.xlu0 %v4959, 120
        %v4962 = vpop.permute.xlu0 %4961
        %v4963 = vrot.slane %v4962, 7
        %vm4964 = vcmask 982016
        %v4965 = vsel %vm4964, %v4963, %v4962
        %vm4967 = vcmp.ge.s32.totalorder %v4828, 120
        %vm4968 = vcmp.lt.s32.totalorder %v4828, 156
        %vm4969 = vmand %vm4967, %vm4968
        %4970 = vst.msk [vmem:[#allocation4 + $0x3] sm:$0x3] %vm4969, %v4965
        %v4971 = vld [vmem:[#allocation3 + $0xf] sm:$0x1]
        %4973 = vrot.lane.b32.xlu0 %v4971, 28
        %v4974 = vpop.permute.xlu0 %4973
        %vm4976 = vcmp.ge.s32.totalorder %v4828, 28
        %vm4977 = vcmp.lt.s32.totalorder %v4828, 64
        %vm4978 = vmand %vm4976, %vm4977
        %4979 = vst.msk [vmem:[#allocation4 + $0x4] sm:$0x1] %vm4978, %v4974
        %v4980 = vld [vmem:[#allocation3 + $0x10] sm:$0x1]
        %4982 = vrot.lane.b32.xlu0 %v4980, 64
        %v4983 = vpop.permute.xlu0 %4982
        %vm4985 = vcmp.ge.s32.totalorder %v4828, 64
        %vm4986 = vcmp.lt.s32.totalorder %v4828, 100
        %vm4987 = vmand %vm4985, %vm4986
        %4988 = vst.msk [vmem:[#allocation4 + $0x4] sm:$0x1] %vm4987, %v4983
        %v4989 = vld [vmem:[#allocation3 + $0x11] sm:$0x1]
        %4991 = vrot.lane.b32.xlu0 %v4989, 100
        %v4992 = vpop.permute.xlu0 %4991
        %v4993 = vrot.slane %v4992, 7
        %v4994 = vsel %vm781, %v4993, %v4992
        %vm4996 = vcmp.ge.s32.totalorder %v4828, 100
        %vm4997 = vcmp.lt.s32.totalorder %v4828, 136
        %vm4998 = vmand %vm4996, %vm4997
        %4999 = vst.msk [vmem:[#allocation4 + $0x4] sm:$0x3] %vm4998, %v4994
        %v5000 = vld [vmem:[#allocation3 + $0x12] sm:$0x1]
        %5002 = vrot.lane.b32.xlu0 %v5000, 8
        %v5003 = vpop.permute.xlu0 %5002
        %vm5005 = vcmp.ge.s32.totalorder %v4828, 8
        %vm5006 = vcmp.lt.s32.totalorder %v4828, 44
        %vm5007 = vmand %vm5005, %vm5006
        %5008 = vst.msk [vmem:[#allocation4 + $0x5] sm:$0x1] %vm5007, %v5003
        %v5009 = vld [vmem:[#allocation3 + $0x13] sm:$0x1]
        %5011 = vrot.lane.b32.xlu0 %v5009, 44
        %v5012 = vpop.permute.xlu0 %5011
        %vm5014 = vcmp.ge.s32.totalorder %v4828, 44
        %vm5015 = vcmp.lt.s32.totalorder %v4828, 80
        %vm5016 = vmand %vm5014, %vm5015
        %5017 = vst.msk [vmem:[#allocation4 + $0x5] sm:$0x1] %vm5016, %v5012
        %v5018 = vld [vmem:[#allocation3 + $0x14] sm:$0x1]
        %5020 = vrot.lane.b32.xlu0 %v5018, 80
        %v5021 = vpop.permute.xlu0 %5020
        %vm5023 = vcmp.ge.s32.totalorder %v4828, 80
        %vm5024 = vcmp.lt.s32.totalorder %v4828, 116
        %vm5025 = vmand %vm5023, %vm5024
        %5026 = vst.msk [vmem:[#allocation4 + $0x5] sm:$0x1] %vm5025, %v5021
        %v5027 = vld [vmem:[#allocation3 + $0x15] sm:$0x1]
        %5029 = vrot.lane.b32.xlu0 %v5027, 116
        %v5030 = vpop.permute.xlu0 %5029
        %v5031 = vrot.slane %v5030, 7
        %vm5032 = vcmask 949248
        %v5033 = vsel %vm5032, %v5031, %v5030
        %vm5035 = vcmp.ge.s32.totalorder %v4828, 116
        %vm5036 = vcmp.lt.s32.totalorder %v4828, 152
        %vm5037 = vmand %vm5035, %vm5036
        %5038 = vst.msk [vmem:[#allocation4 + $0x5] sm:$0x3] %vm5037, %v5033
        %v5039 = vld [vmem:[#allocation3 + $0x16] sm:$0x1]
        %5041 = vrot.lane.b32.xlu0 %v5039, 24
        %v5042 = vpop.permute.xlu0 %5041
        %vm5044 = vcmp.ge.s32.totalorder %v4828, 24
        %vm5045 = vcmp.lt.s32.totalorder %v4828, 60
        %vm5046 = vmand %vm5044, %vm5045
        %5047 = vst.msk [vmem:[#allocation4 + $0x6] sm:$0x1] %vm5046, %v5042
        %v5048 = vld [vmem:[#allocation3 + $0x17] sm:$0x1]
        %5050 = vrot.lane.b32.xlu0 %v5048, 60
        %v5051 = vpop.permute.xlu0 %5050
        %vm5053 = vcmp.ge.s32.totalorder %v4828, 60
        %vm5054 = vcmp.lt.s32.totalorder %v4828, 96
        %vm5055 = vmand %vm5053, %vm5054
        %5056 = vst.msk [vmem:[#allocation4 + $0x6] sm:$0x1] %vm5055, %v5051
        %v5057 = vld [vmem:[#allocation3 + $0x18] sm:$0x1]
        %5059 = vrot.lane.b32.xlu0 %v5057, 96
        %v5060 = vpop.permute.xlu0 %5059
        %v5061 = vrot.slane %v5060, 7
        %vm5062 = vcmask 785408
        %v5063 = vsel %vm5062, %v5061, %v5060
        %vm5065 = vcmp.ge.s32.totalorder %v4828, 96
        %vm5066 = vcmp.lt.s32.totalorder %v4828, 132
        %vm5067 = vmand %vm5065, %vm5066
        %5068 = vst.msk [vmem:[#allocation4 + $0x6] sm:$0x3] %vm5067, %v5063
        %v5069 = vld [vmem:[#allocation3 + $0x19] sm:$0x1]
        %5071 = vrot.lane.b32.xlu0 %v5069, 4
        %v5072 = vpop.permute.xlu0 %5071
        %vm5074 = vcmp.ge.s32.totalorder %v4828, 4
        %vm5075 = vcmp.lt.s32.totalorder %v4828, 40
        %vm5076 = vmand %vm5074, %vm5075
        %5077 = vst.msk [vmem:[#allocation4 + $0x7] sm:$0x1] %vm5076, %v5072
        %v5078 = vld [vmem:[#allocation3 + $0x1a] sm:$0x1]
        %5080 = vrot.lane.b32.xlu0 %v5078, 40
        %v5081 = vpop.permute.xlu0 %5080
        %vm5083 = vcmp.ge.s32.totalorder %v4828, 40
        %vm5084 = vcmp.lt.s32.totalorder %v4828, 76
        %vm5085 = vmand %vm5083, %vm5084
        %5086 = vst.msk [vmem:[#allocation4 + $0x7] sm:$0x1] %vm5085, %v5081
        %v5087 = vld [vmem:[#allocation3 + $0x1b] sm:$0x1]
        %5089 = vrot.lane.b32.xlu0 %v5087, 76
        %v5090 = vpop.permute.xlu0 %5089
        %vm5092 = vcmp.ge.s32.totalorder %v4828, 76
        %vm5093 = vcmp.lt.s32.totalorder %v4828, 112
        %vm5094 = vmand %vm5092, %vm5093
        %5095 = vst.msk [vmem:[#allocation4 + $0x7] sm:$0x1] %vm5094, %v5090
        %v5096 = vld [vmem:[#allocation3 + $0x1c] sm:$0x1]
        %5098 = vrot.lane.b32.xlu0 %v5096, 112
        %v5099 = vpop.permute.xlu0 %5098
        %v5100 = vrot.slane %v5099, 7
        %vm5101 = vcmask 916480
        %v5102 = vsel %vm5101, %v5100, %v5099
        %vm5104 = vcmp.ge.s32.totalorder %v4828, 112
        %vm5105 = vcmp.lt.s32.totalorder %v4828, 148
        %vm5106 = vmand %vm5104, %vm5105
        %5107 = vst.msk [vmem:[#allocation4 + $0x7] sm:$0x3] %vm5106, %v5102
        %v5108 = vld [vmem:[#allocation3 + $0x1d] sm:$0x1]
        %5110 = vrot.lane.b32.xlu0 %v5108, 20
        %v5111 = vpop.permute.xlu0 %5110
        %vm5113 = vcmp.ge.s32.totalorder %v4828, 20
        %vm5114 = vcmp.lt.s32.totalorder %v4828, 56
        %vm5115 = vmand %vm5113, %vm5114
        %5116 = vst.msk [vmem:[#allocation4 + $0x8] sm:$0x1] %vm5115, %v5111
        %v5117 = vld [vmem:[#allocation3 + $0x1e] sm:$0x1]
        %5119 = vrot.lane.b32.xlu0 %v5117, 56
        %v5120 = vpop.permute.xlu0 %5119
        %vm5122 = vcmp.ge.s32.totalorder %v4828, 56
        %vm5123 = vcmp.lt.s32.totalorder %v4828, 92
        %vm5124 = vmand %vm5122, %vm5123
        %5125 = vst.msk [vmem:[#allocation4 + $0x8] sm:$0x1] %vm5124, %v5120
        %v5126 = vld [vmem:[#allocation3 + $0x1f] sm:$0x1]
        %5128 = vrot.lane.b32.xlu0 %v5126, 92
        %v5129 = vpop.permute.xlu0 %5128
        %vm5131 = vcmp.ge.s32.totalorder %v4828, 92
        %vm5132 = vcmp.lt.s32.totalorder %v4828, 128
        %vm5133 = vmand %vm5131, %vm5132
        %5134 = vst.msk [vmem:[#allocation4 + $0x8] sm:$0x1] %vm5133, %v5129
        %v5135 = vld [vmem:[#allocation4] sm:$0xff]
        %v5136 = vld [vmem:[#allocation4 + $0x8] sm:$0x1]
        %v5139 = vperm.slane %v5135, 0
        %v5140 = vperm.slane %v5135, 1
        %v5141 = vperm.slane %v5135, 2
        %v5142 = vperm.slane %v5135, 3
        %v5143 = vperm.slane %v5135, 4
        %v5144 = vperm.slane %v5135, 5
        %v5145 = vperm.slane %v5135, 6
        %v5146 = vperm.slane %v5135, 7
        %v5147 = vperm.slane %v5136, 0
        %v5157 = vpack.c.bf16 %v5139, %v5139
        %v5158 = vpack.c.bf16 %v5140, %v5140
        %v5159 = vpack.c.bf16 %v5141, %v5141
        %v5160 = vpack.c.bf16 %v5142, %v5142
        %v5161 = vpack.c.bf16 %v5143, %v5143
        %v5162 = vpack.c.bf16 %v5144, %v5144
        %v5163 = vpack.c.bf16 %v5145, %v5145
        %v5164 = vpack.c.bf16 %v5146, %v5146
        %v5165 = vpack.c.bf16 %v5147, %v5147
        %v5166 = vld [vmem:[%s9] sm:$0xf]
        %v5167 = vld [vmem:[%s9 + $0x4] sm:$0xf]
        %v5168 = vld [vmem:[%s9 + $0x8] sm:$0xf]
        %v5169 = vld [vmem:[%s9 + $0xc] sm:$0xf]
        %v5170 = vld [vmem:[%s9 + $0x10] sm:$0xf]
        %v5171 = vld [vmem:[%s9 + $0x14] sm:$0xf]
        %v5172 = vld [vmem:[%s9 + $0x18] sm:$0xf]
        %v5173 = vld [vmem:[%s9 + $0x1c] sm:$0xf]
        %v5174 = vld [vmem:[%s9 + $0x20] sm:$0xf]
        %v5175 = vld [vmem:[%s9 + $0x24] sm:$0xf]
        %v5176 = vld [vmem:[%s9 + $0x28] sm:$0xf]
        %v5177 = vld [vmem:[%s9 + $0x2c] sm:$0xf]
        %v5178 = vld [vmem:[%s9 + $0x30] sm:$0xf]
        %v5179 = vld [vmem:[%s9 + $0x34] sm:$0xf]
        %v5180 = vld [vmem:[%s9 + $0x38] sm:$0xf]
        %v5181 = vld [vmem:[%s9 + $0x3c] sm:$0xf]
        %v5182 = vld [vmem:[%s9 + $0x40] sm:$0xf]
        %v5183 = vld [vmem:[%s9 + $0x44] sm:$0xf]
        %v5184 = vld [vmem:[%s9 + $0x48] sm:$0xf]
        %v5185 = vld [vmem:[%s9 + $0x4c] sm:$0xf]
        %v5186 = vld [vmem:[%s9 + $0x50] sm:$0xf]
        %v5187 = vld [vmem:[%s9 + $0x54] sm:$0xf]
        %v5188 = vld [vmem:[%s9 + $0x58] sm:$0xf]
        %v5189 = vld [vmem:[%s9 + $0x5c] sm:$0xf]
        %v5190 = vld [vmem:[%s9 + $0x60] sm:$0xf]
        %v5191 = vld [vmem:[%s9 + $0x64] sm:$0xf]
        %v5192 = vld [vmem:[%s9 + $0x68] sm:$0xf]
        %v5193 = vld [vmem:[%s9 + $0x6c] sm:$0xf]
        %v5194 = vld [vmem:[%s9 + $0x70] sm:$0xf]
        %v5195 = vld [vmem:[%s9 + $0x74] sm:$0xf]
        %v5196 = vld [vmem:[%s9 + $0x78] sm:$0xf]
        %v5197 = vld [vmem:[%s9 + $0x7c] sm:$0xf]
        %v5198 = vld [vmem:[%s9 + $0x80] sm:$0xf]
        %v5199 = vld [vmem:[%s9 + $0x84] sm:$0xf]
        %v5200 = vld [vmem:[%s9 + $0x88] sm:$0xf]
        %v5201 = vld [vmem:[%s9 + $0x8c] sm:$0xf]
        %v5202 = vld [vmem:[%s9 + $0x90] sm:$0xf]
        %v5203 = vld [vmem:[%s9 + $0x94] sm:$0xf]
        %v5204 = vld [vmem:[%s9 + $0x98] sm:$0xf]
        %v5205 = vld [vmem:[%s9 + $0x9c] sm:$0xf]
        %v5206 = vld [vmem:[%s9 + $0xa0] sm:$0xf]
        %v5207 = vld [vmem:[%s9 + $0xa4] sm:$0xf]
        %v5208 = vld [vmem:[%s9 + $0xa8] sm:$0xf]
        %v5209 = vld [vmem:[%s9 + $0xac] sm:$0xf]
        %v5210 = vld [vmem:[%s9 + $0xb0] sm:$0xf]
        %v5211 = vld [vmem:[%s9 + $0xb4] sm:$0xf]
        %v5212 = vld [vmem:[%s9 + $0xb8] sm:$0xf]
        %v5213 = vld [vmem:[%s9 + $0xbc] sm:$0xf]
        %v5214 = vld [vmem:[%s9 + $0xc0] sm:$0xf]
        %v5215 = vld [vmem:[%s9 + $0xc4] sm:$0xf]
        %v5216 = vld [vmem:[%s9 + $0xc8] sm:$0xf]
        %v5217 = vld [vmem:[%s9 + $0xcc] sm:$0xf]
        %v5218 = vld [vmem:[%s9 + $0xd0] sm:$0xf]
        %v5219 = vld [vmem:[%s9 + $0xd4] sm:$0xf]
        %v5220 = vld [vmem:[%s9 + $0xd8] sm:$0xf]
        %v5221 = vld [vmem:[%s9 + $0xdc] sm:$0xf]
        %v5222 = vld [vmem:[%s9 + $0xe0] sm:$0xf]
        %v5223 = vld [vmem:[%s9 + $0xe4] sm:$0xf]
        %v5224 = vld [vmem:[%s9 + $0xe8] sm:$0xf]
        %v5225 = vld [vmem:[%s9 + $0xec] sm:$0xf]
        %v5226 = vld [vmem:[%s9 + $0xf0] sm:$0xf]
        %v5227 = vld [vmem:[%s9 + $0xf4] sm:$0xf]
        %v5228 = vld [vmem:[%s9 + $0xf8] sm:$0xf]
        %v5229 = vld [vmem:[%s9 + $0xfc] sm:$0xf]
        %v5230 = vld [vmem:[%s9 + $0x100] sm:$0xf]
        %v5231 = vld [vmem:[%s9 + $0x104] sm:$0xf]
        %v5232 = vld [vmem:[%s9 + $0x108] sm:$0xf]
        %v5233 = vld [vmem:[%s9 + $0x10c] sm:$0xf]
        %v5234 = vld [vmem:[%s9 + $0x110] sm:$0xf]
        %v5235 = vld [vmem:[%s9 + $0x114] sm:$0xf]
        %v5236 = vld [vmem:[%s9 + $0x118] sm:$0xf]
        %v5237 = vld [vmem:[%s9 + $0x11c] sm:$0xf]
        %v5238 = vld [vmem:[%s9 + $0x120] sm:$0xf]
        %v5239 = vld [vmem:[%s9 + $0x124] sm:$0xf]
        %v5240 = vld [vmem:[%s9 + $0x128] sm:$0xf]
        %v5241 = vld [vmem:[%s9 + $0x12c] sm:$0xf]
        %v5242 = vld [vmem:[%s9 + $0x130] sm:$0xf]
        %v5243 = vld [vmem:[%s9 + $0x134] sm:$0xf]
        %v5244 = vld [vmem:[%s9 + $0x138] sm:$0xf]
        %v5245 = vld [vmem:[%s9 + $0x13c] sm:$0xf]
        %v5246 = vld [vmem:[%s9 + $0x140] sm:$0xf]
        %v5247 = vld [vmem:[%s9 + $0x144] sm:$0xf]
        %v5248 = vld [vmem:[%s9 + $0x148] sm:$0xf]
        %v5249 = vld [vmem:[%s9 + $0x14c] sm:$0xf]
        %v5250 = vld [vmem:[%s9 + $0x150] sm:$0xf]
        %v5251 = vld [vmem:[%s9 + $0x154] sm:$0xf]
        %v5252 = vld [vmem:[%s9 + $0x158] sm:$0xf]
        %v5253 = vld [vmem:[%s9 + $0x15c] sm:$0xf]
        %v5254 = vld [vmem:[%s9 + $0x160] sm:$0xf]
        %v5255 = vld [vmem:[%s9 + $0x164] sm:$0xf]
        %v5256 = vld [vmem:[%s9 + $0x168] sm:$0xf]
        %v5257 = vld [vmem:[%s9 + $0x16c] sm:$0xf]
        %v5258 = vld [vmem:[%s9 + $0x170] sm:$0xf]
        %v5259 = vld [vmem:[%s9 + $0x174] sm:$0xf]
        %v5260 = vld [vmem:[%s9 + $0x178] sm:$0xf]
        %v5261 = vld [vmem:[%s9 + $0x17c] sm:$0xf]
        %v5262 = vld [vmem:[%s9 + $0x180] sm:$0xf]
        %v5263 = vld [vmem:[%s9 + $0x184] sm:$0xf]
        %v5264 = vld [vmem:[%s9 + $0x188] sm:$0xf]
        %v5265 = vld [vmem:[%s9 + $0x18c] sm:$0xf]
        %v5266 = vld [vmem:[%s9 + $0x190] sm:$0xf]
        %v5267 = vld [vmem:[%s9 + $0x194] sm:$0xf]
        %v5268 = vld [vmem:[%s9 + $0x198] sm:$0xf]
        %v5269 = vld [vmem:[%s9 + $0x19c] sm:$0xf]
        %v5270 = vld [vmem:[%s9 + $0x1a0] sm:$0xf]
        %v5271 = vld [vmem:[%s9 + $0x1a4] sm:$0xf]
        %v5272 = vld [vmem:[%s9 + $0x1a8] sm:$0xf]
        %v5273 = vld [vmem:[%s9 + $0x1ac] sm:$0xf]
        %v5274 = vld [vmem:[%s9 + $0x1b0] sm:$0xf]
        %v5275 = vld [vmem:[%s9 + $0x1b4] sm:$0xf]
        %v5276 = vld [vmem:[%s9 + $0x1b8] sm:$0xf]
        %v5277 = vld [vmem:[%s9 + $0x1bc] sm:$0xf]
        %v5278 = vld [vmem:[%s9 + $0x1c0] sm:$0xf]
        %v5279 = vld [vmem:[%s9 + $0x1c4] sm:$0xf]
        %v5280 = vld [vmem:[%s9 + $0x1c8] sm:$0xf]
        %v5281 = vld [vmem:[%s9 + $0x1cc] sm:$0xf]
        %v5282 = vld [vmem:[%s9 + $0x1d0] sm:$0xf]
        %v5283 = vld [vmem:[%s9 + $0x1d4] sm:$0xf]
        %v5284 = vld [vmem:[%s9 + $0x1d8] sm:$0xf]
        %v5285 = vld [vmem:[%s9 + $0x1dc] sm:$0xf]
        %v5286 = vld [vmem:[%s9 + $0x1e0] sm:$0xf]
        %v5287 = vld [vmem:[%s9 + $0x1e4] sm:$0xf]
        %v5288 = vld [vmem:[%s9 + $0x1e8] sm:$0xf]
        %v5289 = vld [vmem:[%s9 + $0x1ec] sm:$0xf]
        %v5290 = vld [vmem:[%s9 + $0x1f0] sm:$0xf]
        %v5291 = vld [vmem:[%s9 + $0x1f4] sm:$0xf]
        %v5292 = vld [vmem:[%s9 + $0x1f8] sm:$0xf]
        %v5293 = vld [vmem:[%s9 + $0x1fc] sm:$0xf]
        %v5294 = vld [vmem:[%s9 + $0x200] sm:$0xf]
        %v5295 = vld [vmem:[%s9 + $0x204] sm:$0xf]
        %v5296 = vld [vmem:[%s9 + $0x208] sm:$0xf]
        %v5297 = vld [vmem:[%s9 + $0x20c] sm:$0xf]
        %v5298 = vld [vmem:[%s9 + $0x210] sm:$0xf]
        %v5299 = vld [vmem:[%s9 + $0x214] sm:$0xf]
        %v5300 = vld [vmem:[%s9 + $0x218] sm:$0xf]
        %v5301 = vld [vmem:[%s9 + $0x21c] sm:$0xf]
        %v5302 = vld [vmem:[%s9 + $0x220] sm:$0xf]
        %v5303 = vld [vmem:[%s9 + $0x224] sm:$0xf]
        %v5304 = vld [vmem:[%s9 + $0x228] sm:$0xf]
        %v5305 = vld [vmem:[%s9 + $0x22c] sm:$0xf]
        %v5306 = vld [vmem:[%s9 + $0x230] sm:$0xf]
        %v5307 = vld [vmem:[%s9 + $0x234] sm:$0xf]
        %v5308 = vld [vmem:[%s9 + $0x238] sm:$0xf]
        %v5309 = vld [vmem:[%s9 + $0x23c] sm:$0xf]
        %v5310 = vld [vmem:[%s10] sm:$0x1]
        %v5455 = vunpack.c.l.b16 %v5166
        %v5456 = vunpack.c.l.b16 %v5167
        %v5457 = vunpack.c.l.b16 %v5168
        %v5458 = vunpack.c.l.b16 %v5169
        %v5459 = vunpack.c.l.b16 %v5170
        %v5460 = vunpack.c.l.b16 %v5171
        %v5461 = vunpack.c.l.b16 %v5172
        %v5462 = vunpack.c.l.b16 %v5173
        %v5463 = vunpack.c.l.b16 %v5174
        %v5464 = vunpack.c.l.b16 %v5175
        %v5465 = vunpack.c.l.b16 %v5176
        %v5466 = vunpack.c.l.b16 %v5177
        %v5467 = vunpack.c.l.b16 %v5178
        %v5468 = vunpack.c.l.b16 %v5179
        %v5469 = vunpack.c.l.b16 %v5180
        %v5470 = vunpack.c.l.b16 %v5181
        %v5471 = vunpack.c.l.b16 %v5182
        %v5472 = vunpack.c.l.b16 %v5183
        %v5473 = vunpack.c.l.b16 %v5184
        %v5474 = vunpack.c.l.b16 %v5185
        %v5475 = vunpack.c.l.b16 %v5186
        %v5476 = vunpack.c.l.b16 %v5187
        %v5477 = vunpack.c.l.b16 %v5188
        %v5478 = vunpack.c.l.b16 %v5189
        %v5479 = vunpack.c.l.b16 %v5190
        %v5480 = vunpack.c.l.b16 %v5191
        %v5481 = vunpack.c.l.b16 %v5192
        %v5482 = vunpack.c.l.b16 %v5193
        %v5483 = vunpack.c.l.b16 %v5194
        %v5484 = vunpack.c.l.b16 %v5195
        %v5485 = vunpack.c.l.b16 %v5196
        %v5486 = vunpack.c.l.b16 %v5197
        %v5487 = vunpack.c.l.b16 %v5198
        %v5488 = vunpack.c.l.b16 %v5199
        %v5489 = vunpack.c.l.b16 %v5200
        %v5490 = vunpack.c.l.b16 %v5201
        %v5491 = vunpack.c.l.b16 %v5202
        %v5492 = vunpack.c.l.b16 %v5203
        %v5493 = vunpack.c.l.b16 %v5204
        %v5494 = vunpack.c.l.b16 %v5205
        %v5495 = vunpack.c.l.b16 %v5206
        %v5496 = vunpack.c.l.b16 %v5207
        %v5497 = vunpack.c.l.b16 %v5208
        %v5498 = vunpack.c.l.b16 %v5209
        %v5499 = vunpack.c.l.b16 %v5210
        %v5500 = vunpack.c.l.b16 %v5211
        %v5501 = vunpack.c.l.b16 %v5212
        %v5502 = vunpack.c.l.b16 %v5213
        %v5503 = vunpack.c.l.b16 %v5214
        %v5504 = vunpack.c.l.b16 %v5215
        %v5505 = vunpack.c.l.b16 %v5216
        %v5506 = vunpack.c.l.b16 %v5217
        %v5507 = vunpack.c.l.b16 %v5218
        %v5508 = vunpack.c.l.b16 %v5219
        %v5509 = vunpack.c.l.b16 %v5220
        %v5510 = vunpack.c.l.b16 %v5221
        %v5511 = vunpack.c.l.b16 %v5222
        %v5512 = vunpack.c.l.b16 %v5223
        %v5513 = vunpack.c.l.b16 %v5224
        %v5514 = vunpack.c.l.b16 %v5225
        %v5515 = vunpack.c.l.b16 %v5226
        %v5516 = vunpack.c.l.b16 %v5227
        %v5517 = vunpack.c.l.b16 %v5228
        %v5518 = vunpack.c.l.b16 %v5229
        %v5519 = vunpack.c.l.b16 %v5230
        %v5520 = vunpack.c.l.b16 %v5231
        %v5521 = vunpack.c.l.b16 %v5232
        %v5522 = vunpack.c.l.b16 %v5233
        %v5523 = vunpack.c.l.b16 %v5234
        %v5524 = vunpack.c.l.b16 %v5235
        %v5525 = vunpack.c.l.b16 %v5236
        %v5526 = vunpack.c.l.b16 %v5237
        %v5527 = vunpack.c.l.b16 %v5238
        %v5528 = vunpack.c.l.b16 %v5239
        %v5529 = vunpack.c.l.b16 %v5240
        %v5530 = vunpack.c.l.b16 %v5241
        %v5531 = vunpack.c.l.b16 %v5242
        %v5532 = vunpack.c.l.b16 %v5243
        %v5533 = vunpack.c.l.b16 %v5244
        %v5534 = vunpack.c.l.b16 %v5245
        %v5535 = vunpack.c.l.b16 %v5246
        %v5536 = vunpack.c.l.b16 %v5247
        %v5537 = vunpack.c.l.b16 %v5248
        %v5538 = vunpack.c.l.b16 %v5249
        %v5539 = vunpack.c.l.b16 %v5250
        %v5540 = vunpack.c.l.b16 %v5251
        %v5541 = vunpack.c.l.b16 %v5252
        %v5542 = vunpack.c.l.b16 %v5253
        %v5543 = vunpack.c.l.b16 %v5254
        %v5544 = vunpack.c.l.b16 %v5255
        %v5545 = vunpack.c.l.b16 %v5256
        %v5546 = vunpack.c.l.b16 %v5257
        %v5547 = vunpack.c.l.b16 %v5258
        %v5548 = vunpack.c.l.b16 %v5259
        %v5549 = vunpack.c.l.b16 %v5260
        %v5550 = vunpack.c.l.b16 %v5261
        %v5551 = vunpack.c.l.b16 %v5262
        %v5552 = vunpack.c.l.b16 %v5263
        %v5553 = vunpack.c.l.b16 %v5264
        %v5554 = vunpack.c.l.b16 %v5265
        %v5555 = vunpack.c.l.b16 %v5266
        %v5556 = vunpack.c.l.b16 %v5267
        %v5557 = vunpack.c.l.b16 %v5268
        %v5558 = vunpack.c.l.b16 %v5269
        %v5559 = vunpack.c.l.b16 %v5270
        %v5560 = vunpack.c.l.b16 %v5271
        %v5561 = vunpack.c.l.b16 %v5272
        %v5562 = vunpack.c.l.b16 %v5273
        %v5563 = vunpack.c.l.b16 %v5274
        %v5564 = vunpack.c.l.b16 %v5275
        %v5565 = vunpack.c.l.b16 %v5276
        %v5566 = vunpack.c.l.b16 %v5277
        %v5567 = vunpack.c.l.b16 %v5278
        %v5568 = vunpack.c.l.b16 %v5279
        %v5569 = vunpack.c.l.b16 %v5280
        %v5570 = vunpack.c.l.b16 %v5281
        %v5571 = vunpack.c.l.b16 %v5282
        %v5572 = vunpack.c.l.b16 %v5283
        %v5573 = vunpack.c.l.b16 %v5284
        %v5574 = vunpack.c.l.b16 %v5285
        %v5575 = vunpack.c.l.b16 %v5286
        %v5576 = vunpack.c.l.b16 %v5287
        %v5577 = vunpack.c.l.b16 %v5288
        %v5578 = vunpack.c.l.b16 %v5289
        %v5579 = vunpack.c.l.b16 %v5290
        %v5580 = vunpack.c.l.b16 %v5291
        %v5581 = vunpack.c.l.b16 %v5292
        %v5582 = vunpack.c.l.b16 %v5293
        %v5583 = vunpack.c.l.b16 %v5294
        %v5584 = vunpack.c.l.b16 %v5295
        %v5585 = vunpack.c.l.b16 %v5296
        %v5586 = vunpack.c.l.b16 %v5297
        %v5587 = vunpack.c.l.b16 %v5298
        %v5588 = vunpack.c.l.b16 %v5299
        %v5589 = vunpack.c.l.b16 %v5300
        %v5590 = vunpack.c.l.b16 %v5301
        %v5591 = vunpack.c.l.b16 %v5302
        %v5592 = vunpack.c.l.b16 %v5303
        %v5593 = vunpack.c.l.b16 %v5304
        %v5594 = vunpack.c.l.b16 %v5305
        %v5595 = vunpack.c.l.b16 %v5306
        %v5596 = vunpack.c.l.b16 %v5307
        %v5597 = vunpack.c.l.b16 %v5308
        %v5598 = vunpack.c.l.b16 %v5309
        %v5599 = vpack.c.b16 %v5456, %v5455
        %v5600 = vpack.c.b16 %v5458, %v5457
        %v5601 = vpack.c.b16 %v5460, %v5459
        %v5602 = vpack.c.b16 %v5462, %v5461
        %v5603 = vpack.c.b16 %v5464, %v5463
        %v5604 = vpack.c.b16 %v5466, %v5465
        %v5605 = vpack.c.b16 %v5468, %v5467
        %v5606 = vpack.c.b16 %v5470, %v5469
        %v5607 = vpack.c.b16 %v5472, %v5471
        %v5608 = vpack.c.b16 %v5474, %v5473
        %v5609 = vpack.c.b16 %v5476, %v5475
        %v5610 = vpack.c.b16 %v5478, %v5477
        %v5611 = vpack.c.b16 %v5480, %v5479
        %v5612 = vpack.c.b16 %v5482, %v5481
        %v5613 = vpack.c.b16 %v5484, %v5483
        %v5614 = vpack.c.b16 %v5486, %v5485
        %v5615 = vpack.c.b16 %v5488, %v5487
        %v5616 = vpack.c.b16 %v5490, %v5489
        %v5617 = vpack.c.b16 %v5492, %v5491
        %v5618 = vpack.c.b16 %v5494, %v5493
        %v5619 = vpack.c.b16 %v5496, %v5495
        %v5620 = vpack.c.b16 %v5498, %v5497
        %v5621 = vpack.c.b16 %v5500, %v5499
        %v5622 = vpack.c.b16 %v5502, %v5501
        %v5623 = vpack.c.b16 %v5504, %v5503
        %v5624 = vpack.c.b16 %v5506, %v5505
        %v5625 = vpack.c.b16 %v5508, %v5507
        %v5626 = vpack.c.b16 %v5510, %v5509
        %v5627 = vpack.c.b16 %v5512, %v5511
        %v5628 = vpack.c.b16 %v5514, %v5513
        %v5629 = vpack.c.b16 %v5516, %v5515
        %v5630 = vpack.c.b16 %v5518, %v5517
        %v5631 = vpack.c.b16 %v5520, %v5519
        %v5632 = vpack.c.b16 %v5522, %v5521
        %v5633 = vpack.c.b16 %v5524, %v5523
        %v5634 = vpack.c.b16 %v5526, %v5525
        %v5635 = vpack.c.b16 %v5528, %v5527
        %v5636 = vpack.c.b16 %v5530, %v5529
        %v5637 = vpack.c.b16 %v5532, %v5531
        %v5638 = vpack.c.b16 %v5534, %v5533
        %v5639 = vpack.c.b16 %v5536, %v5535
        %v5640 = vpack.c.b16 %v5538, %v5537
        %v5641 = vpack.c.b16 %v5540, %v5539
        %v5642 = vpack.c.b16 %v5542, %v5541
        %v5643 = vpack.c.b16 %v5544, %v5543
        %v5644 = vpack.c.b16 %v5546, %v5545
        %v5645 = vpack.c.b16 %v5548, %v5547
        %v5646 = vpack.c.b16 %v5550, %v5549
        %v5647 = vpack.c.b16 %v5552, %v5551
        %v5648 = vpack.c.b16 %v5554, %v5553
        %v5649 = vpack.c.b16 %v5556, %v5555
        %v5650 = vpack.c.b16 %v5558, %v5557
        %v5651 = vpack.c.b16 %v5560, %v5559
        %v5652 = vpack.c.b16 %v5562, %v5561
        %v5653 = vpack.c.b16 %v5564, %v5563
        %v5654 = vpack.c.b16 %v5566, %v5565
        %v5655 = vpack.c.b16 %v5568, %v5567
        %v5656 = vpack.c.b16 %v5570, %v5569
        %v5657 = vpack.c.b16 %v5572, %v5571
        %v5658 = vpack.c.b16 %v5574, %v5573
        %v5659 = vpack.c.b16 %v5576, %v5575
        %v5660 = vpack.c.b16 %v5578, %v5577
        %v5661 = vpack.c.b16 %v5580, %v5579
        %v5662 = vpack.c.b16 %v5582, %v5581
        %v5663 = vpack.c.b16 %v5584, %v5583
        %v5664 = vpack.c.b16 %v5586, %v5585
        %v5665 = vpack.c.b16 %v5588, %v5587
        %v5666 = vpack.c.b16 %v5590, %v5589
        %v5667 = vpack.c.b16 %v5592, %v5591
        %v5668 = vpack.c.b16 %v5594, %v5593
        %v5669 = vpack.c.b16 %v5596, %v5595
        %v5670 = vpack.c.b16 %v5598, %v5597
        %5743 = vmatpush.bf16.msra.mxu0 %v5606
        %5744 = vmatpush.bf16.msra.mxu0 %v5605
        %5745 = vmatpush.bf16.msra.mxu0 %v5604
        %5746 = vmatpush.bf16.msra.mxu0 %v5603
        %5747 = vmatpush.bf16.msra.mxu0 %v5602
        %5748 = vmatpush.bf16.msra.mxu0 %v5601
        %5749 = vmatpush.bf16.msra.mxu0 %v5600
        %5750 = vmatpush.bf16.msra.mxu0 %v5599
        %5751 = vmatmul.bf16.gmra.mxu0 %v5157
        %v5752 = vpop.f32.mrf.mxu0
        %v5753 = vadd.f32 %v5310, %v5752
        %v5754 = vpop.f32.mrf.mxu0
        %5755 = vdwg.mxu0
        %5756 = vmatpush.bf16.msra.mxu0 %v5614
        %5757 = vmatpush.bf16.msra.mxu0 %v5613
        %5758 = vmatpush.bf16.msra.mxu0 %v5612
        %5759 = vmatpush.bf16.msra.mxu0 %v5611
        %5760 = vmatpush.bf16.msra.mxu0 %v5610
        %5761 = vmatpush.bf16.msra.mxu0 %v5609
        %5762 = vmatpush.bf16.msra.mxu0 %v5608
        %5763 = vmatpush.bf16.msra.mxu0 %v5607
        %5764 = vmatmul.bf16.gmra.mxu0 %v5158
        %v5765 = vpop.f32.mrf.mxu0
        %v5766 = vadd.f32 %v5753, %v5765
        %v5767 = vpop.f32.mrf.mxu0
        %5768 = vdwg.mxu0
        %5769 = vmatpush.bf16.msra.mxu0 %v5622
        %5770 = vmatpush.bf16.msra.mxu0 %v5621
        %5771 = vmatpush.bf16.msra.mxu0 %v5620
        %5772 = vmatpush.bf16.msra.mxu0 %v5619
        %5773 = vmatpush.bf16.msra.mxu0 %v5618
        %5774 = vmatpush.bf16.msra.mxu0 %v5617
        %5775 = vmatpush.bf16.msra.mxu0 %v5616
        %5776 = vmatpush.bf16.msra.mxu0 %v5615
        %5777 = vmatmul.bf16.gmra.mxu0 %v5159
        %v5778 = vpop.f32.mrf.mxu0
        %v5779 = vadd.f32 %v5766, %v5778
        %v5780 = vpop.f32.mrf.mxu0
        %5781 = vdwg.mxu0
        %5782 = vmatpush.bf16.msra.mxu0 %v5630
        %5783 = vmatpush.bf16.msra.mxu0 %v5629
        %5784 = vmatpush.bf16.msra.mxu0 %v5628
        %5785 = vmatpush.bf16.msra.mxu0 %v5627
        %5786 = vmatpush.bf16.msra.mxu0 %v5626
        %5787 = vmatpush.bf16.msra.mxu0 %v5625
        %5788 = vmatpush.bf16.msra.mxu0 %v5624
        %5789 = vmatpush.bf16.msra.mxu0 %v5623
        %5790 = vmatmul.bf16.gmra.mxu0 %v5160
        %v5791 = vpop.f32.mrf.mxu0
        %v5792 = vadd.f32 %v5779, %v5791
        %v5793 = vpop.f32.mrf.mxu0
        %5794 = vdwg.mxu0
        %5795 = vmatpush.bf16.msra.mxu0 %v5638
        %5796 = vmatpush.bf16.msra.mxu0 %v5637
        %5797 = vmatpush.bf16.msra.mxu0 %v5636
        %5798 = vmatpush.bf16.msra.mxu0 %v5635
        %5799 = vmatpush.bf16.msra.mxu0 %v5634
        %5800 = vmatpush.bf16.msra.mxu0 %v5633
        %5801 = vmatpush.bf16.msra.mxu0 %v5632
        %5802 = vmatpush.bf16.msra.mxu0 %v5631
        %5803 = vmatmul.bf16.gmra.mxu0 %v5161
        %v5804 = vpop.f32.mrf.mxu0
        %v5805 = vadd.f32 %v5792, %v5804
        %v5806 = vpop.f32.mrf.mxu0
        %5807 = vdwg.mxu0
        %5808 = vmatpush.bf16.msra.mxu0 %v5646
        %5809 = vmatpush.bf16.msra.mxu0 %v5645
        %5810 = vmatpush.bf16.msra.mxu0 %v5644
        %5811 = vmatpush.bf16.msra.mxu0 %v5643
        %5812 = vmatpush.bf16.msra.mxu0 %v5642
        %5813 = vmatpush.bf16.msra.mxu0 %v5641
        %5814 = vmatpush.bf16.msra.mxu0 %v5640
        %5815 = vmatpush.bf16.msra.mxu0 %v5639
        %5816 = vmatmul.bf16.gmra.mxu0 %v5162
        %v5817 = vpop.f32.mrf.mxu0
        %v5818 = vadd.f32 %v5805, %v5817
        %v5819 = vpop.f32.mrf.mxu0
        %5820 = vdwg.mxu0
        %5821 = vmatpush.bf16.msra.mxu0 %v5654
        %5822 = vmatpush.bf16.msra.mxu0 %v5653
        %5823 = vmatpush.bf16.msra.mxu0 %v5652
        %5824 = vmatpush.bf16.msra.mxu0 %v5651
        %5825 = vmatpush.bf16.msra.mxu0 %v5650
        %5826 = vmatpush.bf16.msra.mxu0 %v5649
        %5827 = vmatpush.bf16.msra.mxu0 %v5648
        %5828 = vmatpush.bf16.msra.mxu0 %v5647
        %5829 = vmatmul.bf16.gmra.mxu0 %v5163
        %v5830 = vpop.f32.mrf.mxu0
        %v5831 = vadd.f32 %v5818, %v5830
        %v5832 = vpop.f32.mrf.mxu0
        %5833 = vdwg.mxu0
        %5834 = vmatpush.bf16.msra.mxu0 %v5662
        %5835 = vmatpush.bf16.msra.mxu0 %v5661
        %5836 = vmatpush.bf16.msra.mxu0 %v5660
        %5837 = vmatpush.bf16.msra.mxu0 %v5659
        %5838 = vmatpush.bf16.msra.mxu0 %v5658
        %5839 = vmatpush.bf16.msra.mxu0 %v5657
        %5840 = vmatpush.bf16.msra.mxu0 %v5656
        %5841 = vmatpush.bf16.msra.mxu0 %v5655
        %5842 = vmatmul.bf16.gmra.mxu0 %v5164
        %v5843 = vpop.f32.mrf.mxu0
        %v5844 = vadd.f32 %v5831, %v5843
        %v5845 = vpop.f32.mrf.mxu0
        %5846 = vdwg.mxu0
        %5847 = vmatpush.bf16.msra.mxu0 %v5670
        %5848 = vmatpush.bf16.msra.mxu0 %v5669
        %5849 = vmatpush.bf16.msra.mxu0 %v5668
        %5850 = vmatpush.bf16.msra.mxu0 %v5667
        %5851 = vmatpush.bf16.msra.mxu0 %v5666
        %5852 = vmatpush.bf16.msra.mxu0 %v5665
        %5853 = vmatpush.bf16.msra.mxu0 %v5664
        %5854 = vmatpush.bf16.msra.mxu0 %v5663
        %5855 = vmatmul.bf16.gmra.mxu0 %v5165
        %v5856 = vpop.f32.mrf.mxu0
        %v5857 = vadd.f32 %v5844, %v5856
        %v5858 = vpop.f32.mrf.mxu0
        %5859 = vdwg.mxu0
        %v5860 = vmax.f32 %v5857, 0.0
        %v5861 = vpack.c.bf16 %v5860, %v5860
        %v5862 = vld [vmem:[%s11] sm:$0xf]
        %v5863 = vld [vmem:[%s11 + $0x4] sm:$0xf]
        %v5864 = vld [vmem:[%s11 + $0x8] sm:$0xf]
        %v5865 = vld [vmem:[%s11 + $0xc] sm:$0xf]
        %v5866 = vld [vmem:[%s11 + $0x10] sm:$0xf]
        %v5867 = vld [vmem:[%s11 + $0x14] sm:$0xf]
        %v5868 = vld [vmem:[%s11 + $0x18] sm:$0xf]
        %v5869 = vld [vmem:[%s11 + $0x1c] sm:$0xf]
        %v5870 = vld [vmem:[%s12] sm:$0x1]
        %v5879 = vunpack.c.l.b16 %v5862
        %v5880 = vunpack.c.l.b16 %v5863
        %v5881 = vunpack.c.l.b16 %v5864
        %v5882 = vunpack.c.l.b16 %v5865
        %v5883 = vunpack.c.l.b16 %v5866
        %v5884 = vunpack.c.l.b16 %v5867
        %v5885 = vunpack.c.l.b16 %v5868
        %v5886 = vunpack.c.l.b16 %v5869
        %v5887 = vpack.c.b16 %v5880, %v5879
        %v5888 = vpack.c.b16 %v5882, %v5881
        %v5889 = vpack.c.b16 %v5884, %v5883
        %v5890 = vpack.c.b16 %v5886, %v5885
        %vm5895 = vcmask 523264
        %v5897 = vsel %vm5895, %v5861, 0
        %5899 = vmatpush.bf16.msra.mxu0 0
        %5900 = vmatpush.bf16.msra.mxu0 0
        %5901 = vmatpush.bf16.msra.mxu0 0
        %5902 = vmatpush.bf16.msra.mxu0 0
        %5903 = vmatpush.bf16.msra.mxu0 %v5890
        %5904 = vmatpush.bf16.msra.mxu0 %v5889
        %5905 = vmatpush.bf16.msra.mxu0 %v5888
        %5906 = vmatpush.bf16.msra.mxu0 %v5887
        %5907 = vmatmul.bf16.gmra.mxu0 %v5897
        %v5908 = vpop.f32.mrf.mxu0
        %v5909 = vadd.f32 %v5870, %v5908
        %v5910 = vpop.f32.mrf.mxu0
        %5911 = vdwg.mxu0
        %vm5912 = vcmask 73728
        %v5913 = vsel %vm5912, %v5909, -inf
        %5914 = vmax.xlane.f32.xlu0 %v5913
        %v5915 = vpop.xlane.xlu0 %5914
        %v5916 = vsub.f32 %v5909, %v5915
        %v5917 = vmul.f32 %v5916, 1.442695
        %v5918 = vpow.pop %v5917
        %v5919 = vsel %vm5912, %v5918, 0.0
        %5920 = vadd.xlane.f32.xlu0 %v5919
        %v5921 = vpop.xlane.xlu0 %5920
        %v5922 = vlog2.pop %v5921
        %v5923 = vmul.f32 %v5922, 0.6931472
        %v5924 = vsub.f32 %v5916, %v5923
        %5925 = vst.msk [vmem:[%s430] sm:$0x1] %vm5912, %v5924
        %s5926 = sand.u32 %s313, 1
        %s5927 = scalar_lea.sflag [#allocation6], %s5926
        %s5928 = sand.u32 %s313, 1
        %s5929 = scalar_lea.vmem [#allocation5], %s5928
        // Predicated region
        $region73: #{quanv_nn_forward.1} parent=71 // pred_check
          %p5930 = pneg %p323
        $region74: #{quanv_nn_forward.1} parent=71 // pred_check_branch
          %5932 = sbr.rel (%p5930) target = $region76
        $region75: #{quanv_nn_forward.1} parent=71 // pred_region
          %5934 = vsyncadd %s5927, 0
          %s5935 = scalar_lea.hbm %s13, %s27
          %s5937 = sshll.u32 %s5929, 4
          %s5938 = int_to_ptr.vmem [resolvable:$true] %s5937
          %s5939 = sshll.u32 %s5935, 4
          %s5940 = int_to_ptr.hbm [resolvable:$true] %s5939
          %5942 = dma.vmem_to_hbm [thread:$0]  %s5938, 16, %s5940, %s5927
        $region76: #{quanv_nn_forward.1} parent=71 // pred_fallthru
          _
      $region72: #{quanv_nn_forward.1} parent=5 // pred_fallthru
        _
      %p5943 = scmp.le.s32.totalorder 2, %s22
      // Predicated region
      $region77: #{quanv_nn_forward.1} parent=5 // pred_check
        %p5944 = pneg %p5943
      $region78: #{quanv_nn_forward.1} parent=5 // pred_check_branch
        %5946 = sbr.rel (%p5944) target = $region80
      $region79: #{quanv_nn_forward.1} parent=5 // pred_region
        %s5947 = ssub.s32 %s22, 2
        // Predicated region
        $region81: #{quanv_nn_forward.1} parent=79 // pred_check
          %p5948 = pneg %p329
        $region82: #{quanv_nn_forward.1} parent=79 // pred_check_branch
          %5950 = sbr.rel (%p5948) target = $region84
        $region83: #{quanv_nn_forward.1} parent=79 // pred_region
          %s5951 = sand.u32 %s314, 1
          %s5952 = scalar_lea.sflag [#allocation6], %s5951
          %s5953 = sand.u32 %s314, 1
          %s5954 = scalar_lea.vmem [#allocation5], %s5953
          %5956 = dma.done %s5952, 16
        $region84: #{quanv_nn_forward.1} parent=79 // pred_fallthru
          _
      $region80: #{quanv_nn_forward.1} parent=5 // pred_fallthru
        _
    $region6: #{quanv_nn_forward.1} parent=1 // loop_footer
      %s26 = sadd.s32 1, %s22
    $region7: #{quanv_nn_forward.1} parent=1 // loop_footer_branch
      %21 = sbr.rel target = $region3
    $region8: #{quanv_nn_forward.1} parent=1 // loop_exit
      _
    %5957 = vsyncpa [#allocation6], 1
    %s5958 = scalar_lea.sflag [#allocation6], 1
    %5959 = vsyncpa %s5958, 1

</llo_original>
